<compile_context>
chip_gen: v5e
topology: v5e:2x2
jax: 0.10.0
libtpu: 0.0.40
codegen_flags: <defaults>
</compile_context>

<pallas_src>
import functools

import jax
import jax.numpy as jnp
from jax.experimental import pallas as pl
from jax.experimental.pallas import tpu as pltpu

EPS_BN = 1e-5
EPS_LOG = 1e-8

# Explicit scoped-VMEM budget (safe on v5e/v6e/v7x; tiles below stay well under it).
VMEM_LIMIT_BYTES = 32 * 1024 * 1024

# approx=True moves the reciprocals onto the EUP slot (essentially free next to
# the VPU work).  Kept exact here so the f32 parity check vs the pure-JAX
# reference stays tight; flip for maximum throughput.
APPROX_RECIPROCAL = False


# ----------------------------- Pallas kernels ------------------------------ #

def _conv3x3_kernel(xg_ref, w_ref, scale_ref, shift_ref, o_ref, stats_ref,
                    *, apply_input_act):
    """3x3 SAME conv over one row-group block + BatchNorm partial statistics.

    xg_ref    : (1, TH+2, W+2, C)  input row-group with 1-row / 1-col halo
    w_ref     : (3, 3, C, C)       HWIO weights
    scale_ref : (1, C)             folded BN scale of the *previous* layer
    shift_ref : (1, C)             folded BN shift of the *previous* layer
                                   (both only used when apply_input_act=True)
    o_ref     : (1, TH, W, C)      raw conv output (pre-BN)
    stats_ref : (1, 2, C)          per-block [sum, sum-of-squares] over rows
    """
    th = o_ref.shape[1]
    w_out = o_ref.shape[2]
    c = o_ref.shape[3]

    a = xg_ref[0]  # (TH+2, W+2, C)
    if apply_input_act:
        # Fused "pass 2" of the previous BatchNorm: normalize + affine + ReLU.
        a = jnp.maximum(a * scale_ref[...] + shift_ref[...], 0.0)
        # Halo positions that correspond to SAME zero-padding must be exact
        # zeros *after* the activation -> mask them explicitly.
        g = pl.program_id(1)
        last_g = pl.num_programs(1) - 1
        row = jax.lax.broadcasted_iota(jnp.int32, a.shape, 0)
        col = jax.lax.broadcasted_iota(jnp.int32, a.shape, 1)
        halo = ((col == 0) | (col == w_out + 1)
                | ((g == 0) & (row == 0))
                | ((g == last_g) & (row == th + 1)))
        a = jnp.where(halo, 0.0, a)

    # 3x3 conv as a sum of 9 shifted matmuls (no HBM im2col).
    acc = jnp.zeros((th * w_out, c), jnp.float32)
    for kh in range(3):
        for kw in range(3):
            patch = a[kh:kh + th, kw:kw + w_out, :].reshape(th * w_out, c)
            acc = acc + jnp.dot(patch, w_ref[kh, kw],
                                preferred_element_type=jnp.float32)

    o_ref[0] = acc.reshape(th, w_out, c)
    # Partial per-channel statistics for the two-pass BatchNorm.
    s1 = jnp.sum(acc, axis=0, keepdims=True)         # (1, C)
    s2 = jnp.sum(acc * acc, axis=0, keepdims=True)   # (1, C)
    stats_ref[0] = jnp.concatenate([s1, s2], axis=0)  # (2, C)


def _attn_fusion_kernel(x_ref, h2_ref, scale2_ref, shift2_ref,
                        wqkv_ref, bqkv_ref, wf_ref, bf_ref, o_ref):
    """Self-attention (fused QKV) + BN2-apply + entropy fusion + final 1x1 conv."""
    c = x_ref.shape[-1]
    x = x_ref[...]                                                # (TM, C)

    # High-frequency branch: fused BN2 normalize/affine + ReLU of raw conv2 out.
    high = jnp.maximum(h2_ref[...] * scale2_ref[...] + shift2_ref[...], 0.0)

    # Low-frequency branch: Q/K/V 1x1 convs as one (C, 3C) matmul.
    qkv = jnp.dot(x, wqkv_ref[...],
                  preferred_element_type=jnp.float32) + bqkv_ref[...]
    q = qkv[:, 0 * c:1 * c]
    k = qkv[:, 1 * c:2 * c]
    v = qkv[:, 2 * c:3 * c]
    attn = q * k
    attn = attn - jnp.max(attn, axis=-1, keepdims=True)
    e = jnp.exp(attn)
    attn = e * pl.reciprocal(jnp.sum(e, axis=-1, keepdims=True),
                             approx=APPROX_RECIPROCAL)
    low = v * attn + x

    # Entropy-based fusion.
    nh = jax.nn.sigmoid(high)
    nl = jax.nn.sigmoid(low)
    ent_h = -jnp.sum(nh * jnp.log(nh + EPS_LOG), axis=-1, keepdims=True)
    ent_l = -jnp.sum(nl * jnp.log(nl + EPS_LOG), axis=-1, keepdims=True)
    w_h = 1.0 - ent_h
    w_l = 1.0 - ent_l
    inv_total = pl.reciprocal(w_h + w_l + EPS_LOG, approx=APPROX_RECIPROCAL)
    fused = (w_h * inv_total) * high + (w_l * inv_total) * low + high + low

    # Final 1x1 conv (C -> Cout).
    o_ref[...] = jnp.dot(fused, wf_ref[...],
                         preferred_element_type=jnp.float32) + bf_ref[...]


# ----------------------------- pallas_call glue ----------------------------- #

def _pick_tile(n, target, multiple=1):
    """Largest divisor of n that is <= target and a multiple of `multiple`."""
    best = None
    for d in range(1, min(n, target) + 1):
        if n % d == 0 and d % multiple == 0:
            best = d
    return best if best is not None else n


def _row_groups(x_nhwc, th):
    """(N, H, W, C) -> (N*G, TH+2, W+2, C): zero-padded halo row-groups."""
    n, h, w, c = x_nhwc.shape
    g = h // th
    xp = jnp.pad(x_nhwc, ((0, 0), (1, 1), (1, 1), (0, 0)))
    groups = [xp[:, i * th:i * th + th + 2, :, :] for i in range(g)]
    return jnp.stack(groups, axis=1).reshape(n * g, th + 2, w + 2, c)


def _conv3x3(xg, w_hwio, in_scale, in_shift, th, groups, *, apply_input_act):
    ng, thp2, wp2, c = xg.shape
    n_img = ng // groups
    w_out = wp2 - 2
    kernel = functools.partial(_conv3x3_kernel, apply_input_act=apply_input_act)
    return pl.pallas_call(
        kernel,
        grid=(n_img, groups),
        in_specs=[
            pl.BlockSpec((1, thp2, wp2, c), lambda n, g: (n * groups + g, 0, 0, 0)),
            pl.BlockSpec((3, 3, c, c), lambda n, g: (0, 0, 0, 0)),
            pl.BlockSpec((1, c), lambda n, g: (0, 0)),
            pl.BlockSpec((1, c), lambda n, g: (0, 0)),
        ],
        out_specs=[
            pl.BlockSpec((1, th, w_out, c), lambda n, g: (n * groups + g, 0, 0, 0)),
            pl.BlockSpec((1, 2, c), lambda n, g: (n * groups + g, 0, 0)),
        ],
        out_shape=(
            jax.ShapeDtypeStruct((ng, th, w_out, c), jnp.float32),
            jax.ShapeDtypeStruct((ng, 2, c), jnp.float32),
        ),
        compiler_params=pltpu.CompilerParams(
            dimension_semantics=("parallel", "parallel"),
            vmem_limit_bytes=VMEM_LIMIT_BYTES),
    )(xg, w_hwio, in_scale, in_shift)


def _bn_fold(stats, gamma, beta, m):
    """Fold training-mode BatchNorm into per-channel scale/shift ((1, C) math)."""
    totals = jnp.sum(stats, axis=0)                      # (2, C)
    mean = totals[0] / m
    var = jnp.maximum(totals[1] / m - mean * mean, 0.0)  # biased variance
    scale = gamma * jax.lax.rsqrt(var + EPS_BN)          # (1, C)
    shift = beta - mean * scale                          # (1, C)
    return scale, shift


def _attn_fusion(x_flat, h2_flat, scale2, shift2, wqkv, bqkv, wf, bf, m_tile):
    m, c = x_flat.shape
    cout = wf.shape[1]
    tm = _pick_tile(m, m_tile, multiple=8)
    return pl.pallas_call(
        _attn_fusion_kernel,
        grid=(m // tm,),
        in_specs=[
            pl.BlockSpec((tm, c), lambda i: (i, 0)),
            pl.BlockSpec((tm, c), lambda i: (i, 0)),
            pl.BlockSpec((1, c), lambda i: (0, 0)),
            pl.BlockSpec((1, c), lambda i: (0, 0)),
            pl.BlockSpec((c, 3 * c), lambda i: (0, 0)),
            pl.BlockSpec((1, 3 * c), lambda i: (0, 0)),
            pl.BlockSpec((c, cout), lambda i: (0, 0)),
            pl.BlockSpec((1, cout), lambda i: (0, 0)),
        ],
        out_specs=pl.BlockSpec((tm, cout), lambda i: (i, 0)),
        out_shape=jax.ShapeDtypeStruct((m, cout), jnp.float32),
        compiler_params=pltpu.CompilerParams(
            dimension_semantics=("parallel",),
            vmem_limit_bytes=VMEM_LIMIT_BYTES),
    )(x_flat, h2_flat, scale2, shift2, wqkv, bqkv, wf, bf)


# ------------------------------ forward pass -------------------------------- #

def coronary_identification_forward(x_nchw, params, *, row_tile=8, m_tile=128):
    n, c, h, w = x_nchw.shape
    m = n * h * w
    # NCHW -> NHWC (channels on the lane dim).  Could be avoided entirely if the
    # caller provides NHWC; kept here for PyTorch I/O parity.
    x_nhwc = jnp.transpose(x_nchw, (0, 2, 3, 1)).astype(jnp.float32)

    th = _pick_tile(h, row_tile)
    groups = h // th

    ones = jnp.ones((1, c), jnp.float32)
    zeros = jnp.zeros((1, c), jnp.float32)

    # --- high-frequency path: DoubleConv with two-pass BatchNorm -------------
    # conv1 (raw; bias dropped -- exactly cancelled by the BN mean subtraction)
    xg = _row_groups(x_nhwc, th)
    h1_raw, stats1 = _conv3x3(xg, params["w1"], ones, zeros, th, groups,
                              apply_input_act=False)
    scale1, shift1 = _bn_fold(stats1, params["g1"], params["beta1"], m)

    # conv2: BN1 normalize + affine + ReLU is fused into the conv2 kernel.
    hg = _row_groups(h1_raw.reshape(n, h, w, c), th)
    h2_raw, stats2 = _conv3x3(hg, params["w2"], scale1, shift1, th, groups,
                              apply_input_act=True)
    scale2, shift2 = _bn_fold(stats2, params["g2"], params["beta2"], m)

    # --- low-frequency path + entropy fusion + final 1x1 conv: one kernel ----
    wqkv = jnp.concatenate([params["wq"], params["wk"], params["wv"]], axis=1)
    bqkv = jnp.concatenate([params["bq"], params["bk"], params["bv"]], axis=1)
    out = _attn_fusion(x_nhwc.reshape(m, c), h2_raw.reshape(m, c),
                       scale2, shift2, wqkv, bqkv,
                       params["wf"], params["bf"], m_tile)

    cout = params["wf"].shape[1]
    return jnp.transpose(out.reshape(n, h, w, cout), (0, 3, 1, 2))  # NCHW


def reference_forward(x_nchw, params):
    """Pure-JAX reference with identical semantics (validates the kernels)."""
    x = jnp.transpose(x_nchw, (0, 2, 3, 1)).astype(jnp.float32)  # NHWC

    def conv3(y, w_hwio, b):
        return jax.lax.conv_general_dilated(
            y, w_hwio, window_strides=(1, 1), padding="SAME",
            dimension_numbers=("NHWC", "HWIO", "NHWC")) + b[None, None, None, :]

    def bn_relu(y, g, beta):
        mean = jnp.mean(y, axis=(0, 1, 2), keepdims=True)
        var = jnp.mean((y - mean) ** 2, axis=(0, 1, 2), keepdims=True)
        y = (y - mean) * jax.lax.rsqrt(var + EPS_BN) * g[None, None, None, :] \
            + beta[None, None, None, :]
        return jnp.maximum(y, 0.0)

    h = bn_relu(conv3(x, params["w1"], params["b1"][0]),
                params["g1"][0], params["beta1"][0])
    high = bn_relu(conv3(h, params["w2"], params["b2"][0]),
                   params["g2"][0], params["beta2"][0])

    q = jnp.einsum("nhwc,cd->nhwd", x, params["wq"]) + params["bq"][0]
    k = jnp.einsum("nhwc,cd->nhwd", x, params["wk"]) + params["bk"][0]
    v = jnp.einsum("nhwc,cd->nhwd", x, params["wv"]) + params["bv"][0]
    attn = jax.nn.softmax(q * k, axis=-1)
    low = v * attn + x

    nh = jax.nn.sigmoid(high)
    nl = jax.nn.sigmoid(low)
    ent_h = -jnp.sum(nh * jnp.log(nh + EPS_LOG), axis=-1, keepdims=True)
    ent_l = -jnp.sum(nl * jnp.log(nl + EPS_LOG), axis=-1, keepdims=True)
    w_h, w_l = 1.0 - ent_h, 1.0 - ent_l
    w_total = w_h + w_l
    fused = (w_h / (w_total + EPS_LOG)) * high + (w_l / (w_total + EPS_LOG)) * low \
        + high + low
    out = jnp.einsum("nhwc,cd->nhwd", fused, params["wf"]) + params["bf"][0]
    return jnp.transpose(out, (0, 3, 1, 2))


# --------------------------------- params ----------------------------------- #

def init_params(key, in_channels, out_channels):
    C, Cout = in_channels, out_channels
    ks = jax.random.split(key, 12)
    p = {
        # DoubleConv: two 3x3 convs (HWIO) with BN affine params.
        # (b1/b2 are used only by the reference: the conv bias is mathematically
        #  cancelled by the BatchNorm mean subtraction, so the kernel drops it.)
        "w1": 0.15 * jax.random.normal(ks[0], (3, 3, C, C), jnp.float32),
        "b1": 0.05 * jax.random.normal(ks[1], (1, C), jnp.float32),
        "g1": 1.0 + 0.05 * jax.random.normal(ks[2], (1, C), jnp.float32),
        "beta1": 0.05 * jax.random.normal(ks[3], (1, C), jnp.float32),
        "w2": 0.15 * jax.random.normal(ks[4], (3, 3, C, C), jnp.float32),
        "b2": 0.05 * jax.random.normal(ks[5], (1, C), jnp.float32),
        "g2": 1.0 + 0.05 * jax.random.normal(ks[6], (1, C), jnp.float32),
        "beta2": 0.05 * jax.random.normal(ks[7], (1, C), jnp.float32),
        # ConvolutionalSelfAttention: three 1x1 convs (C, C) + biases.
        "wq": 0.2 * jax.random.normal(ks[8], (C, C), jnp.float32),
        "bq": 0.05 * jax.random.normal(ks[8], (1, C), jnp.float32),
        "wk": 0.2 * jax.random.normal(ks[9], (C, C), jnp.float32),
        "bk": 0.05 * jax.random.normal(ks[9], (1, C), jnp.float32),
        "wv": 0.2 * jax.random.normal(ks[10], (C, C), jnp.float32),
        "bv": 0.05 * jax.random.normal(ks[10], (1, C), jnp.float32),
        # EntropyBasedFusion final 1x1 conv (C -> Cout).
        "wf": 0.2 * jax.random.normal(ks[11], (C, Cout), jnp.float32),
        "bf": 0.05 * jax.random.normal(ks[11], (1, Cout), jnp.float32),
    }
    return p


# ----------------------------------- main ------------------------------------ #

if __name__ == "__main__":
    key = jax.random.PRNGKey(0)
    kx, kp = jax.random.split(key)

    N, C, H, W = 2, 4, 16, 16
    Cout = 8
    x = jax.random.normal(kx, (N, C, H, W), jnp.float32)
    params = init_params(kp, C, Cout)

    fwd = jax.jit(coronary_identification_forward)
    out = jax.block_until_ready(fwd(x, params))
    assert out.shape == (N, Cout, H, W), out.shape

    ref = jax.block_until_ready(reference_forward(x, params))
    max_err = float(jnp.max(jnp.abs(out - ref)))
    # f32 tolerance: the entropy-fusion weights divide by (w_h + w_l), which can
    # amplify benign accumulation-order differences at a few pixels.
    assert jnp.allclose(out, ref, rtol=1e-2, atol=1e-2), f"max abs err = {max_err}"

    print("KERNEL_OK")
</pallas_src>

<mosaic_0001>
module attributes {stable_mosaic.version = 11 : i64} {
  func.func @_conv3x3_kernel(%arg0: i32, %arg1: i32, %arg2: memref<1x10x18x4xf32, #tpu.memory_space<vmem>>, %arg3: memref<3x3x4x4xf32, #tpu.memory_space<vmem>>, %arg4: memref<1x4xf32, #tpu.memory_space<vmem>>, %arg5: memref<1x4xf32, #tpu.memory_space<vmem>>, %arg6: memref<1x8x16x4xf32, #tpu.memory_space<vmem>>, %arg7: memref<1x2x4xf32, #tpu.memory_space<vmem>>) attributes {dimension_semantics = [#tpu.dimension_semantics<parallel>, #tpu.dimension_semantics<parallel>], iteration_bounds = array<i64: 2, 2>, scalar_prefetch = 0 : i64, scratch_operands = 0 : i64, tpu.core_type = #tpu.core_type<tc>, window_params = [{transform_indices = @transform_0, window_bounds = array<i64: 1, 10, 18, 4>}, {pipeline_mode = #tpu.pipeline_mode<synchronous>, transform_indices = @transform_1, window_bounds = array<i64: 3, 3, 4, 4>}, {pipeline_mode = #tpu.pipeline_mode<synchronous>, transform_indices = @transform_2, window_bounds = array<i64: 1, 4>}, {pipeline_mode = #tpu.pipeline_mode<synchronous>, transform_indices = @transform_3, window_bounds = array<i64: 1, 4>}, {transform_indices = @transform_4, window_bounds = array<i64: 1, 8, 16, 4>}, {transform_indices = @transform_5, window_bounds = array<i64: 1, 2, 4>}]} {
    %c0 = arith.constant 0 : index
    %c0_0 = arith.constant 0 : index
    %c0_1 = arith.constant 0 : index
    %c0_2 = arith.constant 0 : index
    %0 = vector.load %arg2[%c0, %c0_0, %c0_1, %c0_2] : memref<1x10x18x4xf32, #tpu.memory_space<vmem>>, vector<1x10x18x4xf32>
    %1 = vector.shape_cast %0 : vector<1x10x18x4xf32> to vector<10x18x4xf32>
    %cst = arith.constant 0.000000e+00 : f32
    %2 = vector.broadcast %cst : f32 to vector<128x4xf32>
    %3 = vector.extract_strided_slice %1 {offsets = [0, 0, 0], sizes = [8, 16, 4], strides = [1, 1, 1]} : vector<10x18x4xf32> to vector<8x16x4xf32>
    %4 = vector.shape_cast %3 : vector<8x16x4xf32> to vector<128x4xf32>
    %c0_3 = arith.constant 0 : index
    %c0_4 = arith.constant 0 : index
    %c0_5 = arith.constant 0 : index
    %c0_6 = arith.constant 0 : index
    %5 = vector.load %arg3[%c0_3, %c0_4, %c0_5, %c0_6] : memref<3x3x4x4xf32, #tpu.memory_space<vmem>>, vector<1x1x4x4xf32>
    %6 = vector.shape_cast %5 : vector<1x1x4x4xf32> to vector<4x4xf32>
    %cst_7 = arith.constant dense<0.000000e+00> : vector<128x4xf32>
    %7 = tpu.matmul %4, %6, %cst_7 {dimension_numbers = #tpu.dot_dimension_numbers<[1], [0], [0], [1], [0, 0, 1, 1], [], []>} : vector<128x4xf32>, vector<4x4xf32>, vector<128x4xf32> -> vector<128x4xf32>
    %8 = arith.addf %2, %7 : vector<128x4xf32>
    %9 = vector.extract_strided_slice %1 {offsets = [0, 1, 0], sizes = [8, 16, 4], strides = [1, 1, 1]} : vector<10x18x4xf32> to vector<8x16x4xf32>
    %10 = vector.shape_cast %9 : vector<8x16x4xf32> to vector<128x4xf32>
    %c0_8 = arith.constant 0 : index
    %c1 = arith.constant 1 : index
    %c0_9 = arith.constant 0 : index
    %c0_10 = arith.constant 0 : index
    %11 = vector.load %arg3[%c0_8, %c1, %c0_9, %c0_10] : memref<3x3x4x4xf32, #tpu.memory_space<vmem>>, vector<1x1x4x4xf32>
    %12 = vector.shape_cast %11 : vector<1x1x4x4xf32> to vector<4x4xf32>
    %cst_11 = arith.constant dense<0.000000e+00> : vector<128x4xf32>
    %13 = tpu.matmul %10, %12, %cst_11 {dimension_numbers = #tpu.dot_dimension_numbers<[1], [0], [0], [1], [0, 0, 1, 1], [], []>} : vector<128x4xf32>, vector<4x4xf32>, vector<128x4xf32> -> vector<128x4xf32>
    %14 = arith.addf %8, %13 : vector<128x4xf32>
    %15 = vector.extract_strided_slice %1 {offsets = [0, 2, 0], sizes = [8, 16, 4], strides = [1, 1, 1]} : vector<10x18x4xf32> to vector<8x16x4xf32>
    %16 = vector.shape_cast %15 : vector<8x16x4xf32> to vector<128x4xf32>
    %c0_12 = arith.constant 0 : index
    %c2 = arith.constant 2 : index
    %c0_13 = arith.constant 0 : index
    %c0_14 = arith.constant 0 : index
    %17 = vector.load %arg3[%c0_12, %c2, %c0_13, %c0_14] : memref<3x3x4x4xf32, #tpu.memory_space<vmem>>, vector<1x1x4x4xf32>
    %18 = vector.shape_cast %17 : vector<1x1x4x4xf32> to vector<4x4xf32>
    %cst_15 = arith.constant dense<0.000000e+00> : vector<128x4xf32>
    %19 = tpu.matmul %16, %18, %cst_15 {dimension_numbers = #tpu.dot_dimension_numbers<[1], [0], [0], [1], [0, 0, 1, 1], [], []>} : vector<128x4xf32>, vector<4x4xf32>, vector<128x4xf32> -> vector<128x4xf32>
    %20 = arith.addf %14, %19 : vector<128x4xf32>
    %21 = vector.extract_strided_slice %1 {offsets = [1, 0, 0], sizes = [8, 16, 4], strides = [1, 1, 1]} : vector<10x18x4xf32> to vector<8x16x4xf32>
    %22 = vector.shape_cast %21 : vector<8x16x4xf32> to vector<128x4xf32>
    %c1_16 = arith.constant 1 : index
    %c0_17 = arith.constant 0 : index
    %c0_18 = arith.constant 0 : index
    %c0_19 = arith.constant 0 : index
    %23 = vector.load %arg3[%c1_16, %c0_17, %c0_18, %c0_19] : memref<3x3x4x4xf32, #tpu.memory_space<vmem>>, vector<1x1x4x4xf32>
    %24 = vector.shape_cast %23 : vector<1x1x4x4xf32> to vector<4x4xf32>
    %cst_20 = arith.constant dense<0.000000e+00> : vector<128x4xf32>
    %25 = tpu.matmul %22, %24, %cst_20 {dimension_numbers = #tpu.dot_dimension_numbers<[1], [0], [0], [1], [0, 0, 1, 1], [], []>} : vector<128x4xf32>, vector<4x4xf32>, vector<128x4xf32> -> vector<128x4xf32>
    %26 = arith.addf %20, %25 : vector<128x4xf32>
    %27 = vector.extract_strided_slice %1 {offsets = [1, 1, 0], sizes = [8, 16, 4], strides = [1, 1, 1]} : vector<10x18x4xf32> to vector<8x16x4xf32>
    %28 = vector.shape_cast %27 : vector<8x16x4xf32> to vector<128x4xf32>
    %c1_21 = arith.constant 1 : index
    %c1_22 = arith.constant 1 : index
    %c0_23 = arith.constant 0 : index
    %c0_24 = arith.constant 0 : index
    %29 = vector.load %arg3[%c1_21, %c1_22, %c0_23, %c0_24] : memref<3x3x4x4xf32, #tpu.memory_space<vmem>>, vector<1x1x4x4xf32>
    %30 = vector.shape_cast %29 : vector<1x1x4x4xf32> to vector<4x4xf32>
    %cst_25 = arith.constant dense<0.000000e+00> : vector<128x4xf32>
    %31 = tpu.matmul %28, %30, %cst_25 {dimension_numbers = #tpu.dot_dimension_numbers<[1], [0], [0], [1], [0, 0, 1, 1], [], []>} : vector<128x4xf32>, vector<4x4xf32>, vector<128x4xf32> -> vector<128x4xf32>
    %32 = arith.addf %26, %31 : vector<128x4xf32>
    %33 = vector.extract_strided_slice %1 {offsets = [1, 2, 0], sizes = [8, 16, 4], strides = [1, 1, 1]} : vector<10x18x4xf32> to vector<8x16x4xf32>
    %34 = vector.shape_cast %33 : vector<8x16x4xf32> to vector<128x4xf32>
    %c1_26 = arith.constant 1 : index
    %c2_27 = arith.constant 2 : index
    %c0_28 = arith.constant 0 : index
    %c0_29 = arith.constant 0 : index
    %35 = vector.load %arg3[%c1_26, %c2_27, %c0_28, %c0_29] : memref<3x3x4x4xf32, #tpu.memory_space<vmem>>, vector<1x1x4x4xf32>
    %36 = vector.shape_cast %35 : vector<1x1x4x4xf32> to vector<4x4xf32>
    %cst_30 = arith.constant dense<0.000000e+00> : vector<128x4xf32>
    %37 = tpu.matmul %34, %36, %cst_30 {dimension_numbers = #tpu.dot_dimension_numbers<[1], [0], [0], [1], [0, 0, 1, 1], [], []>} : vector<128x4xf32>, vector<4x4xf32>, vector<128x4xf32> -> vector<128x4xf32>
    %38 = arith.addf %32, %37 : vector<128x4xf32>
    %39 = vector.extract_strided_slice %1 {offsets = [2, 0, 0], sizes = [8, 16, 4], strides = [1, 1, 1]} : vector<10x18x4xf32> to vector<8x16x4xf32>
    %40 = vector.shape_cast %39 : vector<8x16x4xf32> to vector<128x4xf32>
    %c2_31 = arith.constant 2 : index
    %c0_32 = arith.constant 0 : index
    %c0_33 = arith.constant 0 : index
    %c0_34 = arith.constant 0 : index
    %41 = vector.load %arg3[%c2_31, %c0_32, %c0_33, %c0_34] : memref<3x3x4x4xf32, #tpu.memory_space<vmem>>, vector<1x1x4x4xf32>
    %42 = vector.shape_cast %41 : vector<1x1x4x4xf32> to vector<4x4xf32>
    %cst_35 = arith.constant dense<0.000000e+00> : vector<128x4xf32>
    %43 = tpu.matmul %40, %42, %cst_35 {dimension_numbers = #tpu.dot_dimension_numbers<[1], [0], [0], [1], [0, 0, 1, 1], [], []>} : vector<128x4xf32>, vector<4x4xf32>, vector<128x4xf32> -> vector<128x4xf32>
    %44 = arith.addf %38, %43 : vector<128x4xf32>
    %45 = vector.extract_strided_slice %1 {offsets = [2, 1, 0], sizes = [8, 16, 4], strides = [1, 1, 1]} : vector<10x18x4xf32> to vector<8x16x4xf32>
    %46 = vector.shape_cast %45 : vector<8x16x4xf32> to vector<128x4xf32>
    %c2_36 = arith.constant 2 : index
    %c1_37 = arith.constant 1 : index
    %c0_38 = arith.constant 0 : index
    %c0_39 = arith.constant 0 : index
    %47 = vector.load %arg3[%c2_36, %c1_37, %c0_38, %c0_39] : memref<3x3x4x4xf32, #tpu.memory_space<vmem>>, vector<1x1x4x4xf32>
    %48 = vector.shape_cast %47 : vector<1x1x4x4xf32> to vector<4x4xf32>
    %cst_40 = arith.constant dense<0.000000e+00> : vector<128x4xf32>
    %49 = tpu.matmul %46, %48, %cst_40 {dimension_numbers = #tpu.dot_dimension_numbers<[1], [0], [0], [1], [0, 0, 1, 1], [], []>} : vector<128x4xf32>, vector<4x4xf32>, vector<128x4xf32> -> vector<128x4xf32>
    %50 = arith.addf %44, %49 : vector<128x4xf32>
    %51 = vector.extract_strided_slice %1 {offsets = [2, 2, 0], sizes = [8, 16, 4], strides = [1, 1, 1]} : vector<10x18x4xf32> to vector<8x16x4xf32>
    %52 = vector.shape_cast %51 : vector<8x16x4xf32> to vector<128x4xf32>
    %c2_41 = arith.constant 2 : index
    %c2_42 = arith.constant 2 : index
    %c0_43 = arith.constant 0 : index
    %c0_44 = arith.constant 0 : index
    %53 = vector.load %arg3[%c2_41, %c2_42, %c0_43, %c0_44] : memref<3x3x4x4xf32, #tpu.memory_space<vmem>>, vector<1x1x4x4xf32>
    %54 = vector.shape_cast %53 : vector<1x1x4x4xf32> to vector<4x4xf32>
    %cst_45 = arith.constant dense<0.000000e+00> : vector<128x4xf32>
    %55 = tpu.matmul %52, %54, %cst_45 {dimension_numbers = #tpu.dot_dimension_numbers<[1], [0], [0], [1], [0, 0, 1, 1], [], []>} : vector<128x4xf32>, vector<4x4xf32>, vector<128x4xf32> -> vector<128x4xf32>
    %56 = arith.addf %50, %55 : vector<128x4xf32>
    %57 = vector.shape_cast %56 : vector<128x4xf32> to vector<8x16x4xf32>
    %c0_46 = arith.constant 0 : index
    %c0_47 = arith.constant 0 : index
    %c0_48 = arith.constant 0 : index
    %c0_49 = arith.constant 0 : index
    %58 = vector.load %arg6[%c0_46, %c0_47, %c0_48, %c0_49] : memref<1x8x16x4xf32, #tpu.memory_space<vmem>>, vector<1x8x16x4xf32>
    %59 = vector.shape_cast %58 : vector<1x8x16x4xf32> to vector<8x16x4xf32>
    %60 = vector.shape_cast %57 : vector<8x16x4xf32> to vector<1x8x16x4xf32>
    tpu.vector_store %arg6[%c0_46, %c0_47, %c0_48, %c0_49], %60 {strides = array<i32>} : memref<1x8x16x4xf32, #tpu.memory_space<vmem>>, vector<1x8x16x4xf32>,
    %cst_50 = arith.constant dense<0.000000e+00> : vector<4xf32>
    %61 = vector.multi_reduction <add>, %56, %cst_50 [0] : vector<128x4xf32> to vector<4xf32>
    %62 = vector.shape_cast %61 : vector<4xf32> to vector<1x4xf32>
    %63 = arith.mulf %56, %56 : vector<128x4xf32>
    %cst_51 = arith.constant dense<0.000000e+00> : vector<4xf32>
    %64 = vector.multi_reduction <add>, %63, %cst_51 [0] : vector<128x4xf32> to vector<4xf32>
    %65 = vector.shape_cast %64 : vector<4xf32> to vector<1x4xf32>
    %66 = tpu.concatenate %62, %65 in 0 : vector<1x4xf32>, vector<1x4xf32> -> vector<2x4xf32>
    %c0_52 = arith.constant 0 : index
    %c0_53 = arith.constant 0 : index
    %c0_54 = arith.constant 0 : index
    %67 = vector.load %arg7[%c0_52, %c0_53, %c0_54] : memref<1x2x4xf32, #tpu.memory_space<vmem>>, vector<1x2x4xf32>
    %68 = vector.shape_cast %67 : vector<1x2x4xf32> to vector<2x4xf32>
    %69 = vector.shape_cast %66 : vector<2x4xf32> to vector<1x2x4xf32>
    tpu.vector_store %arg7[%c0_52, %c0_53, %c0_54], %69 {strides = array<i32>} : memref<1x2x4xf32, #tpu.memory_space<vmem>>, vector<1x2x4xf32>,
    return
  }
  func.func @transform_0(%arg0: i32, %arg1: i32) -> (i32, i32, i32, i32) {
    %c2_i32 = arith.constant 2 : i32
    %0 = arith.muli %arg0, %c2_i32 : i32
    %1 = arith.addi %0, %arg1 : i32
    %c0_i32 = arith.constant 0 : i32
    %c0_i32_0 = arith.constant 0 : i32
    %c0_i32_1 = arith.constant 0 : i32
    %c0_i32_2 = arith.constant 0 : i32
    return %1, %c0_i32, %c0_i32_0, %c0_i32_1 : i32, i32, i32, i32
  }
  func.func @transform_1(%arg0: i32, %arg1: i32) -> (i32, i32, i32, i32) {
    %c0_i32 = arith.constant 0 : i32
    %c0_i32_0 = arith.constant 0 : i32
    %c0_i32_1 = arith.constant 0 : i32
    %c0_i32_2 = arith.constant 0 : i32
    %c0_i32_3 = arith.constant 0 : i32
    return %c0_i32, %c0_i32_0, %c0_i32_1, %c0_i32_2 : i32, i32, i32, i32
  }
  func.func @transform_2(%arg0: i32, %arg1: i32) -> (i32, i32) {
    %c0_i32 = arith.constant 0 : i32
    %c0_i32_0 = arith.constant 0 : i32
    %c0_i32_1 = arith.constant 0 : i32
    return %c0_i32, %c0_i32_0 : i32, i32
  }
  func.func @transform_3(%arg0: i32, %arg1: i32) -> (i32, i32) {
    %c0_i32 = arith.constant 0 : i32
    %c0_i32_0 = arith.constant 0 : i32
    %c0_i32_1 = arith.constant 0 : i32
    return %c0_i32, %c0_i32_0 : i32, i32
  }
  func.func @transform_4(%arg0: i32, %arg1: i32) -> (i32, i32, i32, i32) {
    %c2_i32 = arith.constant 2 : i32
    %0 = arith.muli %arg0, %c2_i32 : i32
    %1 = arith.addi %0, %arg1 : i32
    %c0_i32 = arith.constant 0 : i32
    %c0_i32_0 = arith.constant 0 : i32
    %c0_i32_1 = arith.constant 0 : i32
    %c0_i32_2 = arith.constant 0 : i32
    return %1, %c0_i32, %c0_i32_0, %c0_i32_1 : i32, i32, i32, i32
  }
  func.func @transform_5(%arg0: i32, %arg1: i32) -> (i32, i32, i32) {
    %c2_i32 = arith.constant 2 : i32
    %0 = arith.muli %arg0, %c2_i32 : i32
    %1 = arith.addi %0, %arg1 : i32
    %c0_i32 = arith.constant 0 : i32
    %c0_i32_0 = arith.constant 0 : i32
    %c0_i32_1 = arith.constant 0 : i32
    return %1, %c0_i32, %c0_i32_0 : i32, i32, i32
  }
}

module attributes {stable_mosaic.version = 11 : i64} {
  func.func @_conv3x3_kernel(%arg0: i32, %arg1: i32, %arg2: memref<1x10x18x4xf32, #tpu.memory_space<vmem>>, %arg3: memref<3x3x4x4xf32, #tpu.memory_space<vmem>>, %arg4: memref<1x4xf32, #tpu.memory_space<vmem>>, %arg5: memref<1x4xf32, #tpu.memory_space<vmem>>, %arg6: memref<1x8x16x4xf32, #tpu.memory_space<vmem>>, %arg7: memref<1x2x4xf32, #tpu.memory_space<vmem>>) attributes {dimension_semantics = [#tpu.dimension_semantics<parallel>, #tpu.dimension_semantics<parallel>], iteration_bounds = array<i64: 2, 2>, scalar_prefetch = 0 : i64, scratch_operands = 0 : i64, tpu.core_type = #tpu.core_type<tc>, window_params = [{transform_indices = @transform_0, window_bounds = array<i64: 1, 10, 18, 4>}, {pipeline_mode = #tpu.pipeline_mode<synchronous>, transform_indices = @transform_1, window_bounds = array<i64: 3, 3, 4, 4>}, {pipeline_mode = #tpu.pipeline_mode<synchronous>, transform_indices = @transform_2, window_bounds = array<i64: 1, 4>}, {pipeline_mode = #tpu.pipeline_mode<synchronous>, transform_indices = @transform_3, window_bounds = array<i64: 1, 4>}, {transform_indices = @transform_4, window_bounds = array<i64: 1, 8, 16, 4>}, {transform_indices = @transform_5, window_bounds = array<i64: 1, 2, 4>}]} {
    %c0 = arith.constant 0 : index
    %c0_0 = arith.constant 0 : index
    %c0_1 = arith.constant 0 : index
    %c0_2 = arith.constant 0 : index
    %0 = vector.load %arg2[%c0, %c0_0, %c0_1, %c0_2] : memref<1x10x18x4xf32, #tpu.memory_space<vmem>>, vector<1x10x18x4xf32>
    %1 = vector.shape_cast %0 : vector<1x10x18x4xf32> to vector<10x18x4xf32>
    %c0_3 = arith.constant 0 : index
    %c0_4 = arith.constant 0 : index
    %2 = vector.load %arg4[%c0_3, %c0_4] : memref<1x4xf32, #tpu.memory_space<vmem>>, vector<1x4xf32>
    %3 = vector.shape_cast %2 : vector<1x4xf32> to vector<1x1x4xf32>
    %4 = vector.broadcast %3 : vector<1x1x4xf32> to vector<10x18x4xf32>
    %5 = arith.mulf %1, %4 : vector<10x18x4xf32>
    %c0_5 = arith.constant 0 : index
    %c0_6 = arith.constant 0 : index
    %6 = vector.load %arg5[%c0_5, %c0_6] : memref<1x4xf32, #tpu.memory_space<vmem>>, vector<1x4xf32>
    %7 = vector.shape_cast %6 : vector<1x4xf32> to vector<1x1x4xf32>
    %8 = vector.broadcast %7 : vector<1x1x4xf32> to vector<10x18x4xf32>
    %9 = arith.addf %5, %8 : vector<10x18x4xf32>
    %cst = arith.constant 0.000000e+00 : f32
    %10 = vector.broadcast %cst : f32 to vector<10x18x4xf32>
    %11 = arith.maximumf %9, %10 : vector<10x18x4xf32>
    %12 = tpu.iota {dimensions = array<i32: 0>} : vector<10x18x4xi32>
    %13 = tpu.iota {dimensions = array<i32: 1>} : vector<10x18x4xi32>
    %c0_i32 = arith.constant 0 : i32
    %14 = vector.broadcast %c0_i32 : i32 to vector<10x18x4xi32>
    %15 = arith.cmpi eq, %13, %14 : vector<10x18x4xi32>
    %c17_i32 = arith.constant 17 : i32
    %16 = vector.broadcast %c17_i32 : i32 to vector<10x18x4xi32>
    %17 = arith.cmpi eq, %13, %16 : vector<10x18x4xi32>
    %18 = arith.ori %15, %17 : vector<10x18x4xi1>
    %c0_i32_7 = arith.constant 0 : i32
    %19 = arith.cmpi eq, %arg1, %c0_i32_7 : i32
    %c0_i32_8 = arith.constant 0 : i32
    %20 = vector.broadcast %c0_i32_8 : i32 to vector<10x18x4xi32>
    %21 = arith.cmpi eq, %12, %20 : vector<10x18x4xi32>
    %22 = vector.broadcast %19 : i1 to vector<10x18x4xi1>
    %23 = arith.andi %22, %21 : vector<10x18x4xi1>
    %24 = arith.ori %18, %23 : vector<10x18x4xi1>
    %c1_i32 = arith.constant 1 : i32
    %25 = arith.cmpi eq, %arg1, %c1_i32 : i32
    %c9_i32 = arith.constant 9 : i32
    %26 = vector.broadcast %c9_i32 : i32 to vector<10x18x4xi32>
    %27 = arith.cmpi eq, %12, %26 : vector<10x18x4xi32>
    %28 = vector.broadcast %25 : i1 to vector<10x18x4xi1>
    %29 = arith.andi %28, %27 : vector<10x18x4xi1>
    %30 = arith.ori %24, %29 : vector<10x18x4xi1>
    %cst_9 = arith.constant 0.000000e+00 : f32
    %31 = vector.broadcast %cst_9 : f32 to vector<10x18x4xf32>
    %32 = arith.select %30, %31, %11 : vector<10x18x4xi1>, vector<10x18x4xf32>
    %cst_10 = arith.constant 0.000000e+00 : f32
    %33 = vector.broadcast %cst_10 : f32 to vector<128x4xf32>
    %34 = vector.extract_strided_slice %32 {offsets = [0, 0, 0], sizes = [8, 16, 4], strides = [1, 1, 1]} : vector<10x18x4xf32> to vector<8x16x4xf32>
    %35 = vector.shape_cast %34 : vector<8x16x4xf32> to vector<128x4xf32>
    %c0_11 = arith.constant 0 : index
    %c0_12 = arith.constant 0 : index
    %c0_13 = arith.constant 0 : index
    %c0_14 = arith.constant 0 : index
    %36 = vector.load %arg3[%c0_11, %c0_12, %c0_13, %c0_14] : memref<3x3x4x4xf32, #tpu.memory_space<vmem>>, vector<1x1x4x4xf32>
    %37 = vector.shape_cast %36 : vector<1x1x4x4xf32> to vector<4x4xf32>
    %cst_15 = arith.constant dense<0.000000e+00> : vector<128x4xf32>
    %38 = tpu.matmul %35, %37, %cst_15 {dimension_numbers = #tpu.dot_dimension_numbers<[1], [0], [0], [1], [0, 0, 1, 1], [], []>} : vector<128x4xf32>, vector<4x4xf32>, vector<128x4xf32> -> vector<128x4xf32>
    %39 = arith.addf %33, %38 : vector<128x4xf32>
    %40 = vector.extract_strided_slice %32 {offsets = [0, 1, 0], sizes = [8, 16, 4], strides = [1, 1, 1]} : vector<10x18x4xf32> to vector<8x16x4xf32>
    %41 = vector.shape_cast %40 : vector<8x16x4xf32> to vector<128x4xf32>
    %c0_16 = arith.constant 0 : index
    %c1 = arith.constant 1 : index
    %c0_17 = arith.constant 0 : index
    %c0_18 = arith.constant 0 : index
    %42 = vector.load %arg3[%c0_16, %c1, %c0_17, %c0_18] : memref<3x3x4x4xf32, #tpu.memory_space<vmem>>, vector<1x1x4x4xf32>
    %43 = vector.shape_cast %42 : vector<1x1x4x4xf32> to vector<4x4xf32>
    %cst_19 = arith.constant dense<0.000000e+00> : vector<128x4xf32>
    %44 = tpu.matmul %41, %43, %cst_19 {dimension_numbers = #tpu.dot_dimension_numbers<[1], [0], [0], [1], [0, 0, 1, 1], [], []>} : vector<128x4xf32>, vector<4x4xf32>, vector<128x4xf32> -> vector<128x4xf32>
    %45 = arith.addf %39, %44 : vector<128x4xf32>
    %46 = vector.extract_strided_slice %32 {offsets = [0, 2, 0], sizes = [8, 16, 4], strides = [1, 1, 1]} : vector<10x18x4xf32> to vector<8x16x4xf32>
    %47 = vector.shape_cast %46 : vector<8x16x4xf32> to vector<128x4xf32>
    %c0_20 = arith.constant 0 : index
    %c2 = arith.constant 2 : index
    %c0_21 = arith.constant 0 : index
    %c0_22 = arith.constant 0 : index
    %48 = vector.load %arg3[%c0_20, %c2, %c0_21, %c0_22] : memref<3x3x4x4xf32, #tpu.memory_space<vmem>>, vector<1x1x4x4xf32>
    %49 = vector.shape_cast %48 : vector<1x1x4x4xf32> to vector<4x4xf32>
    %cst_23 = arith.constant dense<0.000000e+00> : vector<128x4xf32>
    %50 = tpu.matmul %47, %49, %cst_23 {dimension_numbers = #tpu.dot_dimension_numbers<[1], [0], [0], [1], [0, 0, 1, 1], [], []>} : vector<128x4xf32>, vector<4x4xf32>, vector<128x4xf32> -> vector<128x4xf32>
    %51 = arith.addf %45, %50 : vector<128x4xf32>
    %52 = vector.extract_strided_slice %32 {offsets = [1, 0, 0], sizes = [8, 16, 4], strides = [1, 1, 1]} : vector<10x18x4xf32> to vector<8x16x4xf32>
    %53 = vector.shape_cast %52 : vector<8x16x4xf32> to vector<128x4xf32>
    %c1_24 = arith.constant 1 : index
    %c0_25 = arith.constant 0 : index
    %c0_26 = arith.constant 0 : index
    %c0_27 = arith.constant 0 : index
    %54 = vector.load %arg3[%c1_24, %c0_25, %c0_26, %c0_27] : memref<3x3x4x4xf32, #tpu.memory_space<vmem>>, vector<1x1x4x4xf32>
    %55 = vector.shape_cast %54 : vector<1x1x4x4xf32> to vector<4x4xf32>
    %cst_28 = arith.constant dense<0.000000e+00> : vector<128x4xf32>
    %56 = tpu.matmul %53, %55, %cst_28 {dimension_numbers = #tpu.dot_dimension_numbers<[1], [0], [0], [1], [0, 0, 1, 1], [], []>} : vector<128x4xf32>, vector<4x4xf32>, vector<128x4xf32> -> vector<128x4xf32>
    %57 = arith.addf %51, %56 : vector<128x4xf32>
    %58 = vector.extract_strided_slice %32 {offsets = [1, 1, 0], sizes = [8, 16, 4], strides = [1, 1, 1]} : vector<10x18x4xf32> to vector<8x16x4xf32>
    %59 = vector.shape_cast %58 : vector<8x16x4xf32> to vector<128x4xf32>
    %c1_29 = arith.constant 1 : index
    %c1_30 = arith.constant 1 : index
    %c0_31 = arith.constant 0 : index
    %c0_32 = arith.constant 0 : index
    %60 = vector.load %arg3[%c1_29, %c1_30, %c0_31, %c0_32] : memref<3x3x4x4xf32, #tpu.memory_space<vmem>>, vector<1x1x4x4xf32>
    %61 = vector.shape_cast %60 : vector<1x1x4x4xf32> to vector<4x4xf32>
    %cst_33 = arith.constant dense<0.000000e+00> : vector<128x4xf32>
    %62 = tpu.matmul %59, %61, %cst_33 {dimension_numbers = #tpu.dot_dimension_numbers<[1], [0], [0], [1], [0, 0, 1, 1], [], []>} : vector<128x4xf32>, vector<4x4xf32>, vector<128x4xf32> -> vector<128x4xf32>
    %63 = arith.addf %57, %62 : vector<128x4xf32>
    %64 = vector.extract_strided_slice %32 {offsets = [1, 2, 0], sizes = [8, 16, 4], strides = [1, 1, 1]} : vector<10x18x4xf32> to vector<8x16x4xf32>
    %65 = vector.shape_cast %64 : vector<8x16x4xf32> to vector<128x4xf32>
    %c1_34 = arith.constant 1 : index
    %c2_35 = arith.constant 2 : index
    %c0_36 = arith.constant 0 : index
    %c0_37 = arith.constant 0 : index
    %66 = vector.load %arg3[%c1_34, %c2_35, %c0_36, %c0_37] : memref<3x3x4x4xf32, #tpu.memory_space<vmem>>, vector<1x1x4x4xf32>
    %67 = vector.shape_cast %66 : vector<1x1x4x4xf32> to vector<4x4xf32>
    %cst_38 = arith.constant dense<0.000000e+00> : vector<128x4xf32>
    %68 = tpu.matmul %65, %67, %cst_38 {dimension_numbers = #tpu.dot_dimension_numbers<[1], [0], [0], [1], [0, 0, 1, 1], [], []>} : vector<128x4xf32>, vector<4x4xf32>, vector<128x4xf32> -> vector<128x4xf32>
    %69 = arith.addf %63, %68 : vector<128x4xf32>
    %70 = vector.extract_strided_slice %32 {offsets = [2, 0, 0], sizes = [8, 16, 4], strides = [1, 1, 1]} : vector<10x18x4xf32> to vector<8x16x4xf32>
    %71 = vector.shape_cast %70 : vector<8x16x4xf32> to vector<128x4xf32>
    %c2_39 = arith.constant 2 : index
    %c0_40 = arith.constant 0 : index
    %c0_41 = arith.constant 0 : index
    %c0_42 = arith.constant 0 : index
    %72 = vector.load %arg3[%c2_39, %c0_40, %c0_41, %c0_42] : memref<3x3x4x4xf32, #tpu.memory_space<vmem>>, vector<1x1x4x4xf32>
    %73 = vector.shape_cast %72 : vector<1x1x4x4xf32> to vector<4x4xf32>
    %cst_43 = arith.constant dense<0.000000e+00> : vector<128x4xf32>
    %74 = tpu.matmul %71, %73, %cst_43 {dimension_numbers = #tpu.dot_dimension_numbers<[1], [0], [0], [1], [0, 0, 1, 1], [], []>} : vector<128x4xf32>, vector<4x4xf32>, vector<128x4xf32> -> vector<128x4xf32>
    %75 = arith.addf %69, %74 : vector<128x4xf32>
    %76 = vector.extract_strided_slice %32 {offsets = [2, 1, 0], sizes = [8, 16, 4], strides = [1, 1, 1]} : vector<10x18x4xf32> to vector<8x16x4xf32>
    %77 = vector.shape_cast %76 : vector<8x16x4xf32> to vector<128x4xf32>
    %c2_44 = arith.constant 2 : index
    %c1_45 = arith.constant 1 : index
    %c0_46 = arith.constant 0 : index
    %c0_47 = arith.constant 0 : index
    %78 = vector.load %arg3[%c2_44, %c1_45, %c0_46, %c0_47] : memref<3x3x4x4xf32, #tpu.memory_space<vmem>>, vector<1x1x4x4xf32>
    %79 = vector.shape_cast %78 : vector<1x1x4x4xf32> to vector<4x4xf32>
    %cst_48 = arith.constant dense<0.000000e+00> : vector<128x4xf32>
    %80 = tpu.matmul %77, %79, %cst_48 {dimension_numbers = #tpu.dot_dimension_numbers<[1], [0], [0], [1], [0, 0, 1, 1], [], []>} : vector<128x4xf32>, vector<4x4xf32>, vector<128x4xf32> -> vector<128x4xf32>
    %81 = arith.addf %75, %80 : vector<128x4xf32>
    %82 = vector.extract_strided_slice %32 {offsets = [2, 2, 0], sizes = [8, 16, 4], strides = [1, 1, 1]} : vector<10x18x4xf32> to vector<8x16x4xf32>
    %83 = vector.shape_cast %82 : vector<8x16x4xf32> to vector<128x4xf32>
    %c2_49 = arith.constant 2 : index
    %c2_50 = arith.constant 2 : index
    %c0_51 = arith.constant 0 : index
    %c0_52 = arith.constant 0 : index
    %84 = vector.load %arg3[%c2_49, %c2_50, %c0_51, %c0_52] : memref<3x3x4x4xf32, #tpu.memory_space<vmem>>, vector<1x1x4x4xf32>
    %85 = vector.shape_cast %84 : vector<1x1x4x4xf32> to vector<4x4xf32>
    %cst_53 = arith.constant dense<0.000000e+00> : vector<128x4xf32>
    %86 = tpu.matmul %83, %85, %cst_53 {dimension_numbers = #tpu.dot_dimension_numbers<[1], [0], [0], [1], [0, 0, 1, 1], [], []>} : vector<128x4xf32>, vector<4x4xf32>, vector<128x4xf32> -> vector<128x4xf32>
    %87 = arith.addf %81, %86 : vector<128x4xf32>
    %88 = vector.shape_cast %87 : vector<128x4xf32> to vector<8x16x4xf32>
    %c0_54 = arith.constant 0 : index
    %c0_55 = arith.constant 0 : index
    %c0_56 = arith.constant 0 : index
    %c0_57 = arith.constant 0 : index
    %89 = vector.load %arg6[%c0_54, %c0_55, %c0_56, %c0_57] : memref<1x8x16x4xf32, #tpu.memory_space<vmem>>, vector<1x8x16x4xf32>
    %90 = vector.shape_cast %89 : vector<1x8x16x4xf32> to vector<8x16x4xf32>
    %91 = vector.shape_cast %88 : vector<8x16x4xf32> to vector<1x8x16x4xf32>
    tpu.vector_store %arg6[%c0_54, %c0_55, %c0_56, %c0_57], %91 {strides = array<i32>} : memref<1x8x16x4xf32, #tpu.memory_space<vmem>>, vector<1x8x16x4xf32>,
    %cst_58 = arith.constant dense<0.000000e+00> : vector<4xf32>
    %92 = vector.multi_reduction <add>, %87, %cst_58 [0] : vector<128x4xf32> to vector<4xf32>
    %93 = vector.shape_cast %92 : vector<4xf32> to vector<1x4xf32>
    %94 = arith.mulf %87, %87 : vector<128x4xf32>
    %cst_59 = arith.constant dense<0.000000e+00> : vector<4xf32>
    %95 = vector.multi_reduction <add>, %94, %cst_59 [0] : vector<128x4xf32> to vector<4xf32>
    %96 = vector.shape_cast %95 : vector<4xf32> to vector<1x4xf32>
    %97 = tpu.concatenate %93, %96 in 0 : vector<1x4xf32>, vector<1x4xf32> -> vector<2x4xf32>
    %c0_60 = arith.constant 0 : index
    %c0_61 = arith.constant 0 : index
    %c0_62 = arith.constant 0 : index
    %98 = vector.load %arg7[%c0_60, %c0_61, %c0_62] : memref<1x2x4xf32, #tpu.memory_space<vmem>>, vector<1x2x4xf32>
    %99 = vector.shape_cast %98 : vector<1x2x4xf32> to vector<2x4xf32>
    %100 = vector.shape_cast %97 : vector<2x4xf32> to vector<1x2x4xf32>
    tpu.vector_store %arg7[%c0_60, %c0_61, %c0_62], %100 {strides = array<i32>} : memref<1x2x4xf32, #tpu.memory_space<vmem>>, vector<1x2x4xf32>,
    return
  }
  func.func @transform_0(%arg0: i32, %arg1: i32) -> (i32, i32, i32, i32) {
    %c2_i32 = arith.constant 2 : i32
    %0 = arith.muli %arg0, %c2_i32 : i32
    %1 = arith.addi %0, %arg1 : i32
    %c0_i32 = arith.constant 0 : i32
    %c0_i32_0 = arith.constant 0 : i32
    %c0_i32_1 = arith.constant 0 : i32
    %c0_i32_2 = arith.constant 0 : i32
    return %1, %c0_i32, %c0_i32_0, %c0_i32_1 : i32, i32, i32, i32
  }
  func.func @transform_1(%arg0: i32, %arg1: i32) -> (i32, i32, i32, i32) {
    %c0_i32 = arith.constant 0 : i32
    %c0_i32_0 = arith.constant 0 : i32
    %c0_i32_1 = arith.constant 0 : i32
    %c0_i32_2 = arith.constant 0 : i32
    %c0_i32_3 = arith.constant 0 : i32
    return %c0_i32, %c0_i32_0, %c0_i32_1, %c0_i32_2 : i32, i32, i32, i32
  }
  func.func @transform_2(%arg0: i32, %arg1: i32) -> (i32, i32) {
    %c0_i32 = arith.constant 0 : i32
    %c0_i32_0 = arith.constant 0 : i32
    %c0_i32_1 = arith.constant 0 : i32
    return %c0_i32, %c0_i32_0 : i32, i32
  }
  func.func @transform_3(%arg0: i32, %arg1: i32) -> (i32, i32) {
    %c0_i32 = arith.constant 0 : i32
    %c0_i32_0 = arith.constant 0 : i32
    %c0_i32_1 = arith.constant 0 : i32
    return %c0_i32, %c0_i32_0 : i32, i32
  }
  func.func @transform_4(%arg0: i32, %arg1: i32) -> (i32, i32, i32, i32) {
    %c2_i32 = arith.constant 2 : i32
    %0 = arith.muli %arg0, %c2_i32 : i32
    %1 = arith.addi %0, %arg1 : i32
    %c0_i32 = arith.constant 0 : i32
    %c0_i32_0 = arith.constant 0 : i32
    %c0_i32_1 = arith.constant 0 : i32
    %c0_i32_2 = arith.constant 0 : i32
    return %1, %c0_i32, %c0_i32_0, %c0_i32_1 : i32, i32, i32, i32
  }
  func.func @transform_5(%arg0: i32, %arg1: i32) -> (i32, i32, i32) {
    %c2_i32 = arith.constant 2 : i32
    %0 = arith.muli %arg0, %c2_i32 : i32
    %1 = arith.addi %0, %arg1 : i32
    %c0_i32 = arith.constant 0 : i32
    %c0_i32_0 = arith.constant 0 : i32
    %c0_i32_1 = arith.constant 0 : i32
    return %1, %c0_i32, %c0_i32_0 : i32, i32, i32
  }
}

module attributes {stable_mosaic.version = 11 : i64} {
  func.func @_attn_fusion_kernel(%arg0: i32, %arg1: memref<128x4xf32, #tpu.memory_space<vmem>>, %arg2: memref<128x4xf32, #tpu.memory_space<vmem>>, %arg3: memref<1x4xf32, #tpu.memory_space<vmem>>, %arg4: memref<1x4xf32, #tpu.memory_space<vmem>>, %arg5: memref<4x12xf32, #tpu.memory_space<vmem>>, %arg6: memref<1x12xf32, #tpu.memory_space<vmem>>, %arg7: memref<4x8xf32, #tpu.memory_space<vmem>>, %arg8: memref<1x8xf32, #tpu.memory_space<vmem>>, %arg9: memref<128x8xf32, #tpu.memory_space<vmem>>) attributes {dimension_semantics = [#tpu.dimension_semantics<parallel>], iteration_bounds = array<i64: 4>, scalar_prefetch = 0 : i64, scratch_operands = 0 : i64, tpu.core_type = #tpu.core_type<tc>, window_params = [{transform_indices = @transform_0, window_bounds = array<i64: 128, 4>}, {transform_indices = @transform_1, window_bounds = array<i64: 128, 4>}, {pipeline_mode = #tpu.pipeline_mode<synchronous>, transform_indices = @transform_2, window_bounds = array<i64: 1, 4>}, {pipeline_mode = #tpu.pipeline_mode<synchronous>, transform_indices = @transform_3, window_bounds = array<i64: 1, 4>}, {pipeline_mode = #tpu.pipeline_mode<synchronous>, transform_indices = @transform_4, window_bounds = array<i64: 4, 12>}, {pipeline_mode = #tpu.pipeline_mode<synchronous>, transform_indices = @transform_5, window_bounds = array<i64: 1, 12>}, {pipeline_mode = #tpu.pipeline_mode<synchronous>, transform_indices = @transform_6, window_bounds = array<i64: 4, 8>}, {pipeline_mode = #tpu.pipeline_mode<synchronous>, transform_indices = @transform_7, window_bounds = array<i64: 1, 8>}, {transform_indices = @transform_8, window_bounds = array<i64: 128, 8>}]} {
    %c0 = arith.constant 0 : index
    %c0_0 = arith.constant 0 : index
    %0 = vector.load %arg1[%c0, %c0_0] : memref<128x4xf32, #tpu.memory_space<vmem>>, vector<128x4xf32>
    %c0_1 = arith.constant 0 : index
    %c0_2 = arith.constant 0 : index
    %1 = vector.load %arg2[%c0_1, %c0_2] : memref<128x4xf32, #tpu.memory_space<vmem>>, vector<128x4xf32>
    %c0_3 = arith.constant 0 : index
    %c0_4 = arith.constant 0 : index
    %2 = vector.load %arg3[%c0_3, %c0_4] : memref<1x4xf32, #tpu.memory_space<vmem>>, vector<1x4xf32>
    %3 = vector.broadcast %2 : vector<1x4xf32> to vector<128x4xf32>
    %4 = arith.mulf %1, %3 : vector<128x4xf32>
    %c0_5 = arith.constant 0 : index
    %c0_6 = arith.constant 0 : index
    %5 = vector.load %arg4[%c0_5, %c0_6] : memref<1x4xf32, #tpu.memory_space<vmem>>, vector<1x4xf32>
    %6 = vector.broadcast %5 : vector<1x4xf32> to vector<128x4xf32>
    %7 = arith.addf %4, %6 : vector<128x4xf32>
    %cst = arith.constant 0.000000e+00 : f32
    %8 = vector.broadcast %cst : f32 to vector<128x4xf32>
    %9 = arith.maximumf %7, %8 : vector<128x4xf32>
    %c0_7 = arith.constant 0 : index
    %c0_8 = arith.constant 0 : index
    %10 = vector.load %arg5[%c0_7, %c0_8] : memref<4x12xf32, #tpu.memory_space<vmem>>, vector<4x12xf32>
    %cst_9 = arith.constant dense<0.000000e+00> : vector<128x12xf32>
    %11 = tpu.matmul %0, %10, %cst_9 {dimension_numbers = #tpu.dot_dimension_numbers<[1], [0], [0], [1], [0, 0, 1, 1], [], []>} : vector<128x4xf32>, vector<4x12xf32>, vector<128x12xf32> -> vector<128x12xf32>
    %c0_10 = arith.constant 0 : index
    %c0_11 = arith.constant 0 : index
    %12 = vector.load %arg6[%c0_10, %c0_11] : memref<1x12xf32, #tpu.memory_space<vmem>>, vector<1x12xf32>
    %13 = vector.broadcast %12 : vector<1x12xf32> to vector<128x12xf32>
    %14 = arith.addf %11, %13 : vector<128x12xf32>
    %15 = vector.extract_strided_slice %14 {offsets = [0, 0], sizes = [128, 4], strides = [1, 1]} : vector<128x12xf32> to vector<128x4xf32>
    %16 = vector.extract_strided_slice %14 {offsets = [0, 4], sizes = [128, 4], strides = [1, 1]} : vector<128x12xf32> to vector<128x4xf32>
    %17 = vector.extract_strided_slice %14 {offsets = [0, 8], sizes = [128, 4], strides = [1, 1]} : vector<128x12xf32> to vector<128x4xf32>
    %18 = arith.mulf %15, %16 : vector<128x4xf32>
    %cst_12 = arith.constant dense<0xFF800000> : vector<128xf32>
    %19 = vector.multi_reduction <maximumf>, %18, %cst_12 [1] : vector<128x4xf32> to vector<128xf32>
    %20 = vector.shape_cast %19 : vector<128xf32> to vector<128x1xf32>
    %21 = vector.broadcast %20 : vector<128x1xf32> to vector<128x4xf32>
    %22 = arith.subf %18, %21 : vector<128x4xf32>
    %23 = math.exp %22 : vector<128x4xf32>
    %cst_13 = arith.constant dense<0.000000e+00> : vector<128xf32>
    %24 = vector.multi_reduction <add>, %23, %cst_13 [1] : vector<128x4xf32> to vector<128xf32>
    %25 = vector.shape_cast %24 : vector<128xf32> to vector<128x1xf32>
    %26 = tpu.reciprocal %25 : vector<128x1xf32> -> vector<128x1xf32>
    %27 = vector.broadcast %26 : vector<128x1xf32> to vector<128x4xf32>
    %28 = arith.mulf %23, %27 : vector<128x4xf32>
    %29 = arith.mulf %17, %28 : vector<128x4xf32>
    %30 = arith.addf %29, %0 : vector<128x4xf32>
    %31 = arith.negf %9 : vector<128x4xf32>
    %32 = math.exp %31 : vector<128x4xf32>
    %cst_14 = arith.constant 1.000000e+00 : f32
    %33 = vector.broadcast %cst_14 : f32 to vector<128x4xf32>
    %34 = arith.addf %33, %32 : vector<128x4xf32>
    %35 = arith.divf %33, %34 : vector<128x4xf32>
    %36 = arith.negf %30 : vector<128x4xf32>
    %37 = math.exp %36 : vector<128x4xf32>
    %cst_15 = arith.constant 1.000000e+00 : f32
    %38 = vector.broadcast %cst_15 : f32 to vector<128x4xf32>
    %39 = arith.addf %38, %37 : vector<128x4xf32>
    %40 = arith.divf %38, %39 : vector<128x4xf32>
    %cst_16 = arith.constant 9.99999993E-9 : f32
    %41 = vector.broadcast %cst_16 : f32 to vector<128x4xf32>
    %42 = arith.addf %35, %41 : vector<128x4xf32>
    %43 = math.log %42 : vector<128x4xf32>
    %44 = arith.mulf %35, %43 : vector<128x4xf32>
    %cst_17 = arith.constant dense<0.000000e+00> : vector<128xf32>
    %45 = vector.multi_reduction <add>, %44, %cst_17 [1] : vector<128x4xf32> to vector<128xf32>
    %46 = vector.shape_cast %45 : vector<128xf32> to vector<128x1xf32>
    %cst_18 = arith.constant 0.000000e+00 : f32
    %47 = vector.broadcast %cst_18 : f32 to vector<128x1xf32>
    %48 = arith.subf %47, %46 : vector<128x1xf32>
    %cst_19 = arith.constant 9.99999993E-9 : f32
    %49 = vector.broadcast %cst_19 : f32 to vector<128x4xf32>
    %50 = arith.addf %40, %49 : vector<128x4xf32>
    %51 = math.log %50 : vector<128x4xf32>
    %52 = arith.mulf %40, %51 : vector<128x4xf32>
    %cst_20 = arith.constant dense<0.000000e+00> : vector<128xf32>
    %53 = vector.multi_reduction <add>, %52, %cst_20 [1] : vector<128x4xf32> to vector<128xf32>
    %54 = vector.shape_cast %53 : vector<128xf32> to vector<128x1xf32>
    %cst_21 = arith.constant 0.000000e+00 : f32
    %55 = vector.broadcast %cst_21 : f32 to vector<128x1xf32>
    %56 = arith.subf %55, %54 : vector<128x1xf32>
    %cst_22 = arith.constant 1.000000e+00 : f32
    %57 = vector.broadcast %cst_22 : f32 to vector<128x1xf32>
    %58 = arith.subf %57, %48 : vector<128x1xf32>
    %cst_23 = arith.constant 1.000000e+00 : f32
    %59 = vector.broadcast %cst_23 : f32 to vector<128x1xf32>
    %60 = arith.subf %59, %56 : vector<128x1xf32>
    %61 = arith.addf %58, %60 : vector<128x1xf32>
    %cst_24 = arith.constant 9.99999993E-9 : f32
    %62 = vector.broadcast %cst_24 : f32 to vector<128x1xf32>
    %63 = arith.addf %61, %62 : vector<128x1xf32>
    %64 = tpu.reciprocal %63 : vector<128x1xf32> -> vector<128x1xf32>
    %65 = arith.mulf %58, %64 : vector<128x1xf32>
    %66 = vector.broadcast %65 : vector<128x1xf32> to vector<128x4xf32>
    %67 = arith.mulf %66, %9 : vector<128x4xf32>
    %68 = arith.mulf %60, %64 : vector<128x1xf32>
    %69 = vector.broadcast %68 : vector<128x1xf32> to vector<128x4xf32>
    %70 = arith.mulf %69, %30 : vector<128x4xf32>
    %71 = arith.addf %67, %70 : vector<128x4xf32>
    %72 = arith.addf %71, %9 : vector<128x4xf32>
    %73 = arith.addf %72, %30 : vector<128x4xf32>
    %c0_25 = arith.constant 0 : index
    %c0_26 = arith.constant 0 : index
    %74 = vector.load %arg7[%c0_25, %c0_26] : memref<4x8xf32, #tpu.memory_space<vmem>>, vector<4x8xf32>
    %cst_27 = arith.constant dense<0.000000e+00> : vector<128x8xf32>
    %75 = tpu.matmul %73, %74, %cst_27 {dimension_numbers = #tpu.dot_dimension_numbers<[1], [0], [0], [1], [0, 0, 1, 1], [], []>} : vector<128x4xf32>, vector<4x8xf32>, vector<128x8xf32> -> vector<128x8xf32>
    %c0_28 = arith.constant 0 : index
    %c0_29 = arith.constant 0 : index
    %76 = vector.load %arg8[%c0_28, %c0_29] : memref<1x8xf32, #tpu.memory_space<vmem>>, vector<1x8xf32>
    %77 = vector.broadcast %76 : vector<1x8xf32> to vector<128x8xf32>
    %78 = arith.addf %75, %77 : vector<128x8xf32>
    %c0_30 = arith.constant 0 : index
    %c0_31 = arith.constant 0 : index
    %79 = vector.load %arg9[%c0_30, %c0_31] : memref<128x8xf32, #tpu.memory_space<vmem>>, vector<128x8xf32>
    tpu.vector_store %arg9[%c0_30, %c0_31], %78 {strides = array<i32>} : memref<128x8xf32, #tpu.memory_space<vmem>>, vector<128x8xf32>,
    return
  }
  func.func @transform_0(%arg0: i32) -> (i32, i32) {
    %c0_i32 = arith.constant 0 : i32
    %c0_i32_0 = arith.constant 0 : i32
    return %arg0, %c0_i32 : i32, i32
  }
  func.func @transform_1(%arg0: i32) -> (i32, i32) {
    %c0_i32 = arith.constant 0 : i32
    %c0_i32_0 = arith.constant 0 : i32
    return %arg0, %c0_i32 : i32, i32
  }
  func.func @transform_2(%arg0: i32) -> (i32, i32) {
    %c0_i32 = arith.constant 0 : i32
    %c0_i32_0 = arith.constant 0 : i32
    %c0_i32_1 = arith.constant 0 : i32
    return %c0_i32, %c0_i32_0 : i32, i32
  }
  func.func @transform_3(%arg0: i32) -> (i32, i32) {
    %c0_i32 = arith.constant 0 : i32
    %c0_i32_0 = arith.constant 0 : i32
    %c0_i32_1 = arith.constant 0 : i32
    return %c0_i32, %c0_i32_0 : i32, i32
  }
  func.func @transform_4(%arg0: i32) -> (i32, i32) {
    %c0_i32 = arith.constant 0 : i32
    %c0_i32_0 = arith.constant 0 : i32
    %c0_i32_1 = arith.constant 0 : i32
    return %c0_i32, %c0_i32_0 : i32, i32
  }
  func.func @transform_5(%arg0: i32) -> (i32, i32) {
    %c0_i32 = arith.constant 0 : i32
    %c0_i32_0 = arith.constant 0 : i32
    %c0_i32_1 = arith.constant 0 : i32
    return %c0_i32, %c0_i32_0 : i32, i32
  }
  func.func @transform_6(%arg0: i32) -> (i32, i32) {
    %c0_i32 = arith.constant 0 : i32
    %c0_i32_0 = arith.constant 0 : i32
    %c0_i32_1 = arith.constant 0 : i32
    return %c0_i32, %c0_i32_0 : i32, i32
  }
  func.func @transform_7(%arg0: i32) -> (i32, i32) {
    %c0_i32 = arith.constant 0 : i32
    %c0_i32_0 = arith.constant 0 : i32
    %c0_i32_1 = arith.constant 0 : i32
    return %c0_i32, %c0_i32_0 : i32, i32
  }
  func.func @transform_8(%arg0: i32) -> (i32, i32) {
    %c0_i32 = arith.constant 0 : i32
    %c0_i32_0 = arith.constant 0 : i32
    return %arg0, %c0_i32 : i32, i32
  }
}

</mosaic_0001>

<llo_original>
// kernel: coronary_identification_forward.3
$region0: #{coronary_identification_forward.3}
  #allocation0 [shape = 'u32[]', space=smem, size = 0x4, offset = 0x4, fixed_abs, tag = 'smem constant byte address 0x4 - core index']
  #allocation1 [shape = 'u32[72,128]{1,0:T(1,128)}', space=vmem, size = 0x9000, scoped, tag = 'internal scratch']
  %s0 = inlined_call_operand.vmem [shape: f32[4,10,18,4], index: 0, kind: input, shape index: {}]
  %s1 = inlined_call_operand.vmem [shape: f32[3,3,4,4], index: 1, kind: input, shape index: {}]
  %s2 = inlined_call_operand.vmem [shape: f32[1,4], index: 2, kind: input, shape index: {}]
  %s3 = inlined_call_operand.vmem [shape: f32[1,4], index: 3, kind: input, shape index: {}]
  %s4 = inlined_call_operand.vmem [shape: f32[4,8,16,4], index: 4, kind: output, shape index: {0}]
  %s5 = inlined_call_operand.vmem [shape: f32[4,2,4], index: 5, kind: output, shape index: {1}]
  %6 = xla_tuple %s4, %s5
  %s7 = sld [smem:[#allocation0]]
  $region57: #{coronary_identification_forward.3} parent=0
    _
  %s9 = ssub.s32 1, %s7
  %s10 = scalar_select 0, %s9, %s7
  loop: start=0, step=1, limit=6
  $region2: #{coronary_identification_forward.3} parent=0 // loop_pre_header
    _
  $region3: #{coronary_identification_forward.3} parent=0 // loop_header
    %s12 = sphi 0, %s16
    %p13 = scmp.ge.s32.totalorder %s12, 6
    %s19 = sphi 0, %s31
    %s20 = sphi 0, %s27
    %s21 = sphi 0, %s19
    %s22 = sphi 0, %s20
    %s23 = sphi 0, %s21
    %s24 = sphi 0, %s22
    %s38 = sphi 0, %s40
    %s41 = sphi 0, %s38
    %s42 = sphi 0, %s41
    %s58 = sphi 0, %s42
    %s62 = sphi 0, %s62
    %s64 = sphi 0, %s62
    %s65 = sphi 0, %s64
    %s79 = sphi 0, %s65
    %s83 = sphi 0, %s83
    %s85 = sphi 0, %s83
    %s86 = sphi 0, %s85
    %s100 = sphi 0, %s86
    %s104 = sphi 0, %s104
    %s106 = sphi 0, %s104
    %s107 = sphi 0, %s106
    %s121 = sphi 0, %s107
    %s131 = sphi 0, %s133
    %s134 = sphi 0, %s131
    %s135 = sphi 0, %s134
    %s151 = sphi 0, %s135
    %s161 = sphi 0, %s163
    %s164 = sphi 0, %s161
    %s165 = sphi 0, %s164
    %s181 = sphi 0, %s165
  $region4: #{coronary_identification_forward.3} parent=0 // loop_header_branch
    %15 = sbr.rel (%p13) target = $region8
  $region5: #{coronary_identification_forward.3} parent=0 // loop_body
    %s17 = ssub.s32 %s12, 1
    %s18 = ssub.s32 %s12, 2
    %s25 = sadd.s32 1, %s20
    %p26 = scmp.ge.s32.totalorder %s25, 2
    %s27 = scalar_select %p26, 0, %s25
    %s28 = sadd.s32 1, %s19
    %s29 = scalar_select %p26, %s28, %s19
    %p30 = scmp.ge.s32.totalorder %s29, 2
    %s31 = scalar_select %p30, 0, %s29
    %s32 = smul.u32 %s19, 2
    %s33 = sadd.s32 %s32, %s20
    %s34 = smul.u32 %s31, 2
    %s35 = sadd.s32 %s34, %s27
    %s36 = ssub.s32 %s33, %s35
    %p37 = scmp.eq.s32.totalorder %s36, 0
    %s39 = sadd.s32 %s38, 1
    %s40 = scalar_select %p37, %s38, %s39
    %p43 = pneg %p37
    %p44 = scmp.eq.s32.totalorder %s12, 3
    %p45 = por %p43, %p44
    %p46 = scmp.ne.s32.totalorder %s38, %s41
    %p47 = scmp.eq.s32.totalorder %s12, 0
    %p48 = por %p46, %p47
    %p49 = scmp.ne.s32.totalorder %s38, %s41
    %p50 = scmp.eq.s32.totalorder %s17, 3
    %p51 = por %p49, %p50
    %p52 = scmp.ne.s32.totalorder %s41, %s42
    %p53 = scmp.eq.s32.totalorder %s17, 0
    %p54 = por %p52, %p53
    %p55 = scmp.ne.s32.totalorder %s41, %s42
    %p56 = scmp.eq.s32.totalorder %s18, 3
    %p57 = por %p55, %p56
    %p59 = scmp.ne.s32.totalorder %s42, %s58
    %p60 = scmp.eq.s32.totalorder %s18, 0
    %p61 = por %p59, %p60
    %s63 = sadd.s32 %s62, 1
    %p66 = scmp.eq.s32.totalorder %s12, 3
    %p67 = scmp.ne.s32.totalorder %s62, %s64
    %p68 = scmp.eq.s32.totalorder %s12, 0
    %p69 = por %p67, %p68
    %p70 = scmp.ne.s32.totalorder %s62, %s64
    %p71 = scmp.eq.s32.totalorder %s17, 3
    %p72 = por %p70, %p71
    %p73 = scmp.ne.s32.totalorder %s64, %s65
    %p74 = scmp.eq.s32.totalorder %s17, 0
    %p75 = por %p73, %p74
    %p76 = scmp.ne.s32.totalorder %s64, %s65
    %p77 = scmp.eq.s32.totalorder %s18, 3
    %p78 = por %p76, %p77
    %p80 = scmp.ne.s32.totalorder %s65, %s79
    %p81 = scmp.eq.s32.totalorder %s18, 0
    %p82 = por %p80, %p81
    %s84 = sadd.s32 %s83, 1
    %p87 = scmp.eq.s32.totalorder %s12, 3
    %p88 = scmp.ne.s32.totalorder %s83, %s85
    %p89 = scmp.eq.s32.totalorder %s12, 0
    %p90 = por %p88, %p89
    %p91 = scmp.ne.s32.totalorder %s83, %s85
    %p92 = scmp.eq.s32.totalorder %s17, 3
    %p93 = por %p91, %p92
    %p94 = scmp.ne.s32.totalorder %s85, %s86
    %p95 = scmp.eq.s32.totalorder %s17, 0
    %p96 = por %p94, %p95
    %p97 = scmp.ne.s32.totalorder %s85, %s86
    %p98 = scmp.eq.s32.totalorder %s18, 3
    %p99 = por %p97, %p98
    %p101 = scmp.ne.s32.totalorder %s86, %s100
    %p102 = scmp.eq.s32.totalorder %s18, 0
    %p103 = por %p101, %p102
    %s105 = sadd.s32 %s104, 1
    %p108 = scmp.eq.s32.totalorder %s12, 3
    %p109 = scmp.ne.s32.totalorder %s104, %s106
    %p110 = scmp.eq.s32.totalorder %s12, 0
    %p111 = por %p109, %p110
    %p112 = scmp.ne.s32.totalorder %s104, %s106
    %p113 = scmp.eq.s32.totalorder %s17, 3
    %p114 = por %p112, %p113
    %p115 = scmp.ne.s32.totalorder %s106, %s107
    %p116 = scmp.eq.s32.totalorder %s17, 0
    %p117 = por %p115, %p116
    %p118 = scmp.ne.s32.totalorder %s106, %s107
    %p119 = scmp.eq.s32.totalorder %s18, 3
    %p120 = por %p118, %p119
    %p122 = scmp.ne.s32.totalorder %s107, %s121
    %p123 = scmp.eq.s32.totalorder %s18, 0
    %p124 = por %p122, %p123
    %s125 = smul.u32 %s19, 2
    %s126 = sadd.s32 %s125, %s20
    %s127 = smul.u32 %s31, 2
    %s128 = sadd.s32 %s127, %s27
    %s129 = ssub.s32 %s126, %s128
    %p130 = scmp.eq.s32.totalorder %s129, 0
    %s132 = sadd.s32 %s131, 1
    %s133 = scalar_select %p130, %s131, %s132
    %p136 = pneg %p130
    %p137 = scmp.eq.s32.totalorder %s12, 3
    %p138 = por %p136, %p137
    %p139 = scmp.ne.s32.totalorder %s131, %s134
    %p140 = scmp.eq.s32.totalorder %s12, 0
    %p141 = por %p139, %p140
    %p142 = scmp.ne.s32.totalorder %s131, %s134
    %p143 = scmp.eq.s32.totalorder %s17, 3
    %p144 = por %p142, %p143
    %p145 = scmp.ne.s32.totalorder %s134, %s135
    %p146 = scmp.eq.s32.totalorder %s17, 0
    %p147 = por %p145, %p146
    %p148 = scmp.ne.s32.totalorder %s134, %s135
    %p149 = scmp.eq.s32.totalorder %s18, 3
    %p150 = por %p148, %p149
    %p152 = scmp.ne.s32.totalorder %s135, %s151
    %p153 = scmp.eq.s32.totalorder %s18, 0
    %p154 = por %p152, %p153
    %s155 = smul.u32 %s19, 2
    %s156 = sadd.s32 %s155, %s20
    %s157 = smul.u32 %s31, 2
    %s158 = sadd.s32 %s157, %s27
    %s159 = ssub.s32 %s156, %s158
    %p160 = scmp.eq.s32.totalorder %s159, 0
    %s162 = sadd.s32 %s161, 1
    %s163 = scalar_select %p160, %s161, %s162
    %p166 = pneg %p160
    %p167 = scmp.eq.s32.totalorder %s12, 3
    %p168 = por %p166, %p167
    %p169 = scmp.ne.s32.totalorder %s161, %s164
    %p170 = scmp.eq.s32.totalorder %s12, 0
    %p171 = por %p169, %p170
    %p172 = scmp.ne.s32.totalorder %s161, %s164
    %p173 = scmp.eq.s32.totalorder %s17, 3
    %p174 = por %p172, %p173
    %p175 = scmp.ne.s32.totalorder %s164, %s165
    %p176 = scmp.eq.s32.totalorder %s17, 0
    %p177 = por %p175, %p176
    %p178 = scmp.ne.s32.totalorder %s164, %s165
    %p179 = scmp.eq.s32.totalorder %s18, 3
    %p180 = por %p178, %p179
    %p182 = scmp.ne.s32.totalorder %s165, %s181
    %p183 = scmp.eq.s32.totalorder %s18, 0
    %p184 = por %p182, %p183
    %p185 = scmp.le.s32.totalorder 1, %s12
    %p186 = scmp.lt.s32.totalorder %s12, 5
    %p187 = pnand %p185, %p186
    %p188 = pneg %p187
    // Predicated region
    $region9: #{coronary_identification_forward.3} parent=5 // pred_check
      _
    $region10: #{coronary_identification_forward.3} parent=5 // pred_check_branch
      %190 = sbr.rel (%p187) target = $region12
    $region11: #{coronary_identification_forward.3} parent=5 // pred_region
      %s191 = ssub.s32 %s12, 1
      // Predicated region
      $region13: #{coronary_identification_forward.3} parent=11 // pred_check
        %p192 = pneg %p75
      $region14: #{coronary_identification_forward.3} parent=11 // pred_check_branch
        %194 = sbr.rel (%p192) target = $region16
      $region15: #{coronary_identification_forward.3} parent=11 // pred_region
        _
      $region16: #{coronary_identification_forward.3} parent=11 // pred_fallthru
        _
      // Predicated region
      $region17: #{coronary_identification_forward.3} parent=11 // pred_check
        %p195 = pneg %p96
      $region18: #{coronary_identification_forward.3} parent=11 // pred_check_branch
        %197 = sbr.rel (%p195) target = $region20
      $region19: #{coronary_identification_forward.3} parent=11 // pred_region
        _
      $region20: #{coronary_identification_forward.3} parent=11 // pred_fallthru
        _
      // Predicated region
      $region21: #{coronary_identification_forward.3} parent=11 // pred_check
        %p198 = pneg %p117
      $region22: #{coronary_identification_forward.3} parent=11 // pred_check_branch
        %200 = sbr.rel (%p198) target = $region24
      $region23: #{coronary_identification_forward.3} parent=11 // pred_region
        _
      $region24: #{coronary_identification_forward.3} parent=11 // pred_fallthru
        _
    $region12: #{coronary_identification_forward.3} parent=5 // pred_fallthru
      _
    %p201 = scmp.lt.s32.totalorder %s12, 4
    // Predicated region
    $region25: #{coronary_identification_forward.3} parent=5 // pred_check
      %p202 = pneg %p201
    $region26: #{coronary_identification_forward.3} parent=5 // pred_check_branch
      %204 = sbr.rel (%p202) target = $region28
    $region27: #{coronary_identification_forward.3} parent=5 // pred_region
      // Predicated region
      $region29: #{coronary_identification_forward.3} parent=27 // pred_check
        %p205 = pneg %p48
      $region30: #{coronary_identification_forward.3} parent=27 // pred_check_branch
        %207 = sbr.rel (%p205) target = $region32
      $region31: #{coronary_identification_forward.3} parent=27 // pred_region
        %s208 = smul.u32 %s19, 2
        %s209 = sadd.s32 %s208, %s20
        %p210 = scmp.lt.s32.totalorder %s209, 3
        %s211 = scalar_select %p210, %s209, 3
        %s212 = smul.addr %s211, 30
        %s213 = smul.addr %s212, 8
        %s214 = scalar_lea.vmem %s0, %s213
        %s215 = smul.u32 %s19, 2
        %s216 = sadd.s32 %s215, %s20
      $region32: #{coronary_identification_forward.3} parent=27 // pred_fallthru
        _
    $region28: #{coronary_identification_forward.3} parent=5 // pred_fallthru
      _
    %p217 = scmp.le.s32.totalorder 1, %s12
    %p218 = scmp.lt.s32.totalorder %s12, 5
    %p219 = pnand %p217, %p218
    %p220 = pneg %p219
    // Predicated region
    $region33: #{coronary_identification_forward.3} parent=5 // pred_check
      _
    $region34: #{coronary_identification_forward.3} parent=5 // pred_check_branch
      %222 = sbr.rel (%p219) target = $region36
    $region35: #{coronary_identification_forward.3} parent=5 // pred_region
      %s223 = ssub.s32 %s12, 1
      %s224 = smul.u32 %s21, 2
      %s225 = sadd.s32 %s224, %s22
      %p226 = scmp.lt.s32.totalorder %s225, 3
      %s227 = scalar_select %p226, %s225, 3
      %s228 = smul.addr %s227, 30
      %s229 = smul.addr %s228, 8
      %s230 = scalar_lea.vmem %s0, %s229
      %p231 = pneg %p54
      %p232 = pneg %p51
      %p233 = pneg %p75
      %p234 = pneg %p72
      %p235 = pneg %p96
      %p236 = pneg %p93
      %p237 = pneg %p117
      %p238 = pneg %p114
      %p239 = pneg %p147
      %p240 = pneg %p144
      %s241 = smul.u32 %s21, 2
      %s242 = sadd.s32 %s241, %s22
      %p243 = scmp.lt.s32.totalorder %s242, 3
      %s244 = scalar_select %p243, %s242, 3
      %s245 = smul.addr %s244, 16
      %s246 = smul.addr %s245, 8
      %s247 = scalar_lea.vmem %s4, %s246
      %p248 = pneg %p177
      %p249 = pneg %p174
      %s250 = smul.u32 %s21, 2
      %s251 = sadd.s32 %s250, %s22
      %p252 = scmp.lt.s32.totalorder %s251, 3
      %s253 = scalar_select %p252, %s251, 3
      %s254 = smul.addr %s253, 2
      %s255 = scalar_lea.vmem %s5, %s254
      %s256 = smul.u32 %s21, 2
      %s257 = sadd.s32 %s256, %s22
      %p258 = scmp.lt.s32.totalorder %s257, 3
      %s259 = scalar_select %p258, %s257, 3
      %s260 = smul.addr %s259, 30
      %s261 = smul.addr %s260, 8
      %s262 = scalar_lea.vmem %s0, %s261
      %s263 = smul.u32 %s21, 2
      %s264 = sadd.s32 %s263, %s22
      %s265 = smul.u32 %s21, 2
      %s266 = sadd.s32 %s265, %s22
      %p267 = scmp.lt.s32.totalorder %s266, 3
      %s268 = scalar_select %p267, %s266, 3
      %s269 = smul.addr %s268, 16
      %s270 = smul.addr %s269, 8
      %s271 = scalar_lea.vmem %s4, %s270
      %s272 = smul.u32 %s21, 2
      %s273 = sadd.s32 %s272, %s22
      %s274 = smul.u32 %s21, 2
      %s275 = sadd.s32 %s274, %s22
      %p276 = scmp.lt.s32.totalorder %s275, 3
      %s277 = scalar_select %p276, %s275, 3
      %s278 = smul.addr %s277, 2
      %s279 = scalar_lea.vmem %s5, %s278
      %s280 = smul.u32 %s21, 2
      %s281 = sadd.s32 %s280, %s22
      %v282 = vld [vmem:[%s262] sm:$0xff]
      %v283 = vld [vmem:[%s262 + $0x8] sm:$0xff]
      %v284 = vld [vmem:[%s262 + $0x10] sm:$0x3]
      %v285 = vld [vmem:[%s262 + $0x18] sm:$0xff]
      %v286 = vld [vmem:[%s262 + $0x20] sm:$0xff]
      %v287 = vld [vmem:[%s262 + $0x28] sm:$0x3]
      %v288 = vld [vmem:[%s262 + $0x30] sm:$0xff]
      %v289 = vld [vmem:[%s262 + $0x38] sm:$0xff]
      %v290 = vld [vmem:[%s262 + $0x40] sm:$0x3]
      %v291 = vld [vmem:[%s262 + $0x48] sm:$0xff]
      %v292 = vld [vmem:[%s262 + $0x50] sm:$0xff]
      %v293 = vld [vmem:[%s262 + $0x58] sm:$0x3]
      %v294 = vld [vmem:[%s262 + $0x60] sm:$0xff]
      %v295 = vld [vmem:[%s262 + $0x68] sm:$0xff]
      %v296 = vld [vmem:[%s262 + $0x70] sm:$0x3]
      %v297 = vld [vmem:[%s262 + $0x78] sm:$0xff]
      %v298 = vld [vmem:[%s262 + $0x80] sm:$0xff]
      %v299 = vld [vmem:[%s262 + $0x88] sm:$0x3]
      %v300 = vld [vmem:[%s262 + $0x90] sm:$0xff]
      %v301 = vld [vmem:[%s262 + $0x98] sm:$0xff]
      %v302 = vld [vmem:[%s262 + $0xa0] sm:$0x3]
      %v303 = vld [vmem:[%s262 + $0xa8] sm:$0xff]
      %v304 = vld [vmem:[%s262 + $0xb0] sm:$0xff]
      %v305 = vld [vmem:[%s262 + $0xb8] sm:$0x3]
      %v306 = vld [vmem:[%s262 + $0xc0] sm:$0xff]
      %v307 = vld [vmem:[%s262 + $0xc8] sm:$0xff]
      %v308 = vld [vmem:[%s262 + $0xd0] sm:$0x3]
      %v309 = vld [vmem:[%s262 + $0xd8] sm:$0xff]
      %v310 = vld [vmem:[%s262 + $0xe0] sm:$0xff]
      %v311 = vld [vmem:[%s262 + $0xe8] sm:$0x3]
      %v312 = vld [vmem:[%s1] sm:$0xf]
      %vm337 = vcmask 1046528
      %v338 = vrot.slane %v282, 1
      %v339 = vrot.slane %v283, 1
      %v340 = vsel %vm337, %v338, %v339
      %v341 = vrot.slane %v284, 1
      %v342 = vsel %vm337, %v339, %v341
      %v343 = vrot.slane %v285, 1
      %v344 = vrot.slane %v286, 1
      %v345 = vsel %vm337, %v343, %v344
      %v346 = vrot.slane %v287, 1
      %v347 = vsel %vm337, %v344, %v346
      %v348 = vrot.slane %v288, 1
      %v349 = vrot.slane %v289, 1
      %v350 = vsel %vm337, %v348, %v349
      %v351 = vrot.slane %v290, 1
      %v352 = vsel %vm337, %v349, %v351
      %v353 = vrot.slane %v291, 1
      %v354 = vrot.slane %v292, 1
      %v355 = vsel %vm337, %v353, %v354
      %v356 = vrot.slane %v293, 1
      %v357 = vsel %vm337, %v354, %v356
      %v358 = vrot.slane %v294, 1
      %v359 = vrot.slane %v295, 1
      %v360 = vsel %vm337, %v358, %v359
      %v361 = vrot.slane %v296, 1
      %v362 = vsel %vm337, %v359, %v361
      %v363 = vrot.slane %v297, 1
      %v364 = vrot.slane %v298, 1
      %v365 = vsel %vm337, %v363, %v364
      %v366 = vrot.slane %v299, 1
      %v367 = vsel %vm337, %v364, %v366
      %v368 = vrot.slane %v300, 1
      %v369 = vrot.slane %v301, 1
      %v370 = vsel %vm337, %v368, %v369
      %v371 = vrot.slane %v302, 1
      %v372 = vsel %vm337, %v369, %v371
      %v373 = vrot.slane %v303, 1
      %v374 = vrot.slane %v304, 1
      %v375 = vsel %vm337, %v373, %v374
      %v376 = vrot.slane %v305, 1
      %v377 = vsel %vm337, %v374, %v376
      %s378 = scalar_lea.vmem %s1, 4
      %v379 = vld [vmem:[%s378] sm:$0xf]
      %vm380 = vcmask 31744
      %v381 = vsel %vm380, %v340, 0
      %v383 = vsel %vm380, %v342, 0
      %v385 = vsel %vm380, %v345, 0
      %v387 = vsel %vm380, %v347, 0
      %v389 = vsel %vm380, %v350, 0
      %v391 = vsel %vm380, %v352, 0
      %v393 = vsel %vm380, %v355, 0
      %v395 = vsel %vm380, %v357, 0
      %v397 = vsel %vm380, %v360, 0
      %v399 = vsel %vm380, %v362, 0
      %v401 = vsel %vm380, %v365, 0
      %v403 = vsel %vm380, %v367, 0
      %v405 = vsel %vm380, %v370, 0
      %v407 = vsel %vm380, %v372, 0
      %v409 = vsel %vm380, %v375, 0
      %v411 = vsel %vm380, %v377, 0
      %vm413 = vcmask 1043456
      %v415 = vsel %vm413, %v379, 0
      %417 = vmatpush.msra.mxu0 0.0
      %418 = vmatpush.msra.mxu0 0.0
      %419 = vmatpush.msra.mxu0 0.0
      %420 = vmatpush.msra.mxu0 0.0
      %421 = vmatpush.msra.mxu0 0.0
      %422 = vmatpush.msra.mxu0 0.0
      %423 = vmatpush.msra.mxu0 0.0
      %424 = vmatpush.msra.mxu0 0.0
      %425 = vmatpush.msra.mxu0 0.0
      %426 = vmatpush.msra.mxu0 0.0
      %427 = vmatpush.msra.mxu0 0.0
      %428 = vmatpush.msra.mxu0 0.0
      %429 = vmatpush.msra.mxu0 0.0
      %430 = vmatpush.msra.mxu0 0.0
      %431 = vmatpush.msra.mxu0 0.0
      %432 = vmatpush.msra.mxu0 %v415
      %433 = vmatmul.f32.gmra.mxu0 %v381
      %v434 = vpop.f32.mrf.mxu0
      %v435 = vadd.f32 0.0, %v434
      %436 = vmatmul.f32.gmra.mxu0 %v383
      %v437 = vpop.f32.mrf.mxu0
      %v438 = vadd.f32 0.0, %v437
      %439 = vmatmul.f32.gmra.mxu0 %v385
      %v440 = vpop.f32.mrf.mxu0
      %v441 = vadd.f32 0.0, %v440
      %442 = vmatmul.f32.gmra.mxu0 %v387
      %v443 = vpop.f32.mrf.mxu0
      %v444 = vadd.f32 0.0, %v443
      %445 = vmatmul.f32.gmra.mxu0 %v389
      %v446 = vpop.f32.mrf.mxu0
      %v447 = vadd.f32 0.0, %v446
      %448 = vmatmul.f32.gmra.mxu0 %v391
      %v449 = vpop.f32.mrf.mxu0
      %v450 = vadd.f32 0.0, %v449
      %451 = vmatmul.f32.gmra.mxu0 %v393
      %v452 = vpop.f32.mrf.mxu0
      %v453 = vadd.f32 0.0, %v452
      %454 = vmatmul.f32.gmra.mxu0 %v395
      %v455 = vpop.f32.mrf.mxu0
      %v456 = vadd.f32 0.0, %v455
      %457 = vmatmul.f32.gmra.mxu0 %v397
      %v458 = vpop.f32.mrf.mxu0
      %v459 = vadd.f32 0.0, %v458
      %460 = vmatmul.f32.gmra.mxu0 %v399
      %v461 = vpop.f32.mrf.mxu0
      %v462 = vadd.f32 0.0, %v461
      %463 = vmatmul.f32.gmra.mxu0 %v401
      %v464 = vpop.f32.mrf.mxu0
      %v465 = vadd.f32 0.0, %v464
      %466 = vmatmul.f32.gmra.mxu0 %v403
      %v467 = vpop.f32.mrf.mxu0
      %v468 = vadd.f32 0.0, %v467
      %469 = vmatmul.f32.gmra.mxu0 %v405
      %v470 = vpop.f32.mrf.mxu0
      %v471 = vadd.f32 0.0, %v470
      %472 = vmatmul.f32.gmra.mxu0 %v407
      %v473 = vpop.f32.mrf.mxu0
      %v474 = vadd.f32 0.0, %v473
      %475 = vmatmul.f32.gmra.mxu0 %v409
      %v476 = vpop.f32.mrf.mxu0
      %v477 = vadd.f32 0.0, %v476
      %478 = vmatmul.f32.gmra.mxu0 %v411
      %v479 = vpop.f32.mrf.mxu0
      %v480 = vadd.f32 0.0, %v479
      %481 = vdwg.mxu0
      %v482 = vsel %vm380, %v282, 0
      %v484 = vsel %vm380, %v283, 0
      %v486 = vsel %vm380, %v285, 0
      %v488 = vsel %vm380, %v286, 0
      %v490 = vsel %vm380, %v288, 0
      %v492 = vsel %vm380, %v289, 0
      %v494 = vsel %vm380, %v291, 0
      %v496 = vsel %vm380, %v292, 0
      %v498 = vsel %vm380, %v294, 0
      %v500 = vsel %vm380, %v295, 0
      %v502 = vsel %vm380, %v297, 0
      %v504 = vsel %vm380, %v298, 0
      %v506 = vsel %vm380, %v300, 0
      %v508 = vsel %vm380, %v301, 0
      %v510 = vsel %vm380, %v303, 0
      %v512 = vsel %vm380, %v304, 0
      %v515 = vsel %vm413, %v312, 0
      %517 = vmatpush.msra.mxu0 0.0
      %518 = vmatpush.msra.mxu0 0.0
      %519 = vmatpush.msra.mxu0 0.0
      %520 = vmatpush.msra.mxu0 0.0
      %521 = vmatpush.msra.mxu0 0.0
      %522 = vmatpush.msra.mxu0 0.0
      %523 = vmatpush.msra.mxu0 0.0
      %524 = vmatpush.msra.mxu0 0.0
      %525 = vmatpush.msra.mxu0 0.0
      %526 = vmatpush.msra.mxu0 0.0
      %527 = vmatpush.msra.mxu0 0.0
      %528 = vmatpush.msra.mxu0 0.0
      %529 = vmatpush.msra.mxu0 0.0
      %530 = vmatpush.msra.mxu0 0.0
      %531 = vmatpush.msra.mxu0 0.0
      %532 = vmatpush.msra.mxu0 %v515
      %533 = vmatmul.f32.gmra.mxu0 %v482
      %v534 = vpop.f32.mrf.mxu0
      %v535 = vadd.f32 %v435, %v534
      %536 = vmatmul.f32.gmra.mxu0 %v484
      %v537 = vpop.f32.mrf.mxu0
      %v538 = vadd.f32 %v438, %v537
      %539 = vmatmul.f32.gmra.mxu0 %v486
      %v540 = vpop.f32.mrf.mxu0
      %v541 = vadd.f32 %v441, %v540
      %542 = vmatmul.f32.gmra.mxu0 %v488
      %v543 = vpop.f32.mrf.mxu0
      %v544 = vadd.f32 %v444, %v543
      %545 = vmatmul.f32.gmra.mxu0 %v490
      %v546 = vpop.f32.mrf.mxu0
      %v547 = vadd.f32 %v447, %v546
      %548 = vmatmul.f32.gmra.mxu0 %v492
      %v549 = vpop.f32.mrf.mxu0
      %v550 = vadd.f32 %v450, %v549
      %551 = vmatmul.f32.gmra.mxu0 %v494
      %v552 = vpop.f32.mrf.mxu0
      %v553 = vadd.f32 %v453, %v552
      %554 = vmatmul.f32.gmra.mxu0 %v496
      %v555 = vpop.f32.mrf.mxu0
      %v556 = vadd.f32 %v456, %v555
      %557 = vmatmul.f32.gmra.mxu0 %v498
      %v558 = vpop.f32.mrf.mxu0
      %v559 = vadd.f32 %v459, %v558
      %560 = vmatmul.f32.gmra.mxu0 %v500
      %v561 = vpop.f32.mrf.mxu0
      %v562 = vadd.f32 %v462, %v561
      %563 = vmatmul.f32.gmra.mxu0 %v502
      %v564 = vpop.f32.mrf.mxu0
      %v565 = vadd.f32 %v465, %v564
      %566 = vmatmul.f32.gmra.mxu0 %v504
      %v567 = vpop.f32.mrf.mxu0
      %v568 = vadd.f32 %v468, %v567
      %569 = vmatmul.f32.gmra.mxu0 %v506
      %v570 = vpop.f32.mrf.mxu0
      %v571 = vadd.f32 %v471, %v570
      %572 = vmatmul.f32.gmra.mxu0 %v508
      %v573 = vpop.f32.mrf.mxu0
      %v574 = vadd.f32 %v474, %v573
      %575 = vmatmul.f32.gmra.mxu0 %v510
      %v576 = vpop.f32.mrf.mxu0
      %v577 = vadd.f32 %v477, %v576
      %578 = vmatmul.f32.gmra.mxu0 %v512
      %v579 = vpop.f32.mrf.mxu0
      %v580 = vadd.f32 %v480, %v579
      %581 = vdwg.mxu0
      %vm582 = vcmask 1045504
      %v583 = vrot.slane %v282, 2
      %v584 = vrot.slane %v283, 2
      %v585 = vsel %vm582, %v583, %v584
      %v586 = vrot.slane %v284, 2
      %v587 = vsel %vm582, %v584, %v586
      %v588 = vrot.slane %v285, 2
      %v589 = vrot.slane %v286, 2
      %v590 = vsel %vm582, %v588, %v589
      %v591 = vrot.slane %v287, 2
      %v592 = vsel %vm582, %v589, %v591
      %v593 = vrot.slane %v288, 2
      %v594 = vrot.slane %v289, 2
      %v595 = vsel %vm582, %v593, %v594
      %v596 = vrot.slane %v290, 2
      %v597 = vsel %vm582, %v594, %v596
      %v598 = vrot.slane %v291, 2
      %v599 = vrot.slane %v292, 2
      %v600 = vsel %vm582, %v598, %v599
      %v601 = vrot.slane %v293, 2
      %v602 = vsel %vm582, %v599, %v601
      %v603 = vrot.slane %v294, 2
      %v604 = vrot.slane %v295, 2
      %v605 = vsel %vm582, %v603, %v604
      %v606 = vrot.slane %v296, 2
      %v607 = vsel %vm582, %v604, %v606
      %v608 = vrot.slane %v297, 2
      %v609 = vrot.slane %v298, 2
      %v610 = vsel %vm582, %v608, %v609
      %v611 = vrot.slane %v299, 2
      %v612 = vsel %vm582, %v609, %v611
      %v613 = vrot.slane %v300, 2
      %v614 = vrot.slane %v301, 2
      %v615 = vsel %vm582, %v613, %v614
      %v616 = vrot.slane %v302, 2
      %v617 = vsel %vm582, %v614, %v616
      %v618 = vrot.slane %v303, 2
      %v619 = vrot.slane %v304, 2
      %v620 = vsel %vm582, %v618, %v619
      %v621 = vrot.slane %v305, 2
      %v622 = vsel %vm582, %v619, %v621
      %s623 = scalar_lea.vmem %s1, 8
      %v624 = vld [vmem:[%s623] sm:$0xf]
      %v625 = vsel %vm380, %v585, 0
      %v627 = vsel %vm380, %v587, 0
      %v629 = vsel %vm380, %v590, 0
      %v631 = vsel %vm380, %v592, 0
      %v633 = vsel %vm380, %v595, 0
      %v635 = vsel %vm380, %v597, 0
      %v637 = vsel %vm380, %v600, 0
      %v639 = vsel %vm380, %v602, 0
      %v641 = vsel %vm380, %v605, 0
      %v643 = vsel %vm380, %v607, 0
      %v645 = vsel %vm380, %v610, 0
      %v647 = vsel %vm380, %v612, 0
      %v649 = vsel %vm380, %v615, 0
      %v651 = vsel %vm380, %v617, 0
      %v653 = vsel %vm380, %v620, 0
      %v655 = vsel %vm380, %v622, 0
      %v658 = vsel %vm413, %v624, 0
      %660 = vmatpush.msra.mxu0 0.0
      %661 = vmatpush.msra.mxu0 0.0
      %662 = vmatpush.msra.mxu0 0.0
      %663 = vmatpush.msra.mxu0 0.0
      %664 = vmatpush.msra.mxu0 0.0
      %665 = vmatpush.msra.mxu0 0.0
      %666 = vmatpush.msra.mxu0 0.0
      %667 = vmatpush.msra.mxu0 0.0
      %668 = vmatpush.msra.mxu0 0.0
      %669 = vmatpush.msra.mxu0 0.0
      %670 = vmatpush.msra.mxu0 0.0
      %671 = vmatpush.msra.mxu0 0.0
      %672 = vmatpush.msra.mxu0 0.0
      %673 = vmatpush.msra.mxu0 0.0
      %674 = vmatpush.msra.mxu0 0.0
      %675 = vmatpush.msra.mxu0 %v658
      %676 = vmatmul.f32.gmra.mxu0 %v625
      %v677 = vpop.f32.mrf.mxu0
      %v678 = vadd.f32 0.0, %v677
      %679 = vmatmul.f32.gmra.mxu0 %v627
      %v680 = vpop.f32.mrf.mxu0
      %v681 = vadd.f32 0.0, %v680
      %682 = vmatmul.f32.gmra.mxu0 %v629
      %v683 = vpop.f32.mrf.mxu0
      %v684 = vadd.f32 0.0, %v683
      %685 = vmatmul.f32.gmra.mxu0 %v631
      %v686 = vpop.f32.mrf.mxu0
      %v687 = vadd.f32 0.0, %v686
      %688 = vmatmul.f32.gmra.mxu0 %v633
      %v689 = vpop.f32.mrf.mxu0
      %v690 = vadd.f32 0.0, %v689
      %691 = vmatmul.f32.gmra.mxu0 %v635
      %v692 = vpop.f32.mrf.mxu0
      %v693 = vadd.f32 0.0, %v692
      %694 = vmatmul.f32.gmra.mxu0 %v637
      %v695 = vpop.f32.mrf.mxu0
      %v696 = vadd.f32 0.0, %v695
      %697 = vmatmul.f32.gmra.mxu0 %v639
      %v698 = vpop.f32.mrf.mxu0
      %v699 = vadd.f32 0.0, %v698
      %700 = vmatmul.f32.gmra.mxu0 %v641
      %v701 = vpop.f32.mrf.mxu0
      %v702 = vadd.f32 0.0, %v701
      %703 = vmatmul.f32.gmra.mxu0 %v643
      %v704 = vpop.f32.mrf.mxu0
      %v705 = vadd.f32 0.0, %v704
      %706 = vmatmul.f32.gmra.mxu0 %v645
      %v707 = vpop.f32.mrf.mxu0
      %v708 = vadd.f32 0.0, %v707
      %709 = vmatmul.f32.gmra.mxu0 %v647
      %v710 = vpop.f32.mrf.mxu0
      %v711 = vadd.f32 0.0, %v710
      %712 = vmatmul.f32.gmra.mxu0 %v649
      %v713 = vpop.f32.mrf.mxu0
      %v714 = vadd.f32 0.0, %v713
      %715 = vmatmul.f32.gmra.mxu0 %v651
      %v716 = vpop.f32.mrf.mxu0
      %v717 = vadd.f32 0.0, %v716
      %718 = vmatmul.f32.gmra.mxu0 %v653
      %v719 = vpop.f32.mrf.mxu0
      %v720 = vadd.f32 0.0, %v719
      %721 = vmatmul.f32.gmra.mxu0 %v655
      %v722 = vpop.f32.mrf.mxu0
      %v723 = vadd.f32 0.0, %v722
      %724 = vdwg.mxu0
      %v725 = vadd.f32 %v535, %v678
      %v726 = vadd.f32 %v538, %v681
      %v727 = vadd.f32 %v541, %v684
      %v728 = vadd.f32 %v544, %v687
      %v729 = vadd.f32 %v547, %v690
      %v730 = vadd.f32 %v550, %v693
      %v731 = vadd.f32 %v553, %v696
      %v732 = vadd.f32 %v556, %v699
      %v733 = vadd.f32 %v559, %v702
      %v734 = vadd.f32 %v562, %v705
      %v735 = vadd.f32 %v565, %v708
      %v736 = vadd.f32 %v568, %v711
      %v737 = vadd.f32 %v571, %v714
      %v738 = vadd.f32 %v574, %v717
      %v739 = vadd.f32 %v577, %v720
      %v740 = vadd.f32 %v580, %v723
      %s741 = scalar_lea.vmem %s1, 12
      %v742 = vld [vmem:[%s741] sm:$0xf]
      %v744 = vsel %vm380, %v306, 0
      %v747 = vsel %vm380, %v307, 0
      %v750 = vsel %vm413, %v742, 0
      %752 = vmatpush.msra.mxu0 0.0
      %753 = vmatpush.msra.mxu0 0.0
      %754 = vmatpush.msra.mxu0 0.0
      %755 = vmatpush.msra.mxu0 0.0
      %756 = vmatpush.msra.mxu0 0.0
      %757 = vmatpush.msra.mxu0 0.0
      %758 = vmatpush.msra.mxu0 0.0
      %759 = vmatpush.msra.mxu0 0.0
      %760 = vmatpush.msra.mxu0 0.0
      %761 = vmatpush.msra.mxu0 0.0
      %762 = vmatpush.msra.mxu0 0.0
      %763 = vmatpush.msra.mxu0 0.0
      %764 = vmatpush.msra.mxu0 0.0
      %765 = vmatpush.msra.mxu0 0.0
      %766 = vmatpush.msra.mxu0 0.0
      %767 = vmatpush.msra.mxu0 %v750
      %768 = vmatmul.f32.gmra.mxu0 %v486
      %v769 = vpop.f32.mrf.mxu0
      %v770 = vadd.f32 0.0, %v769
      %771 = vmatmul.f32.gmra.mxu0 %v488
      %v772 = vpop.f32.mrf.mxu0
      %v773 = vadd.f32 0.0, %v772
      %774 = vmatmul.f32.gmra.mxu0 %v490
      %v775 = vpop.f32.mrf.mxu0
      %v776 = vadd.f32 0.0, %v775
      %777 = vmatmul.f32.gmra.mxu0 %v492
      %v778 = vpop.f32.mrf.mxu0
      %v779 = vadd.f32 0.0, %v778
      %780 = vmatmul.f32.gmra.mxu0 %v494
      %v781 = vpop.f32.mrf.mxu0
      %v782 = vadd.f32 0.0, %v781
      %783 = vmatmul.f32.gmra.mxu0 %v496
      %v784 = vpop.f32.mrf.mxu0
      %v785 = vadd.f32 0.0, %v784
      %786 = vmatmul.f32.gmra.mxu0 %v498
      %v787 = vpop.f32.mrf.mxu0
      %v788 = vadd.f32 0.0, %v787
      %789 = vmatmul.f32.gmra.mxu0 %v500
      %v790 = vpop.f32.mrf.mxu0
      %v791 = vadd.f32 0.0, %v790
      %792 = vmatmul.f32.gmra.mxu0 %v502
      %v793 = vpop.f32.mrf.mxu0
      %v794 = vadd.f32 0.0, %v793
      %795 = vmatmul.f32.gmra.mxu0 %v504
      %v796 = vpop.f32.mrf.mxu0
      %v797 = vadd.f32 0.0, %v796
      %798 = vmatmul.f32.gmra.mxu0 %v506
      %v799 = vpop.f32.mrf.mxu0
      %v800 = vadd.f32 0.0, %v799
      %801 = vmatmul.f32.gmra.mxu0 %v508
      %v802 = vpop.f32.mrf.mxu0
      %v803 = vadd.f32 0.0, %v802
      %804 = vmatmul.f32.gmra.mxu0 %v510
      %v805 = vpop.f32.mrf.mxu0
      %v806 = vadd.f32 0.0, %v805
      %807 = vmatmul.f32.gmra.mxu0 %v512
      %v808 = vpop.f32.mrf.mxu0
      %v809 = vadd.f32 0.0, %v808
      %810 = vmatmul.f32.gmra.mxu0 %v744
      %v811 = vpop.f32.mrf.mxu0
      %v812 = vadd.f32 0.0, %v811
      %813 = vmatmul.f32.gmra.mxu0 %v747
      %v814 = vpop.f32.mrf.mxu0
      %v815 = vadd.f32 0.0, %v814
      %816 = vdwg.mxu0
      %v817 = vadd.f32 %v725, %v770
      %v818 = vadd.f32 %v726, %v773
      %v819 = vadd.f32 %v727, %v776
      %v820 = vadd.f32 %v728, %v779
      %v821 = vadd.f32 %v729, %v782
      %v822 = vadd.f32 %v730, %v785
      %v823 = vadd.f32 %v731, %v788
      %v824 = vadd.f32 %v732, %v791
      %v825 = vadd.f32 %v733, %v794
      %v826 = vadd.f32 %v734, %v797
      %v827 = vadd.f32 %v735, %v800
      %v828 = vadd.f32 %v736, %v803
      %v829 = vadd.f32 %v737, %v806
      %v830 = vadd.f32 %v738, %v809
      %v831 = vadd.f32 %v739, %v812
      %v832 = vadd.f32 %v740, %v815
      %v834 = vrot.slane %v306, 1
      %v835 = vrot.slane %v307, 1
      %v836 = vsel %vm337, %v834, %v835
      %v837 = vrot.slane %v308, 1
      %v838 = vsel %vm337, %v835, %v837
      %s839 = scalar_lea.vmem %s1, 16
      %v840 = vld [vmem:[%s839] sm:$0xf]
      %v841 = vsel %vm380, %v836, 0
      %v843 = vsel %vm380, %v838, 0
      %v846 = vsel %vm413, %v840, 0
      %848 = vmatpush.msra.mxu0 0.0
      %849 = vmatpush.msra.mxu0 0.0
      %850 = vmatpush.msra.mxu0 0.0
      %851 = vmatpush.msra.mxu0 0.0
      %852 = vmatpush.msra.mxu0 0.0
      %853 = vmatpush.msra.mxu0 0.0
      %854 = vmatpush.msra.mxu0 0.0
      %855 = vmatpush.msra.mxu0 0.0
      %856 = vmatpush.msra.mxu0 0.0
      %857 = vmatpush.msra.mxu0 0.0
      %858 = vmatpush.msra.mxu0 0.0
      %859 = vmatpush.msra.mxu0 0.0
      %860 = vmatpush.msra.mxu0 0.0
      %861 = vmatpush.msra.mxu0 0.0
      %862 = vmatpush.msra.mxu0 0.0
      %863 = vmatpush.msra.mxu0 %v846
      %864 = vmatmul.f32.gmra.mxu0 %v385
      %v865 = vpop.f32.mrf.mxu0
      %v866 = vadd.f32 0.0, %v865
      %867 = vmatmul.f32.gmra.mxu0 %v387
      %v868 = vpop.f32.mrf.mxu0
      %v869 = vadd.f32 0.0, %v868
      %870 = vmatmul.f32.gmra.mxu0 %v389
      %v871 = vpop.f32.mrf.mxu0
      %v872 = vadd.f32 0.0, %v871
      %873 = vmatmul.f32.gmra.mxu0 %v391
      %v874 = vpop.f32.mrf.mxu0
      %v875 = vadd.f32 0.0, %v874
      %876 = vmatmul.f32.gmra.mxu0 %v393
      %v877 = vpop.f32.mrf.mxu0
      %v878 = vadd.f32 0.0, %v877
      %879 = vmatmul.f32.gmra.mxu0 %v395
      %v880 = vpop.f32.mrf.mxu0
      %v881 = vadd.f32 0.0, %v880
      %882 = vmatmul.f32.gmra.mxu0 %v397
      %v883 = vpop.f32.mrf.mxu0
      %v884 = vadd.f32 0.0, %v883
      %885 = vmatmul.f32.gmra.mxu0 %v399
      %v886 = vpop.f32.mrf.mxu0
      %v887 = vadd.f32 0.0, %v886
      %888 = vmatmul.f32.gmra.mxu0 %v401
      %v889 = vpop.f32.mrf.mxu0
      %v890 = vadd.f32 0.0, %v889
      %891 = vmatmul.f32.gmra.mxu0 %v403
      %v892 = vpop.f32.mrf.mxu0
      %v893 = vadd.f32 0.0, %v892
      %894 = vmatmul.f32.gmra.mxu0 %v405
      %v895 = vpop.f32.mrf.mxu0
      %v896 = vadd.f32 0.0, %v895
      %897 = vmatmul.f32.gmra.mxu0 %v407
      %v898 = vpop.f32.mrf.mxu0
      %v899 = vadd.f32 0.0, %v898
      %900 = vmatmul.f32.gmra.mxu0 %v409
      %v901 = vpop.f32.mrf.mxu0
      %v902 = vadd.f32 0.0, %v901
      %903 = vmatmul.f32.gmra.mxu0 %v411
      %v904 = vpop.f32.mrf.mxu0
      %v905 = vadd.f32 0.0, %v904
      %906 = vmatmul.f32.gmra.mxu0 %v841
      %v907 = vpop.f32.mrf.mxu0
      %v908 = vadd.f32 0.0, %v907
      %909 = vmatmul.f32.gmra.mxu0 %v843
      %v910 = vpop.f32.mrf.mxu0
      %v911 = vadd.f32 0.0, %v910
      %912 = vdwg.mxu0
      %v913 = vadd.f32 %v817, %v866
      %v914 = vadd.f32 %v818, %v869
      %v915 = vadd.f32 %v819, %v872
      %v916 = vadd.f32 %v820, %v875
      %v917 = vadd.f32 %v821, %v878
      %v918 = vadd.f32 %v822, %v881
      %v919 = vadd.f32 %v823, %v884
      %v920 = vadd.f32 %v824, %v887
      %v921 = vadd.f32 %v825, %v890
      %v922 = vadd.f32 %v826, %v893
      %v923 = vadd.f32 %v827, %v896
      %v924 = vadd.f32 %v828, %v899
      %v925 = vadd.f32 %v829, %v902
      %v926 = vadd.f32 %v830, %v905
      %v927 = vadd.f32 %v831, %v908
      %v928 = vadd.f32 %v832, %v911
      %v929 = vrot.slane %v306, 2
      %v930 = vrot.slane %v307, 2
      %v931 = vsel %vm582, %v929, %v930
      %v932 = vrot.slane %v308, 2
      %v933 = vsel %vm582, %v930, %v932
      %s934 = scalar_lea.vmem %s1, 20
      %v935 = vld [vmem:[%s934] sm:$0xf]
      %v936 = vsel %vm380, %v931, 0
      %v938 = vsel %vm380, %v933, 0
      %v941 = vsel %vm413, %v935, 0
      %943 = vmatpush.msra.mxu0 0.0
      %944 = vmatpush.msra.mxu0 0.0
      %945 = vmatpush.msra.mxu0 0.0
      %946 = vmatpush.msra.mxu0 0.0
      %947 = vmatpush.msra.mxu0 0.0
      %948 = vmatpush.msra.mxu0 0.0
      %949 = vmatpush.msra.mxu0 0.0
      %950 = vmatpush.msra.mxu0 0.0
      %951 = vmatpush.msra.mxu0 0.0
      %952 = vmatpush.msra.mxu0 0.0
      %953 = vmatpush.msra.mxu0 0.0
      %954 = vmatpush.msra.mxu0 0.0
      %955 = vmatpush.msra.mxu0 0.0
      %956 = vmatpush.msra.mxu0 0.0
      %957 = vmatpush.msra.mxu0 0.0
      %958 = vmatpush.msra.mxu0 %v941
      %959 = vmatmul.f32.gmra.mxu0 %v629
      %v960 = vpop.f32.mrf.mxu0
      %v961 = vadd.f32 0.0, %v960
      %962 = vmatmul.f32.gmra.mxu0 %v631
      %v963 = vpop.f32.mrf.mxu0
      %v964 = vadd.f32 0.0, %v963
      %965 = vmatmul.f32.gmra.mxu0 %v633
      %v966 = vpop.f32.mrf.mxu0
      %v967 = vadd.f32 0.0, %v966
      %968 = vmatmul.f32.gmra.mxu0 %v635
      %v969 = vpop.f32.mrf.mxu0
      %v970 = vadd.f32 0.0, %v969
      %971 = vmatmul.f32.gmra.mxu0 %v637
      %v972 = vpop.f32.mrf.mxu0
      %v973 = vadd.f32 0.0, %v972
      %974 = vmatmul.f32.gmra.mxu0 %v639
      %v975 = vpop.f32.mrf.mxu0
      %v976 = vadd.f32 0.0, %v975
      %977 = vmatmul.f32.gmra.mxu0 %v641
      %v978 = vpop.f32.mrf.mxu0
      %v979 = vadd.f32 0.0, %v978
      %980 = vmatmul.f32.gmra.mxu0 %v643
      %v981 = vpop.f32.mrf.mxu0
      %v982 = vadd.f32 0.0, %v981
      %983 = vmatmul.f32.gmra.mxu0 %v645
      %v984 = vpop.f32.mrf.mxu0
      %v985 = vadd.f32 0.0, %v984
      %986 = vmatmul.f32.gmra.mxu0 %v647
      %v987 = vpop.f32.mrf.mxu0
      %v988 = vadd.f32 0.0, %v987
      %989 = vmatmul.f32.gmra.mxu0 %v649
      %v990 = vpop.f32.mrf.mxu0
      %v991 = vadd.f32 0.0, %v990
      %992 = vmatmul.f32.gmra.mxu0 %v651
      %v993 = vpop.f32.mrf.mxu0
      %v994 = vadd.f32 0.0, %v993
      %995 = vmatmul.f32.gmra.mxu0 %v653
      %v996 = vpop.f32.mrf.mxu0
      %v997 = vadd.f32 0.0, %v996
      %998 = vmatmul.f32.gmra.mxu0 %v655
      %v999 = vpop.f32.mrf.mxu0
      %v1000 = vadd.f32 0.0, %v999
      %1001 = vmatmul.f32.gmra.mxu0 %v936
      %v1002 = vpop.f32.mrf.mxu0
      %v1003 = vadd.f32 0.0, %v1002
      %1004 = vmatmul.f32.gmra.mxu0 %v938
      %v1005 = vpop.f32.mrf.mxu0
      %v1006 = vadd.f32 0.0, %v1005
      %1007 = vdwg.mxu0
      %v1008 = vadd.f32 %v913, %v961
      %v1009 = vadd.f32 %v914, %v964
      %v1010 = vadd.f32 %v915, %v967
      %v1011 = vadd.f32 %v916, %v970
      %v1012 = vadd.f32 %v917, %v973
      %v1013 = vadd.f32 %v918, %v976
      %v1014 = vadd.f32 %v919, %v979
      %v1015 = vadd.f32 %v920, %v982
      %v1016 = vadd.f32 %v921, %v985
      %v1017 = vadd.f32 %v922, %v988
      %v1018 = vadd.f32 %v923, %v991
      %v1019 = vadd.f32 %v924, %v994
      %v1020 = vadd.f32 %v925, %v997
      %v1021 = vadd.f32 %v926, %v1000
      %v1022 = vadd.f32 %v927, %v1003
      %v1023 = vadd.f32 %v928, %v1006
      %s1024 = scalar_lea.vmem %s1, 24
      %v1025 = vld [vmem:[%s1024] sm:$0xf]
      %v1027 = vsel %vm380, %v309, 0
      %v1030 = vsel %vm380, %v310, 0
      %v1033 = vsel %vm413, %v1025, 0
      %1035 = vmatpush.msra.mxu0 0.0
      %1036 = vmatpush.msra.mxu0 0.0
      %1037 = vmatpush.msra.mxu0 0.0
      %1038 = vmatpush.msra.mxu0 0.0
      %1039 = vmatpush.msra.mxu0 0.0
      %1040 = vmatpush.msra.mxu0 0.0
      %1041 = vmatpush.msra.mxu0 0.0
      %1042 = vmatpush.msra.mxu0 0.0
      %1043 = vmatpush.msra.mxu0 0.0
      %1044 = vmatpush.msra.mxu0 0.0
      %1045 = vmatpush.msra.mxu0 0.0
      %1046 = vmatpush.msra.mxu0 0.0
      %1047 = vmatpush.msra.mxu0 0.0
      %1048 = vmatpush.msra.mxu0 0.0
      %1049 = vmatpush.msra.mxu0 0.0
      %1050 = vmatpush.msra.mxu0 %v1033
      %1051 = vmatmul.f32.gmra.mxu0 %v490
      %v1052 = vpop.f32.mrf.mxu0
      %v1053 = vadd.f32 0.0, %v1052
      %1054 = vmatmul.f32.gmra.mxu0 %v492
      %v1055 = vpop.f32.mrf.mxu0
      %v1056 = vadd.f32 0.0, %v1055
      %1057 = vmatmul.f32.gmra.mxu0 %v494
      %v1058 = vpop.f32.mrf.mxu0
      %v1059 = vadd.f32 0.0, %v1058
      %1060 = vmatmul.f32.gmra.mxu0 %v496
      %v1061 = vpop.f32.mrf.mxu0
      %v1062 = vadd.f32 0.0, %v1061
      %1063 = vmatmul.f32.gmra.mxu0 %v498
      %v1064 = vpop.f32.mrf.mxu0
      %v1065 = vadd.f32 0.0, %v1064
      %1066 = vmatmul.f32.gmra.mxu0 %v500
      %v1067 = vpop.f32.mrf.mxu0
      %v1068 = vadd.f32 0.0, %v1067
      %1069 = vmatmul.f32.gmra.mxu0 %v502
      %v1070 = vpop.f32.mrf.mxu0
      %v1071 = vadd.f32 0.0, %v1070
      %1072 = vmatmul.f32.gmra.mxu0 %v504
      %v1073 = vpop.f32.mrf.mxu0
      %v1074 = vadd.f32 0.0, %v1073
      %1075 = vmatmul.f32.gmra.mxu0 %v506
      %v1076 = vpop.f32.mrf.mxu0
      %v1077 = vadd.f32 0.0, %v1076
      %1078 = vmatmul.f32.gmra.mxu0 %v508
      %v1079 = vpop.f32.mrf.mxu0
      %v1080 = vadd.f32 0.0, %v1079
      %1081 = vmatmul.f32.gmra.mxu0 %v510
      %v1082 = vpop.f32.mrf.mxu0
      %v1083 = vadd.f32 0.0, %v1082
      %1084 = vmatmul.f32.gmra.mxu0 %v512
      %v1085 = vpop.f32.mrf.mxu0
      %v1086 = vadd.f32 0.0, %v1085
      %1087 = vmatmul.f32.gmra.mxu0 %v744
      %v1088 = vpop.f32.mrf.mxu0
      %v1089 = vadd.f32 0.0, %v1088
      %1090 = vmatmul.f32.gmra.mxu0 %v747
      %v1091 = vpop.f32.mrf.mxu0
      %v1092 = vadd.f32 0.0, %v1091
      %1093 = vmatmul.f32.gmra.mxu0 %v1027
      %v1094 = vpop.f32.mrf.mxu0
      %v1095 = vadd.f32 0.0, %v1094
      %1096 = vmatmul.f32.gmra.mxu0 %v1030
      %v1097 = vpop.f32.mrf.mxu0
      %v1098 = vadd.f32 0.0, %v1097
      %1099 = vdwg.mxu0
      %v1100 = vadd.f32 %v1008, %v1053
      %v1101 = vadd.f32 %v1009, %v1056
      %v1102 = vadd.f32 %v1010, %v1059
      %v1103 = vadd.f32 %v1011, %v1062
      %v1104 = vadd.f32 %v1012, %v1065
      %v1105 = vadd.f32 %v1013, %v1068
      %v1106 = vadd.f32 %v1014, %v1071
      %v1107 = vadd.f32 %v1015, %v1074
      %v1108 = vadd.f32 %v1016, %v1077
      %v1109 = vadd.f32 %v1017, %v1080
      %v1110 = vadd.f32 %v1018, %v1083
      %v1111 = vadd.f32 %v1019, %v1086
      %v1112 = vadd.f32 %v1020, %v1089
      %v1113 = vadd.f32 %v1021, %v1092
      %v1114 = vadd.f32 %v1022, %v1095
      %v1115 = vadd.f32 %v1023, %v1098
      %v1117 = vrot.slane %v309, 1
      %v1118 = vrot.slane %v310, 1
      %v1119 = vsel %vm337, %v1117, %v1118
      %v1120 = vrot.slane %v311, 1
      %v1121 = vsel %vm337, %v1118, %v1120
      %s1122 = scalar_lea.vmem %s1, 28
      %v1123 = vld [vmem:[%s1122] sm:$0xf]
      %v1124 = vsel %vm380, %v1119, 0
      %v1126 = vsel %vm380, %v1121, 0
      %v1129 = vsel %vm413, %v1123, 0
      %1131 = vmatpush.msra.mxu0 0.0
      %1132 = vmatpush.msra.mxu0 0.0
      %1133 = vmatpush.msra.mxu0 0.0
      %1134 = vmatpush.msra.mxu0 0.0
      %1135 = vmatpush.msra.mxu0 0.0
      %1136 = vmatpush.msra.mxu0 0.0
      %1137 = vmatpush.msra.mxu0 0.0
      %1138 = vmatpush.msra.mxu0 0.0
      %1139 = vmatpush.msra.mxu0 0.0
      %1140 = vmatpush.msra.mxu0 0.0
      %1141 = vmatpush.msra.mxu0 0.0
      %1142 = vmatpush.msra.mxu0 0.0
      %1143 = vmatpush.msra.mxu0 0.0
      %1144 = vmatpush.msra.mxu0 0.0
      %1145 = vmatpush.msra.mxu0 0.0
      %1146 = vmatpush.msra.mxu0 %v1129
      %1147 = vmatmul.f32.gmra.mxu0 %v389
      %v1148 = vpop.f32.mrf.mxu0
      %v1149 = vadd.f32 0.0, %v1148
      %1150 = vmatmul.f32.gmra.mxu0 %v391
      %v1151 = vpop.f32.mrf.mxu0
      %v1152 = vadd.f32 0.0, %v1151
      %1153 = vmatmul.f32.gmra.mxu0 %v393
      %v1154 = vpop.f32.mrf.mxu0
      %v1155 = vadd.f32 0.0, %v1154
      %1156 = vmatmul.f32.gmra.mxu0 %v395
      %v1157 = vpop.f32.mrf.mxu0
      %v1158 = vadd.f32 0.0, %v1157
      %1159 = vmatmul.f32.gmra.mxu0 %v397
      %v1160 = vpop.f32.mrf.mxu0
      %v1161 = vadd.f32 0.0, %v1160
      %1162 = vmatmul.f32.gmra.mxu0 %v399
      %v1163 = vpop.f32.mrf.mxu0
      %v1164 = vadd.f32 0.0, %v1163
      %1165 = vmatmul.f32.gmra.mxu0 %v401
      %v1166 = vpop.f32.mrf.mxu0
      %v1167 = vadd.f32 0.0, %v1166
      %1168 = vmatmul.f32.gmra.mxu0 %v403
      %v1169 = vpop.f32.mrf.mxu0
      %v1170 = vadd.f32 0.0, %v1169
      %1171 = vmatmul.f32.gmra.mxu0 %v405
      %v1172 = vpop.f32.mrf.mxu0
      %v1173 = vadd.f32 0.0, %v1172
      %1174 = vmatmul.f32.gmra.mxu0 %v407
      %v1175 = vpop.f32.mrf.mxu0
      %v1176 = vadd.f32 0.0, %v1175
      %1177 = vmatmul.f32.gmra.mxu0 %v409
      %v1178 = vpop.f32.mrf.mxu0
      %v1179 = vadd.f32 0.0, %v1178
      %1180 = vmatmul.f32.gmra.mxu0 %v411
      %v1181 = vpop.f32.mrf.mxu0
      %v1182 = vadd.f32 0.0, %v1181
      %1183 = vmatmul.f32.gmra.mxu0 %v841
      %v1184 = vpop.f32.mrf.mxu0
      %v1185 = vadd.f32 0.0, %v1184
      %1186 = vmatmul.f32.gmra.mxu0 %v843
      %v1187 = vpop.f32.mrf.mxu0
      %v1188 = vadd.f32 0.0, %v1187
      %1189 = vmatmul.f32.gmra.mxu0 %v1124
      %v1190 = vpop.f32.mrf.mxu0
      %v1191 = vadd.f32 0.0, %v1190
      %1192 = vmatmul.f32.gmra.mxu0 %v1126
      %v1193 = vpop.f32.mrf.mxu0
      %v1194 = vadd.f32 0.0, %v1193
      %1195 = vdwg.mxu0
      %v1196 = vadd.f32 %v1100, %v1149
      %v1197 = vadd.f32 %v1101, %v1152
      %v1198 = vadd.f32 %v1102, %v1155
      %v1199 = vadd.f32 %v1103, %v1158
      %v1200 = vadd.f32 %v1104, %v1161
      %v1201 = vadd.f32 %v1105, %v1164
      %v1202 = vadd.f32 %v1106, %v1167
      %v1203 = vadd.f32 %v1107, %v1170
      %v1204 = vadd.f32 %v1108, %v1173
      %v1205 = vadd.f32 %v1109, %v1176
      %v1206 = vadd.f32 %v1110, %v1179
      %v1207 = vadd.f32 %v1111, %v1182
      %v1208 = vadd.f32 %v1112, %v1185
      %v1209 = vadd.f32 %v1113, %v1188
      %v1210 = vadd.f32 %v1114, %v1191
      %v1211 = vadd.f32 %v1115, %v1194
      %v1212 = vrot.slane %v309, 2
      %v1213 = vrot.slane %v310, 2
      %v1214 = vsel %vm582, %v1212, %v1213
      %v1215 = vrot.slane %v311, 2
      %v1216 = vsel %vm582, %v1213, %v1215
      %s1217 = scalar_lea.vmem %s1, 32
      %v1218 = vld [vmem:[%s1217] sm:$0xf]
      %v1219 = vsel %vm380, %v1214, 0
      %v1221 = vsel %vm380, %v1216, 0
      %v1224 = vsel %vm413, %v1218, 0
      %1226 = vmatpush.msra.mxu0 0.0
      %1227 = vmatpush.msra.mxu0 0.0
      %1228 = vmatpush.msra.mxu0 0.0
      %1229 = vmatpush.msra.mxu0 0.0
      %1230 = vmatpush.msra.mxu0 0.0
      %1231 = vmatpush.msra.mxu0 0.0
      %1232 = vmatpush.msra.mxu0 0.0
      %1233 = vmatpush.msra.mxu0 0.0
      %1234 = vmatpush.msra.mxu0 0.0
      %1235 = vmatpush.msra.mxu0 0.0
      %1236 = vmatpush.msra.mxu0 0.0
      %1237 = vmatpush.msra.mxu0 0.0
      %1238 = vmatpush.msra.mxu0 0.0
      %1239 = vmatpush.msra.mxu0 0.0
      %1240 = vmatpush.msra.mxu0 0.0
      %1241 = vmatpush.msra.mxu0 %v1224
      %1242 = vmatmul.f32.gmra.mxu0 %v633
      %v1243 = vpop.f32.mrf.mxu0
      %v1244 = vadd.f32 0.0, %v1243
      %1245 = vmatmul.f32.gmra.mxu0 %v635
      %v1246 = vpop.f32.mrf.mxu0
      %v1247 = vadd.f32 0.0, %v1246
      %1248 = vmatmul.f32.gmra.mxu0 %v637
      %v1249 = vpop.f32.mrf.mxu0
      %v1250 = vadd.f32 0.0, %v1249
      %1251 = vmatmul.f32.gmra.mxu0 %v639
      %v1252 = vpop.f32.mrf.mxu0
      %v1253 = vadd.f32 0.0, %v1252
      %1254 = vmatmul.f32.gmra.mxu0 %v641
      %v1255 = vpop.f32.mrf.mxu0
      %v1256 = vadd.f32 0.0, %v1255
      %1257 = vmatmul.f32.gmra.mxu0 %v643
      %v1258 = vpop.f32.mrf.mxu0
      %v1259 = vadd.f32 0.0, %v1258
      %1260 = vmatmul.f32.gmra.mxu0 %v645
      %v1261 = vpop.f32.mrf.mxu0
      %v1262 = vadd.f32 0.0, %v1261
      %1263 = vmatmul.f32.gmra.mxu0 %v647
      %v1264 = vpop.f32.mrf.mxu0
      %v1265 = vadd.f32 0.0, %v1264
      %1266 = vmatmul.f32.gmra.mxu0 %v649
      %v1267 = vpop.f32.mrf.mxu0
      %v1268 = vadd.f32 0.0, %v1267
      %1269 = vmatmul.f32.gmra.mxu0 %v651
      %v1270 = vpop.f32.mrf.mxu0
      %v1271 = vadd.f32 0.0, %v1270
      %1272 = vmatmul.f32.gmra.mxu0 %v653
      %v1273 = vpop.f32.mrf.mxu0
      %v1274 = vadd.f32 0.0, %v1273
      %1275 = vmatmul.f32.gmra.mxu0 %v655
      %v1276 = vpop.f32.mrf.mxu0
      %v1277 = vadd.f32 0.0, %v1276
      %1278 = vmatmul.f32.gmra.mxu0 %v936
      %v1279 = vpop.f32.mrf.mxu0
      %v1280 = vadd.f32 0.0, %v1279
      %1281 = vmatmul.f32.gmra.mxu0 %v938
      %v1282 = vpop.f32.mrf.mxu0
      %v1283 = vadd.f32 0.0, %v1282
      %1284 = vmatmul.f32.gmra.mxu0 %v1219
      %v1285 = vpop.f32.mrf.mxu0
      %v1286 = vadd.f32 0.0, %v1285
      %1287 = vmatmul.f32.gmra.mxu0 %v1221
      %v1288 = vpop.f32.mrf.mxu0
      %v1289 = vadd.f32 0.0, %v1288
      %1290 = vdwg.mxu0
      %v1291 = vadd.f32 %v1196, %v1244
      %v1292 = vadd.f32 %v1197, %v1247
      %v1293 = vadd.f32 %v1198, %v1250
      %v1294 = vadd.f32 %v1199, %v1253
      %v1295 = vadd.f32 %v1200, %v1256
      %v1296 = vadd.f32 %v1201, %v1259
      %v1297 = vadd.f32 %v1202, %v1262
      %v1298 = vadd.f32 %v1203, %v1265
      %v1299 = vadd.f32 %v1204, %v1268
      %v1300 = vadd.f32 %v1205, %v1271
      %v1301 = vadd.f32 %v1206, %v1274
      %v1302 = vadd.f32 %v1207, %v1277
      %v1303 = vadd.f32 %v1208, %v1280
      %v1304 = vadd.f32 %v1209, %v1283
      %v1305 = vadd.f32 %v1210, %v1286
      %v1306 = vadd.f32 %v1211, %v1289
      %1307 = vst.msk [vmem:[%s271] sm:$0xff] %vm380, %v1291
      %1308 = vst.msk [vmem:[%s271 + $0x8] sm:$0xff] %vm380, %v1292
      %1309 = vst.msk [vmem:[%s271 + $0x10] sm:$0xff] %vm380, %v1293
      %1310 = vst.msk [vmem:[%s271 + $0x18] sm:$0xff] %vm380, %v1294
      %1311 = vst.msk [vmem:[%s271 + $0x20] sm:$0xff] %vm380, %v1295
      %1312 = vst.msk [vmem:[%s271 + $0x28] sm:$0xff] %vm380, %v1296
      %1313 = vst.msk [vmem:[%s271 + $0x30] sm:$0xff] %vm380, %v1297
      %1314 = vst.msk [vmem:[%s271 + $0x38] sm:$0xff] %vm380, %v1298
      %1315 = vst.msk [vmem:[%s271 + $0x40] sm:$0xff] %vm380, %v1299
      %1316 = vst.msk [vmem:[%s271 + $0x48] sm:$0xff] %vm380, %v1300
      %1317 = vst.msk [vmem:[%s271 + $0x50] sm:$0xff] %vm380, %v1301
      %1318 = vst.msk [vmem:[%s271 + $0x58] sm:$0xff] %vm380, %v1302
      %1319 = vst.msk [vmem:[%s271 + $0x60] sm:$0xff] %vm380, %v1303
      %1320 = vst.msk [vmem:[%s271 + $0x68] sm:$0xff] %vm380, %v1304
      %1321 = vst.msk [vmem:[%s271 + $0x70] sm:$0xff] %vm380, %v1305
      %1322 = vst.msk [vmem:[%s271 + $0x78] sm:$0xff] %vm380, %v1306
      %v1323 = vsel %vm380, %v1291, 0.0
      %v1324 = vsel %vm380, %v1292, 0.0
      %v1325 = vadd.f32 %v1323, %v1324
      %v1326 = vsel %vm380, %v1293, 0.0
      %v1327 = vadd.f32 %v1325, %v1326
      %v1328 = vsel %vm380, %v1294, 0.0
      %v1329 = vadd.f32 %v1327, %v1328
      %v1330 = vsel %vm380, %v1295, 0.0
      %v1331 = vadd.f32 %v1329, %v1330
      %v1332 = vsel %vm380, %v1296, 0.0
      %v1333 = vadd.f32 %v1331, %v1332
      %v1334 = vsel %vm380, %v1297, 0.0
      %v1335 = vadd.f32 %v1333, %v1334
      %v1336 = vsel %vm380, %v1298, 0.0
      %v1337 = vadd.f32 %v1335, %v1336
      %v1338 = vsel %vm380, %v1299, 0.0
      %v1339 = vadd.f32 %v1337, %v1338
      %v1340 = vsel %vm380, %v1300, 0.0
      %v1341 = vadd.f32 %v1339, %v1340
      %v1342 = vsel %vm380, %v1301, 0.0
      %v1343 = vadd.f32 %v1341, %v1342
      %v1344 = vsel %vm380, %v1302, 0.0
      %v1345 = vadd.f32 %v1343, %v1344
      %v1346 = vsel %vm380, %v1303, 0.0
      %v1347 = vadd.f32 %v1345, %v1346
      %v1348 = vsel %vm380, %v1304, 0.0
      %v1349 = vadd.f32 %v1347, %v1348
      %v1350 = vsel %vm380, %v1305, 0.0
      %v1351 = vadd.f32 %v1349, %v1350
      %v1352 = vsel %vm380, %v1306, 0.0
      %v1353 = vadd.f32 %v1351, %v1352
      %v1354 = vrot.slane %v1353, 4
      %v1355 = vadd.f32 %v1353, %v1354
      %v1356 = vrot.slane %v1355, 2
      %v1357 = vadd.f32 %v1355, %v1356
      %v1358 = vrot.slane %v1357, 1
      %v1359 = vadd.f32 %v1357, %v1358
      %v1360 = vmul.f32 %v1291, %v1291
      %v1361 = vmul.f32 %v1292, %v1292
      %v1362 = vmul.f32 %v1293, %v1293
      %v1363 = vmul.f32 %v1294, %v1294
      %v1364 = vmul.f32 %v1295, %v1295
      %v1365 = vmul.f32 %v1296, %v1296
      %v1366 = vmul.f32 %v1297, %v1297
      %v1367 = vmul.f32 %v1298, %v1298
      %v1368 = vmul.f32 %v1299, %v1299
      %v1369 = vmul.f32 %v1300, %v1300
      %v1370 = vmul.f32 %v1301, %v1301
      %v1371 = vmul.f32 %v1302, %v1302
      %v1372 = vmul.f32 %v1303, %v1303
      %v1373 = vmul.f32 %v1304, %v1304
      %v1374 = vmul.f32 %v1305, %v1305
      %v1375 = vmul.f32 %v1306, %v1306
      %v1376 = vsel %vm380, %v1360, 0.0
      %v1377 = vsel %vm380, %v1361, 0.0
      %v1378 = vadd.f32 %v1376, %v1377
      %v1379 = vsel %vm380, %v1362, 0.0
      %v1380 = vadd.f32 %v1378, %v1379
      %v1381 = vsel %vm380, %v1363, 0.0
      %v1382 = vadd.f32 %v1380, %v1381
      %v1383 = vsel %vm380, %v1364, 0.0
      %v1384 = vadd.f32 %v1382, %v1383
      %v1385 = vsel %vm380, %v1365, 0.0
      %v1386 = vadd.f32 %v1384, %v1385
      %v1387 = vsel %vm380, %v1366, 0.0
      %v1388 = vadd.f32 %v1386, %v1387
      %v1389 = vsel %vm380, %v1367, 0.0
      %v1390 = vadd.f32 %v1388, %v1389
      %v1391 = vsel %vm380, %v1368, 0.0
      %v1392 = vadd.f32 %v1390, %v1391
      %v1393 = vsel %vm380, %v1369, 0.0
      %v1394 = vadd.f32 %v1392, %v1393
      %v1395 = vsel %vm380, %v1370, 0.0
      %v1396 = vadd.f32 %v1394, %v1395
      %v1397 = vsel %vm380, %v1371, 0.0
      %v1398 = vadd.f32 %v1396, %v1397
      %v1399 = vsel %vm380, %v1372, 0.0
      %v1400 = vadd.f32 %v1398, %v1399
      %v1401 = vsel %vm380, %v1373, 0.0
      %v1402 = vadd.f32 %v1400, %v1401
      %v1403 = vsel %vm380, %v1374, 0.0
      %v1404 = vadd.f32 %v1402, %v1403
      %v1405 = vsel %vm380, %v1375, 0.0
      %v1406 = vadd.f32 %v1404, %v1405
      %v1407 = vrot.slane %v1406, 4
      %v1408 = vadd.f32 %v1406, %v1407
      %v1409 = vrot.slane %v1408, 2
      %v1410 = vadd.f32 %v1408, %v1409
      %v1411 = vrot.slane %v1410, 1
      %v1412 = vadd.f32 %v1410, %v1411
      %vm1413 = vcmask 1040384
      %v1414 = vsel %vm1413, %v1359, %v1412
      %vm1415 = vcmask 25600
      %1416 = vst.msk [vmem:[%s279] sm:$0x3] %vm1415, %v1414
      %s1417 = smul.u32 %s21, 2
      %s1418 = sadd.s32 %s1417, %s22
      %p1419 = scmp.lt.s32.totalorder %s1418, 3
      %s1420 = scalar_select %p1419, %s1418, 3
      %s1421 = smul.addr %s1420, 16
      %s1422 = smul.addr %s1421, 8
      %s1423 = scalar_lea.vmem %s4, %s1422
      %s1424 = smul.u32 %s21, 2
      %s1425 = sadd.s32 %s1424, %s22
      %p1426 = scmp.lt.s32.totalorder %s1425, 3
      %s1427 = scalar_select %p1426, %s1425, 3
      %s1428 = smul.addr %s1427, 2
      %s1429 = scalar_lea.vmem %s5, %s1428
      // Predicated region
      $region37: #{coronary_identification_forward.3} parent=35 // pred_check
        %p1430 = pneg %p144
      $region38: #{coronary_identification_forward.3} parent=35 // pred_check_branch
        %1432 = sbr.rel (%p1430) target = $region40
      $region39: #{coronary_identification_forward.3} parent=35 // pred_region
        %s1433 = smul.u32 %s21, 2
        %s1434 = sadd.s32 %s1433, %s22
      $region40: #{coronary_identification_forward.3} parent=35 // pred_fallthru
        _
      // Predicated region
      $region41: #{coronary_identification_forward.3} parent=35 // pred_check
        %p1435 = pneg %p174
      $region42: #{coronary_identification_forward.3} parent=35 // pred_check_branch
        %1437 = sbr.rel (%p1435) target = $region44
      $region43: #{coronary_identification_forward.3} parent=35 // pred_region
        %s1438 = smul.u32 %s21, 2
        %s1439 = sadd.s32 %s1438, %s22
      $region44: #{coronary_identification_forward.3} parent=35 // pred_fallthru
        _
    $region36: #{coronary_identification_forward.3} parent=5 // pred_fallthru
      _
    %p1440 = scmp.le.s32.totalorder 2, %s12
    // Predicated region
    $region45: #{coronary_identification_forward.3} parent=5 // pred_check
      %p1441 = pneg %p1440
    $region46: #{coronary_identification_forward.3} parent=5 // pred_check_branch
      %1443 = sbr.rel (%p1441) target = $region48
    $region47: #{coronary_identification_forward.3} parent=5 // pred_region
      %s1444 = ssub.s32 %s12, 2
      // Predicated region
      $region49: #{coronary_identification_forward.3} parent=47 // pred_check
        %p1445 = pneg %p150
      $region50: #{coronary_identification_forward.3} parent=47 // pred_check_branch
        %1447 = sbr.rel (%p1445) target = $region52
      $region51: #{coronary_identification_forward.3} parent=47 // pred_region
        %s1448 = smul.u32 %s23, 2
        %s1449 = sadd.s32 %s1448, %s24
        %p1450 = scmp.lt.s32.totalorder %s1449, 3
        %s1451 = scalar_select %p1450, %s1449, 3
        %s1452 = smul.addr %s1451, 16
        %s1453 = smul.addr %s1452, 8
        %s1454 = scalar_lea.vmem %s4, %s1453
      $region52: #{coronary_identification_forward.3} parent=47 // pred_fallthru
        _
      // Predicated region
      $region53: #{coronary_identification_forward.3} parent=47 // pred_check
        %p1455 = pneg %p180
      $region54: #{coronary_identification_forward.3} parent=47 // pred_check_branch
        %1457 = sbr.rel (%p1455) target = $region56
      $region55: #{coronary_identification_forward.3} parent=47 // pred_region
        %s1458 = smul.u32 %s23, 2
        %s1459 = sadd.s32 %s1458, %s24
        %p1460 = scmp.lt.s32.totalorder %s1459, 3
        %s1461 = scalar_select %p1460, %s1459, 3
        %s1462 = smul.addr %s1461, 2
        %s1463 = scalar_lea.vmem %s5, %s1462
      $region56: #{coronary_identification_forward.3} parent=47 // pred_fallthru
        _
    $region48: #{coronary_identification_forward.3} parent=5 // pred_fallthru
      _
  $region6: #{coronary_identification_forward.3} parent=0 // loop_footer
    %s16 = sadd.s32 1, %s12
  $region7: #{coronary_identification_forward.3} parent=0 // loop_footer_branch
    %11 = sbr.rel target = $region3
  $region8: #{coronary_identification_forward.3} parent=0 // loop_exit
    _

// kernel: coronary_identification_forward.4
$region0: #{coronary_identification_forward.4}
  #allocation0 [shape = 'u32[]', space=smem, size = 0x4, offset = 0x4, fixed_abs, tag = 'smem constant byte address 0x4 - core index']
  #allocation1 [shape = 'u32[72,128]{1,0:T(1,128)}', space=vmem, size = 0x9000, scoped, tag = 'internal scratch']
  %s0 = inlined_call_operand.vmem [shape: f32[4,10,18,4], index: 0, kind: input, shape index: {}]
  %s1 = inlined_call_operand.vmem [shape: f32[3,3,4,4], index: 1, kind: input, shape index: {}]
  %s2 = inlined_call_operand.vmem [shape: f32[1,4], index: 2, kind: input, shape index: {}]
  %s3 = inlined_call_operand.vmem [shape: f32[1,4], index: 3, kind: input, shape index: {}]
  %s4 = inlined_call_operand.vmem [shape: f32[4,8,16,4], index: 4, kind: output, shape index: {0}]
  %s5 = inlined_call_operand.vmem [shape: f32[4,2,4], index: 5, kind: output, shape index: {1}]
  %6 = xla_tuple %s4, %s5
  %s7 = sld [smem:[#allocation0]]
  $region57: #{coronary_identification_forward.4} parent=0
    _
  %s9 = ssub.s32 1, %s7
  %s10 = scalar_select 0, %s9, %s7
  loop: start=0, step=1, limit=6
  $region2: #{coronary_identification_forward.4} parent=0 // loop_pre_header
    _
  $region3: #{coronary_identification_forward.4} parent=0 // loop_header
    %s12 = sphi 0, %s16
    %p13 = scmp.ge.s32.totalorder %s12, 6
    %s19 = sphi 0, %s31
    %s20 = sphi 0, %s27
    %s21 = sphi 0, %s19
    %s22 = sphi 0, %s20
    %s23 = sphi 0, %s21
    %s24 = sphi 0, %s22
    %s38 = sphi 0, %s40
    %s41 = sphi 0, %s38
    %s42 = sphi 0, %s41
    %s58 = sphi 0, %s42
    %s62 = sphi 0, %s62
    %s64 = sphi 0, %s62
    %s65 = sphi 0, %s64
    %s79 = sphi 0, %s65
    %s83 = sphi 0, %s83
    %s85 = sphi 0, %s83
    %s86 = sphi 0, %s85
    %s100 = sphi 0, %s86
    %s104 = sphi 0, %s104
    %s106 = sphi 0, %s104
    %s107 = sphi 0, %s106
    %s121 = sphi 0, %s107
    %s131 = sphi 0, %s133
    %s134 = sphi 0, %s131
    %s135 = sphi 0, %s134
    %s151 = sphi 0, %s135
    %s161 = sphi 0, %s163
    %s164 = sphi 0, %s161
    %s165 = sphi 0, %s164
    %s181 = sphi 0, %s165
  $region4: #{coronary_identification_forward.4} parent=0 // loop_header_branch
    %15 = sbr.rel (%p13) target = $region8
  $region5: #{coronary_identification_forward.4} parent=0 // loop_body
    %s17 = ssub.s32 %s12, 1
    %s18 = ssub.s32 %s12, 2
    %s25 = sadd.s32 1, %s20
    %p26 = scmp.ge.s32.totalorder %s25, 2
    %s27 = scalar_select %p26, 0, %s25
    %s28 = sadd.s32 1, %s19
    %s29 = scalar_select %p26, %s28, %s19
    %p30 = scmp.ge.s32.totalorder %s29, 2
    %s31 = scalar_select %p30, 0, %s29
    %s32 = smul.u32 %s19, 2
    %s33 = sadd.s32 %s32, %s20
    %s34 = smul.u32 %s31, 2
    %s35 = sadd.s32 %s34, %s27
    %s36 = ssub.s32 %s33, %s35
    %p37 = scmp.eq.s32.totalorder %s36, 0
    %s39 = sadd.s32 %s38, 1
    %s40 = scalar_select %p37, %s38, %s39
    %p43 = pneg %p37
    %p44 = scmp.eq.s32.totalorder %s12, 3
    %p45 = por %p43, %p44
    %p46 = scmp.ne.s32.totalorder %s38, %s41
    %p47 = scmp.eq.s32.totalorder %s12, 0
    %p48 = por %p46, %p47
    %p49 = scmp.ne.s32.totalorder %s38, %s41
    %p50 = scmp.eq.s32.totalorder %s17, 3
    %p51 = por %p49, %p50
    %p52 = scmp.ne.s32.totalorder %s41, %s42
    %p53 = scmp.eq.s32.totalorder %s17, 0
    %p54 = por %p52, %p53
    %p55 = scmp.ne.s32.totalorder %s41, %s42
    %p56 = scmp.eq.s32.totalorder %s18, 3
    %p57 = por %p55, %p56
    %p59 = scmp.ne.s32.totalorder %s42, %s58
    %p60 = scmp.eq.s32.totalorder %s18, 0
    %p61 = por %p59, %p60
    %s63 = sadd.s32 %s62, 1
    %p66 = scmp.eq.s32.totalorder %s12, 3
    %p67 = scmp.ne.s32.totalorder %s62, %s64
    %p68 = scmp.eq.s32.totalorder %s12, 0
    %p69 = por %p67, %p68
    %p70 = scmp.ne.s32.totalorder %s62, %s64
    %p71 = scmp.eq.s32.totalorder %s17, 3
    %p72 = por %p70, %p71
    %p73 = scmp.ne.s32.totalorder %s64, %s65
    %p74 = scmp.eq.s32.totalorder %s17, 0
    %p75 = por %p73, %p74
    %p76 = scmp.ne.s32.totalorder %s64, %s65
    %p77 = scmp.eq.s32.totalorder %s18, 3
    %p78 = por %p76, %p77
    %p80 = scmp.ne.s32.totalorder %s65, %s79
    %p81 = scmp.eq.s32.totalorder %s18, 0
    %p82 = por %p80, %p81
    %s84 = sadd.s32 %s83, 1
    %p87 = scmp.eq.s32.totalorder %s12, 3
    %p88 = scmp.ne.s32.totalorder %s83, %s85
    %p89 = scmp.eq.s32.totalorder %s12, 0
    %p90 = por %p88, %p89
    %p91 = scmp.ne.s32.totalorder %s83, %s85
    %p92 = scmp.eq.s32.totalorder %s17, 3
    %p93 = por %p91, %p92
    %p94 = scmp.ne.s32.totalorder %s85, %s86
    %p95 = scmp.eq.s32.totalorder %s17, 0
    %p96 = por %p94, %p95
    %p97 = scmp.ne.s32.totalorder %s85, %s86
    %p98 = scmp.eq.s32.totalorder %s18, 3
    %p99 = por %p97, %p98
    %p101 = scmp.ne.s32.totalorder %s86, %s100
    %p102 = scmp.eq.s32.totalorder %s18, 0
    %p103 = por %p101, %p102
    %s105 = sadd.s32 %s104, 1
    %p108 = scmp.eq.s32.totalorder %s12, 3
    %p109 = scmp.ne.s32.totalorder %s104, %s106
    %p110 = scmp.eq.s32.totalorder %s12, 0
    %p111 = por %p109, %p110
    %p112 = scmp.ne.s32.totalorder %s104, %s106
    %p113 = scmp.eq.s32.totalorder %s17, 3
    %p114 = por %p112, %p113
    %p115 = scmp.ne.s32.totalorder %s106, %s107
    %p116 = scmp.eq.s32.totalorder %s17, 0
    %p117 = por %p115, %p116
    %p118 = scmp.ne.s32.totalorder %s106, %s107
    %p119 = scmp.eq.s32.totalorder %s18, 3
    %p120 = por %p118, %p119
    %p122 = scmp.ne.s32.totalorder %s107, %s121
    %p123 = scmp.eq.s32.totalorder %s18, 0
    %p124 = por %p122, %p123
    %s125 = smul.u32 %s19, 2
    %s126 = sadd.s32 %s125, %s20
    %s127 = smul.u32 %s31, 2
    %s128 = sadd.s32 %s127, %s27
    %s129 = ssub.s32 %s126, %s128
    %p130 = scmp.eq.s32.totalorder %s129, 0
    %s132 = sadd.s32 %s131, 1
    %s133 = scalar_select %p130, %s131, %s132
    %p136 = pneg %p130
    %p137 = scmp.eq.s32.totalorder %s12, 3
    %p138 = por %p136, %p137
    %p139 = scmp.ne.s32.totalorder %s131, %s134
    %p140 = scmp.eq.s32.totalorder %s12, 0
    %p141 = por %p139, %p140
    %p142 = scmp.ne.s32.totalorder %s131, %s134
    %p143 = scmp.eq.s32.totalorder %s17, 3
    %p144 = por %p142, %p143
    %p145 = scmp.ne.s32.totalorder %s134, %s135
    %p146 = scmp.eq.s32.totalorder %s17, 0
    %p147 = por %p145, %p146
    %p148 = scmp.ne.s32.totalorder %s134, %s135
    %p149 = scmp.eq.s32.totalorder %s18, 3
    %p150 = por %p148, %p149
    %p152 = scmp.ne.s32.totalorder %s135, %s151
    %p153 = scmp.eq.s32.totalorder %s18, 0
    %p154 = por %p152, %p153
    %s155 = smul.u32 %s19, 2
    %s156 = sadd.s32 %s155, %s20
    %s157 = smul.u32 %s31, 2
    %s158 = sadd.s32 %s157, %s27
    %s159 = ssub.s32 %s156, %s158
    %p160 = scmp.eq.s32.totalorder %s159, 0
    %s162 = sadd.s32 %s161, 1
    %s163 = scalar_select %p160, %s161, %s162
    %p166 = pneg %p160
    %p167 = scmp.eq.s32.totalorder %s12, 3
    %p168 = por %p166, %p167
    %p169 = scmp.ne.s32.totalorder %s161, %s164
    %p170 = scmp.eq.s32.totalorder %s12, 0
    %p171 = por %p169, %p170
    %p172 = scmp.ne.s32.totalorder %s161, %s164
    %p173 = scmp.eq.s32.totalorder %s17, 3
    %p174 = por %p172, %p173
    %p175 = scmp.ne.s32.totalorder %s164, %s165
    %p176 = scmp.eq.s32.totalorder %s17, 0
    %p177 = por %p175, %p176
    %p178 = scmp.ne.s32.totalorder %s164, %s165
    %p179 = scmp.eq.s32.totalorder %s18, 3
    %p180 = por %p178, %p179
    %p182 = scmp.ne.s32.totalorder %s165, %s181
    %p183 = scmp.eq.s32.totalorder %s18, 0
    %p184 = por %p182, %p183
    %p185 = scmp.le.s32.totalorder 1, %s12
    %p186 = scmp.lt.s32.totalorder %s12, 5
    %p187 = pnand %p185, %p186
    %p188 = pneg %p187
    // Predicated region
    $region9: #{coronary_identification_forward.4} parent=5 // pred_check
      _
    $region10: #{coronary_identification_forward.4} parent=5 // pred_check_branch
      %190 = sbr.rel (%p187) target = $region12
    $region11: #{coronary_identification_forward.4} parent=5 // pred_region
      %s191 = ssub.s32 %s12, 1
      // Predicated region
      $region13: #{coronary_identification_forward.4} parent=11 // pred_check
        %p192 = pneg %p75
      $region14: #{coronary_identification_forward.4} parent=11 // pred_check_branch
        %194 = sbr.rel (%p192) target = $region16
      $region15: #{coronary_identification_forward.4} parent=11 // pred_region
        _
      $region16: #{coronary_identification_forward.4} parent=11 // pred_fallthru
        _
      // Predicated region
      $region17: #{coronary_identification_forward.4} parent=11 // pred_check
        %p195 = pneg %p96
      $region18: #{coronary_identification_forward.4} parent=11 // pred_check_branch
        %197 = sbr.rel (%p195) target = $region20
      $region19: #{coronary_identification_forward.4} parent=11 // pred_region
        _
      $region20: #{coronary_identification_forward.4} parent=11 // pred_fallthru
        _
      // Predicated region
      $region21: #{coronary_identification_forward.4} parent=11 // pred_check
        %p198 = pneg %p117
      $region22: #{coronary_identification_forward.4} parent=11 // pred_check_branch
        %200 = sbr.rel (%p198) target = $region24
      $region23: #{coronary_identification_forward.4} parent=11 // pred_region
        _
      $region24: #{coronary_identification_forward.4} parent=11 // pred_fallthru
        _
    $region12: #{coronary_identification_forward.4} parent=5 // pred_fallthru
      _
    %p201 = scmp.lt.s32.totalorder %s12, 4
    // Predicated region
    $region25: #{coronary_identification_forward.4} parent=5 // pred_check
      %p202 = pneg %p201
    $region26: #{coronary_identification_forward.4} parent=5 // pred_check_branch
      %204 = sbr.rel (%p202) target = $region28
    $region27: #{coronary_identification_forward.4} parent=5 // pred_region
      // Predicated region
      $region29: #{coronary_identification_forward.4} parent=27 // pred_check
        %p205 = pneg %p48
      $region30: #{coronary_identification_forward.4} parent=27 // pred_check_branch
        %207 = sbr.rel (%p205) target = $region32
      $region31: #{coronary_identification_forward.4} parent=27 // pred_region
        %s208 = smul.u32 %s19, 2
        %s209 = sadd.s32 %s208, %s20
        %p210 = scmp.lt.s32.totalorder %s209, 3
        %s211 = scalar_select %p210, %s209, 3
        %s212 = smul.addr %s211, 30
        %s213 = smul.addr %s212, 8
        %s214 = scalar_lea.vmem %s0, %s213
        %s215 = smul.u32 %s19, 2
        %s216 = sadd.s32 %s215, %s20
      $region32: #{coronary_identification_forward.4} parent=27 // pred_fallthru
        _
    $region28: #{coronary_identification_forward.4} parent=5 // pred_fallthru
      _
    %p217 = scmp.le.s32.totalorder 1, %s12
    %p218 = scmp.lt.s32.totalorder %s12, 5
    %p219 = pnand %p217, %p218
    %p220 = pneg %p219
    // Predicated region
    $region33: #{coronary_identification_forward.4} parent=5 // pred_check
      _
    $region34: #{coronary_identification_forward.4} parent=5 // pred_check_branch
      %222 = sbr.rel (%p219) target = $region36
    $region35: #{coronary_identification_forward.4} parent=5 // pred_region
      %s223 = ssub.s32 %s12, 1
      %s224 = smul.u32 %s21, 2
      %s225 = sadd.s32 %s224, %s22
      %p226 = scmp.lt.s32.totalorder %s225, 3
      %s227 = scalar_select %p226, %s225, 3
      %s228 = smul.addr %s227, 30
      %s229 = smul.addr %s228, 8
      %s230 = scalar_lea.vmem %s0, %s229
      %p231 = pneg %p54
      %p232 = pneg %p51
      %p233 = pneg %p75
      %p234 = pneg %p72
      %p235 = pneg %p96
      %p236 = pneg %p93
      %p237 = pneg %p117
      %p238 = pneg %p114
      %p239 = pneg %p147
      %p240 = pneg %p144
      %s241 = smul.u32 %s21, 2
      %s242 = sadd.s32 %s241, %s22
      %p243 = scmp.lt.s32.totalorder %s242, 3
      %s244 = scalar_select %p243, %s242, 3
      %s245 = smul.addr %s244, 16
      %s246 = smul.addr %s245, 8
      %s247 = scalar_lea.vmem %s4, %s246
      %p248 = pneg %p177
      %p249 = pneg %p174
      %s250 = smul.u32 %s21, 2
      %s251 = sadd.s32 %s250, %s22
      %p252 = scmp.lt.s32.totalorder %s251, 3
      %s253 = scalar_select %p252, %s251, 3
      %s254 = smul.addr %s253, 2
      %s255 = scalar_lea.vmem %s5, %s254
      %s256 = smul.u32 %s21, 2
      %s257 = sadd.s32 %s256, %s22
      %p258 = scmp.lt.s32.totalorder %s257, 3
      %s259 = scalar_select %p258, %s257, 3
      %s260 = smul.addr %s259, 30
      %s261 = smul.addr %s260, 8
      %s262 = scalar_lea.vmem %s0, %s261
      %s263 = smul.u32 %s21, 2
      %s264 = sadd.s32 %s263, %s22
      %s265 = smul.u32 %s21, 2
      %s266 = sadd.s32 %s265, %s22
      %p267 = scmp.lt.s32.totalorder %s266, 3
      %s268 = scalar_select %p267, %s266, 3
      %s269 = smul.addr %s268, 16
      %s270 = smul.addr %s269, 8
      %s271 = scalar_lea.vmem %s4, %s270
      %s272 = smul.u32 %s21, 2
      %s273 = sadd.s32 %s272, %s22
      %s274 = smul.u32 %s21, 2
      %s275 = sadd.s32 %s274, %s22
      %p276 = scmp.lt.s32.totalorder %s275, 3
      %s277 = scalar_select %p276, %s275, 3
      %s278 = smul.addr %s277, 2
      %s279 = scalar_lea.vmem %s5, %s278
      %s280 = smul.u32 %s21, 2
      %s281 = sadd.s32 %s280, %s22
      %v282 = vld [vmem:[%s262] sm:$0xff]
      %v283 = vld [vmem:[%s262 + $0x8] sm:$0xff]
      %v284 = vld [vmem:[%s262 + $0x10] sm:$0x3]
      %v285 = vld [vmem:[%s262 + $0x18] sm:$0xff]
      %v286 = vld [vmem:[%s262 + $0x20] sm:$0xff]
      %v287 = vld [vmem:[%s262 + $0x28] sm:$0x3]
      %v288 = vld [vmem:[%s262 + $0x30] sm:$0xff]
      %v289 = vld [vmem:[%s262 + $0x38] sm:$0xff]
      %v290 = vld [vmem:[%s262 + $0x40] sm:$0x3]
      %v291 = vld [vmem:[%s262 + $0x48] sm:$0xff]
      %v292 = vld [vmem:[%s262 + $0x50] sm:$0xff]
      %v293 = vld [vmem:[%s262 + $0x58] sm:$0x3]
      %v294 = vld [vmem:[%s262 + $0x60] sm:$0xff]
      %v295 = vld [vmem:[%s262 + $0x68] sm:$0xff]
      %v296 = vld [vmem:[%s262 + $0x70] sm:$0x3]
      %v297 = vld [vmem:[%s262 + $0x78] sm:$0xff]
      %v298 = vld [vmem:[%s262 + $0x80] sm:$0xff]
      %v299 = vld [vmem:[%s262 + $0x88] sm:$0x3]
      %v300 = vld [vmem:[%s262 + $0x90] sm:$0xff]
      %v301 = vld [vmem:[%s262 + $0x98] sm:$0xff]
      %v302 = vld [vmem:[%s262 + $0xa0] sm:$0x3]
      %v303 = vld [vmem:[%s262 + $0xa8] sm:$0xff]
      %v304 = vld [vmem:[%s262 + $0xb0] sm:$0xff]
      %v305 = vld [vmem:[%s262 + $0xb8] sm:$0x3]
      %v306 = vld [vmem:[%s262 + $0xc0] sm:$0xff]
      %v307 = vld [vmem:[%s262 + $0xc8] sm:$0xff]
      %v308 = vld [vmem:[%s262 + $0xd0] sm:$0x3]
      %v309 = vld [vmem:[%s262 + $0xd8] sm:$0xff]
      %v310 = vld [vmem:[%s262 + $0xe0] sm:$0xff]
      %v311 = vld [vmem:[%s262 + $0xe8] sm:$0x3]
      %v312 = vld [vmem:[%s2] sm:$0x1]
      %v314 = vperm.slane %v312, 0
      %v316 = vmul.f32 %v282, %v314
      %v317 = vmul.f32 %v283, %v314
      %v318 = vmul.f32 %v284, %v314
      %v319 = vmul.f32 %v285, %v314
      %v320 = vmul.f32 %v286, %v314
      %v321 = vmul.f32 %v287, %v314
      %v322 = vmul.f32 %v288, %v314
      %v323 = vmul.f32 %v289, %v314
      %v324 = vmul.f32 %v290, %v314
      %v325 = vmul.f32 %v291, %v314
      %v326 = vmul.f32 %v292, %v314
      %v327 = vmul.f32 %v293, %v314
      %v328 = vmul.f32 %v294, %v314
      %v329 = vmul.f32 %v295, %v314
      %v330 = vmul.f32 %v296, %v314
      %v331 = vmul.f32 %v297, %v314
      %v332 = vmul.f32 %v298, %v314
      %v333 = vmul.f32 %v299, %v314
      %v334 = vmul.f32 %v300, %v314
      %v335 = vmul.f32 %v301, %v314
      %v336 = vmul.f32 %v302, %v314
      %v337 = vmul.f32 %v303, %v314
      %v338 = vmul.f32 %v304, %v314
      %v339 = vmul.f32 %v305, %v314
      %v340 = vmul.f32 %v306, %v314
      %v341 = vmul.f32 %v307, %v314
      %v342 = vmul.f32 %v308, %v314
      %v343 = vmul.f32 %v309, %v314
      %v344 = vmul.f32 %v310, %v314
      %v345 = vmul.f32 %v311, %v314
      %v346 = vld [vmem:[%s3] sm:$0x1]
      %v348 = vperm.slane %v346, 0
      %v350 = vadd.f32 %v316, %v348
      %v351 = vadd.f32 %v317, %v348
      %v352 = vadd.f32 %v318, %v348
      %v353 = vadd.f32 %v319, %v348
      %v354 = vadd.f32 %v320, %v348
      %v355 = vadd.f32 %v321, %v348
      %v356 = vadd.f32 %v322, %v348
      %v357 = vadd.f32 %v323, %v348
      %v358 = vadd.f32 %v324, %v348
      %v359 = vadd.f32 %v325, %v348
      %v360 = vadd.f32 %v326, %v348
      %v361 = vadd.f32 %v327, %v348
      %v362 = vadd.f32 %v328, %v348
      %v363 = vadd.f32 %v329, %v348
      %v364 = vadd.f32 %v330, %v348
      %v365 = vadd.f32 %v331, %v348
      %v366 = vadd.f32 %v332, %v348
      %v367 = vadd.f32 %v333, %v348
      %v368 = vadd.f32 %v334, %v348
      %v369 = vadd.f32 %v335, %v348
      %v370 = vadd.f32 %v336, %v348
      %v371 = vadd.f32 %v337, %v348
      %v372 = vadd.f32 %v338, %v348
      %v373 = vadd.f32 %v339, %v348
      %v374 = vadd.f32 %v340, %v348
      %v375 = vadd.f32 %v341, %v348
      %v376 = vadd.f32 %v342, %v348
      %v377 = vadd.f32 %v343, %v348
      %v378 = vadd.f32 %v344, %v348
      %v379 = vadd.f32 %v345, %v348
      %v380 = vmax.f32 %v350, 0.0
      %v381 = vmax.f32 %v351, 0.0
      %v382 = vmax.f32 %v352, 0.0
      %v383 = vmax.f32 %v353, 0.0
      %v384 = vmax.f32 %v354, 0.0
      %v385 = vmax.f32 %v355, 0.0
      %v386 = vmax.f32 %v356, 0.0
      %v387 = vmax.f32 %v357, 0.0
      %v388 = vmax.f32 %v358, 0.0
      %v389 = vmax.f32 %v359, 0.0
      %v390 = vmax.f32 %v360, 0.0
      %v391 = vmax.f32 %v361, 0.0
      %v392 = vmax.f32 %v362, 0.0
      %v393 = vmax.f32 %v363, 0.0
      %v394 = vmax.f32 %v364, 0.0
      %v395 = vmax.f32 %v365, 0.0
      %v396 = vmax.f32 %v366, 0.0
      %v397 = vmax.f32 %v367, 0.0
      %v398 = vmax.f32 %v368, 0.0
      %v399 = vmax.f32 %v369, 0.0
      %v400 = vmax.f32 %v370, 0.0
      %v401 = vmax.f32 %v371, 0.0
      %v402 = vmax.f32 %v372, 0.0
      %v403 = vmax.f32 %v373, 0.0
      %v404 = vmax.f32 %v374, 0.0
      %v405 = vmax.f32 %v375, 0.0
      %v406 = vmax.f32 %v376, 0.0
      %v407 = vmax.f32 %v377, 0.0
      %v408 = vmax.f32 %v378, 0.0
      %v409 = vmax.f32 %v379, 0.0
      %v410 = vlaneseq
      %v411 = vshrl.u32 %v410, 7
      %v412 = vadd.s32 %v411, 8
      %v413 = vadd.s32 %v411, 16
      %vm414 = vcmp.eq.s32.totalorder %v411, 0
      %vm415 = vcmp.eq.s32.totalorder %v412, 0
      %vm416 = vcmp.eq.s32.totalorder %v413, 0
      %vm417 = vcmp.eq.s32.totalorder %v411, 17
      %vm418 = vcmp.eq.s32.totalorder %v412, 17
      %vm419 = vcmp.eq.s32.totalorder %v413, 17
      %vm420 = vmor %vm414, %vm417
      %vm421 = vmor %vm415, %vm418
      %vm422 = vmor %vm416, %vm419
      %p423 = scmp.eq.s32.totalorder %s22, 0
      %s424 = scalar_select %p423, 1, 0
      %v425 = vstv %s424
      %vm426 = vcmp.eq.s32.totalorder %v425, 1
      %vm427 = vmor %vm420, %vm426
      %vm428 = vmor %vm421, %vm426
      %vm429 = vmor %vm422, %vm426
      %vm430 = vmor %vm420, 0
      %vm431 = vmor %vm421, 0
      %vm432 = vmor %vm422, 0
      %p433 = scmp.eq.s32.totalorder %s22, 1
      %s434 = scalar_select %p433, 1, 0
      %v435 = vstv %s434
      %vm436 = vcmp.eq.s32.totalorder %v435, 1
      %vm437 = vmor %vm427, 0
      %vm438 = vmor %vm428, 0
      %vm439 = vmor %vm429, 0
      %vm440 = vmor %vm430, 0
      %vm441 = vmor %vm431, 0
      %vm442 = vmor %vm432, 0
      %vm443 = vmor %vm430, %vm436
      %vm444 = vmor %vm431, %vm436
      %vm445 = vmor %vm432, %vm436
      %v446 = vsel %vm437, 0.0, %v380
      %v447 = vsel %vm438, 0.0, %v381
      %v448 = vsel %vm439, 0.0, %v382
      %v449 = vsel %vm440, 0.0, %v383
      %v450 = vsel %vm441, 0.0, %v384
      %v451 = vsel %vm442, 0.0, %v385
      %v452 = vsel %vm440, 0.0, %v386
      %v453 = vsel %vm441, 0.0, %v387
      %v454 = vsel %vm442, 0.0, %v388
      %v455 = vsel %vm440, 0.0, %v389
      %v456 = vsel %vm441, 0.0, %v390
      %v457 = vsel %vm442, 0.0, %v391
      %v458 = vsel %vm440, 0.0, %v392
      %v459 = vsel %vm441, 0.0, %v393
      %v460 = vsel %vm442, 0.0, %v394
      %v461 = vsel %vm440, 0.0, %v395
      %v462 = vsel %vm441, 0.0, %v396
      %v463 = vsel %vm442, 0.0, %v397
      %v464 = vsel %vm440, 0.0, %v398
      %v465 = vsel %vm441, 0.0, %v399
      %v466 = vsel %vm442, 0.0, %v400
      %v467 = vsel %vm440, 0.0, %v401
      %v468 = vsel %vm441, 0.0, %v402
      %v469 = vsel %vm442, 0.0, %v403
      %v470 = vsel %vm440, 0.0, %v404
      %v471 = vsel %vm441, 0.0, %v405
      %v472 = vsel %vm442, 0.0, %v406
      %v473 = vsel %vm443, 0.0, %v407
      %v474 = vsel %vm444, 0.0, %v408
      %v475 = vsel %vm445, 0.0, %v409
      %v476 = vld [vmem:[%s1] sm:$0xf]
      %vm501 = vcmask 1046528
      %v502 = vrot.slane %v446, 1
      %v503 = vrot.slane %v447, 1
      %v504 = vsel %vm501, %v502, %v503
      %v505 = vrot.slane %v448, 1
      %v506 = vsel %vm501, %v503, %v505
      %v507 = vrot.slane %v449, 1
      %v508 = vrot.slane %v450, 1
      %v509 = vsel %vm501, %v507, %v508
      %v510 = vrot.slane %v451, 1
      %v511 = vsel %vm501, %v508, %v510
      %v512 = vrot.slane %v452, 1
      %v513 = vrot.slane %v453, 1
      %v514 = vsel %vm501, %v512, %v513
      %v515 = vrot.slane %v454, 1
      %v516 = vsel %vm501, %v513, %v515
      %v517 = vrot.slane %v455, 1
      %v518 = vrot.slane %v456, 1
      %v519 = vsel %vm501, %v517, %v518
      %v520 = vrot.slane %v457, 1
      %v521 = vsel %vm501, %v518, %v520
      %v522 = vrot.slane %v458, 1
      %v523 = vrot.slane %v459, 1
      %v524 = vsel %vm501, %v522, %v523
      %v525 = vrot.slane %v460, 1
      %v526 = vsel %vm501, %v523, %v525
      %v527 = vrot.slane %v461, 1
      %v528 = vrot.slane %v462, 1
      %v529 = vsel %vm501, %v527, %v528
      %v530 = vrot.slane %v463, 1
      %v531 = vsel %vm501, %v528, %v530
      %v532 = vrot.slane %v464, 1
      %v533 = vrot.slane %v465, 1
      %v534 = vsel %vm501, %v532, %v533
      %v535 = vrot.slane %v466, 1
      %v536 = vsel %vm501, %v533, %v535
      %v537 = vrot.slane %v467, 1
      %v538 = vrot.slane %v468, 1
      %v539 = vsel %vm501, %v537, %v538
      %v540 = vrot.slane %v469, 1
      %v541 = vsel %vm501, %v538, %v540
      %s542 = scalar_lea.vmem %s1, 4
      %v543 = vld [vmem:[%s542] sm:$0xf]
      %vm544 = vcmask 31744
      %v545 = vsel %vm544, %v504, 0
      %v547 = vsel %vm544, %v506, 0
      %v549 = vsel %vm544, %v509, 0
      %v551 = vsel %vm544, %v511, 0
      %v553 = vsel %vm544, %v514, 0
      %v555 = vsel %vm544, %v516, 0
      %v557 = vsel %vm544, %v519, 0
      %v559 = vsel %vm544, %v521, 0
      %v561 = vsel %vm544, %v524, 0
      %v563 = vsel %vm544, %v526, 0
      %v565 = vsel %vm544, %v529, 0
      %v567 = vsel %vm544, %v531, 0
      %v569 = vsel %vm544, %v534, 0
      %v571 = vsel %vm544, %v536, 0
      %v573 = vsel %vm544, %v539, 0
      %v575 = vsel %vm544, %v541, 0
      %vm577 = vcmask 1043456
      %v579 = vsel %vm577, %v543, 0
      %581 = vmatpush.msra.mxu0 0.0
      %582 = vmatpush.msra.mxu0 0.0
      %583 = vmatpush.msra.mxu0 0.0
      %584 = vmatpush.msra.mxu0 0.0
      %585 = vmatpush.msra.mxu0 0.0
      %586 = vmatpush.msra.mxu0 0.0
      %587 = vmatpush.msra.mxu0 0.0
      %588 = vmatpush.msra.mxu0 0.0
      %589 = vmatpush.msra.mxu0 0.0
      %590 = vmatpush.msra.mxu0 0.0
      %591 = vmatpush.msra.mxu0 0.0
      %592 = vmatpush.msra.mxu0 0.0
      %593 = vmatpush.msra.mxu0 0.0
      %594 = vmatpush.msra.mxu0 0.0
      %595 = vmatpush.msra.mxu0 0.0
      %596 = vmatpush.msra.mxu0 %v579
      %597 = vmatmul.f32.gmra.mxu0 %v545
      %v598 = vpop.f32.mrf.mxu0
      %v599 = vadd.f32 0.0, %v598
      %600 = vmatmul.f32.gmra.mxu0 %v547
      %v601 = vpop.f32.mrf.mxu0
      %v602 = vadd.f32 0.0, %v601
      %603 = vmatmul.f32.gmra.mxu0 %v549
      %v604 = vpop.f32.mrf.mxu0
      %v605 = vadd.f32 0.0, %v604
      %606 = vmatmul.f32.gmra.mxu0 %v551
      %v607 = vpop.f32.mrf.mxu0
      %v608 = vadd.f32 0.0, %v607
      %609 = vmatmul.f32.gmra.mxu0 %v553
      %v610 = vpop.f32.mrf.mxu0
      %v611 = vadd.f32 0.0, %v610
      %612 = vmatmul.f32.gmra.mxu0 %v555
      %v613 = vpop.f32.mrf.mxu0
      %v614 = vadd.f32 0.0, %v613
      %615 = vmatmul.f32.gmra.mxu0 %v557
      %v616 = vpop.f32.mrf.mxu0
      %v617 = vadd.f32 0.0, %v616
      %618 = vmatmul.f32.gmra.mxu0 %v559
      %v619 = vpop.f32.mrf.mxu0
      %v620 = vadd.f32 0.0, %v619
      %621 = vmatmul.f32.gmra.mxu0 %v561
      %v622 = vpop.f32.mrf.mxu0
      %v623 = vadd.f32 0.0, %v622
      %624 = vmatmul.f32.gmra.mxu0 %v563
      %v625 = vpop.f32.mrf.mxu0
      %v626 = vadd.f32 0.0, %v625
      %627 = vmatmul.f32.gmra.mxu0 %v565
      %v628 = vpop.f32.mrf.mxu0
      %v629 = vadd.f32 0.0, %v628
      %630 = vmatmul.f32.gmra.mxu0 %v567
      %v631 = vpop.f32.mrf.mxu0
      %v632 = vadd.f32 0.0, %v631
      %633 = vmatmul.f32.gmra.mxu0 %v569
      %v634 = vpop.f32.mrf.mxu0
      %v635 = vadd.f32 0.0, %v634
      %636 = vmatmul.f32.gmra.mxu0 %v571
      %v637 = vpop.f32.mrf.mxu0
      %v638 = vadd.f32 0.0, %v637
      %639 = vmatmul.f32.gmra.mxu0 %v573
      %v640 = vpop.f32.mrf.mxu0
      %v641 = vadd.f32 0.0, %v640
      %642 = vmatmul.f32.gmra.mxu0 %v575
      %v643 = vpop.f32.mrf.mxu0
      %v644 = vadd.f32 0.0, %v643
      %645 = vdwg.mxu0
      %v646 = vsel %vm544, %v446, 0
      %v648 = vsel %vm544, %v447, 0
      %v650 = vsel %vm544, %v449, 0
      %v652 = vsel %vm544, %v450, 0
      %v654 = vsel %vm544, %v452, 0
      %v656 = vsel %vm544, %v453, 0
      %v658 = vsel %vm544, %v455, 0
      %v660 = vsel %vm544, %v456, 0
      %v662 = vsel %vm544, %v458, 0
      %v664 = vsel %vm544, %v459, 0
      %v666 = vsel %vm544, %v461, 0
      %v668 = vsel %vm544, %v462, 0
      %v670 = vsel %vm544, %v464, 0
      %v672 = vsel %vm544, %v465, 0
      %v674 = vsel %vm544, %v467, 0
      %v676 = vsel %vm544, %v468, 0
      %v679 = vsel %vm577, %v476, 0
      %681 = vmatpush.msra.mxu0 0.0
      %682 = vmatpush.msra.mxu0 0.0
      %683 = vmatpush.msra.mxu0 0.0
      %684 = vmatpush.msra.mxu0 0.0
      %685 = vmatpush.msra.mxu0 0.0
      %686 = vmatpush.msra.mxu0 0.0
      %687 = vmatpush.msra.mxu0 0.0
      %688 = vmatpush.msra.mxu0 0.0
      %689 = vmatpush.msra.mxu0 0.0
      %690 = vmatpush.msra.mxu0 0.0
      %691 = vmatpush.msra.mxu0 0.0
      %692 = vmatpush.msra.mxu0 0.0
      %693 = vmatpush.msra.mxu0 0.0
      %694 = vmatpush.msra.mxu0 0.0
      %695 = vmatpush.msra.mxu0 0.0
      %696 = vmatpush.msra.mxu0 %v679
      %697 = vmatmul.f32.gmra.mxu0 %v646
      %v698 = vpop.f32.mrf.mxu0
      %v699 = vadd.f32 %v599, %v698
      %700 = vmatmul.f32.gmra.mxu0 %v648
      %v701 = vpop.f32.mrf.mxu0
      %v702 = vadd.f32 %v602, %v701
      %703 = vmatmul.f32.gmra.mxu0 %v650
      %v704 = vpop.f32.mrf.mxu0
      %v705 = vadd.f32 %v605, %v704
      %706 = vmatmul.f32.gmra.mxu0 %v652
      %v707 = vpop.f32.mrf.mxu0
      %v708 = vadd.f32 %v608, %v707
      %709 = vmatmul.f32.gmra.mxu0 %v654
      %v710 = vpop.f32.mrf.mxu0
      %v711 = vadd.f32 %v611, %v710
      %712 = vmatmul.f32.gmra.mxu0 %v656
      %v713 = vpop.f32.mrf.mxu0
      %v714 = vadd.f32 %v614, %v713
      %715 = vmatmul.f32.gmra.mxu0 %v658
      %v716 = vpop.f32.mrf.mxu0
      %v717 = vadd.f32 %v617, %v716
      %718 = vmatmul.f32.gmra.mxu0 %v660
      %v719 = vpop.f32.mrf.mxu0
      %v720 = vadd.f32 %v620, %v719
      %721 = vmatmul.f32.gmra.mxu0 %v662
      %v722 = vpop.f32.mrf.mxu0
      %v723 = vadd.f32 %v623, %v722
      %724 = vmatmul.f32.gmra.mxu0 %v664
      %v725 = vpop.f32.mrf.mxu0
      %v726 = vadd.f32 %v626, %v725
      %727 = vmatmul.f32.gmra.mxu0 %v666
      %v728 = vpop.f32.mrf.mxu0
      %v729 = vadd.f32 %v629, %v728
      %730 = vmatmul.f32.gmra.mxu0 %v668
      %v731 = vpop.f32.mrf.mxu0
      %v732 = vadd.f32 %v632, %v731
      %733 = vmatmul.f32.gmra.mxu0 %v670
      %v734 = vpop.f32.mrf.mxu0
      %v735 = vadd.f32 %v635, %v734
      %736 = vmatmul.f32.gmra.mxu0 %v672
      %v737 = vpop.f32.mrf.mxu0
      %v738 = vadd.f32 %v638, %v737
      %739 = vmatmul.f32.gmra.mxu0 %v674
      %v740 = vpop.f32.mrf.mxu0
      %v741 = vadd.f32 %v641, %v740
      %742 = vmatmul.f32.gmra.mxu0 %v676
      %v743 = vpop.f32.mrf.mxu0
      %v744 = vadd.f32 %v644, %v743
      %745 = vdwg.mxu0
      %vm746 = vcmask 1045504
      %v747 = vrot.slane %v446, 2
      %v748 = vrot.slane %v447, 2
      %v749 = vsel %vm746, %v747, %v748
      %v750 = vrot.slane %v448, 2
      %v751 = vsel %vm746, %v748, %v750
      %v752 = vrot.slane %v449, 2
      %v753 = vrot.slane %v450, 2
      %v754 = vsel %vm746, %v752, %v753
      %v755 = vrot.slane %v451, 2
      %v756 = vsel %vm746, %v753, %v755
      %v757 = vrot.slane %v452, 2
      %v758 = vrot.slane %v453, 2
      %v759 = vsel %vm746, %v757, %v758
      %v760 = vrot.slane %v454, 2
      %v761 = vsel %vm746, %v758, %v760
      %v762 = vrot.slane %v455, 2
      %v763 = vrot.slane %v456, 2
      %v764 = vsel %vm746, %v762, %v763
      %v765 = vrot.slane %v457, 2
      %v766 = vsel %vm746, %v763, %v765
      %v767 = vrot.slane %v458, 2
      %v768 = vrot.slane %v459, 2
      %v769 = vsel %vm746, %v767, %v768
      %v770 = vrot.slane %v460, 2
      %v771 = vsel %vm746, %v768, %v770
      %v772 = vrot.slane %v461, 2
      %v773 = vrot.slane %v462, 2
      %v774 = vsel %vm746, %v772, %v773
      %v775 = vrot.slane %v463, 2
      %v776 = vsel %vm746, %v773, %v775
      %v777 = vrot.slane %v464, 2
      %v778 = vrot.slane %v465, 2
      %v779 = vsel %vm746, %v777, %v778
      %v780 = vrot.slane %v466, 2
      %v781 = vsel %vm746, %v778, %v780
      %v782 = vrot.slane %v467, 2
      %v783 = vrot.slane %v468, 2
      %v784 = vsel %vm746, %v782, %v783
      %v785 = vrot.slane %v469, 2
      %v786 = vsel %vm746, %v783, %v785
      %s787 = scalar_lea.vmem %s1, 8
      %v788 = vld [vmem:[%s787] sm:$0xf]
      %v789 = vsel %vm544, %v749, 0
      %v791 = vsel %vm544, %v751, 0
      %v793 = vsel %vm544, %v754, 0
      %v795 = vsel %vm544, %v756, 0
      %v797 = vsel %vm544, %v759, 0
      %v799 = vsel %vm544, %v761, 0
      %v801 = vsel %vm544, %v764, 0
      %v803 = vsel %vm544, %v766, 0
      %v805 = vsel %vm544, %v769, 0
      %v807 = vsel %vm544, %v771, 0
      %v809 = vsel %vm544, %v774, 0
      %v811 = vsel %vm544, %v776, 0
      %v813 = vsel %vm544, %v779, 0
      %v815 = vsel %vm544, %v781, 0
      %v817 = vsel %vm544, %v784, 0
      %v819 = vsel %vm544, %v786, 0
      %v822 = vsel %vm577, %v788, 0
      %824 = vmatpush.msra.mxu0 0.0
      %825 = vmatpush.msra.mxu0 0.0
      %826 = vmatpush.msra.mxu0 0.0
      %827 = vmatpush.msra.mxu0 0.0
      %828 = vmatpush.msra.mxu0 0.0
      %829 = vmatpush.msra.mxu0 0.0
      %830 = vmatpush.msra.mxu0 0.0
      %831 = vmatpush.msra.mxu0 0.0
      %832 = vmatpush.msra.mxu0 0.0
      %833 = vmatpush.msra.mxu0 0.0
      %834 = vmatpush.msra.mxu0 0.0
      %835 = vmatpush.msra.mxu0 0.0
      %836 = vmatpush.msra.mxu0 0.0
      %837 = vmatpush.msra.mxu0 0.0
      %838 = vmatpush.msra.mxu0 0.0
      %839 = vmatpush.msra.mxu0 %v822
      %840 = vmatmul.f32.gmra.mxu0 %v789
      %v841 = vpop.f32.mrf.mxu0
      %v842 = vadd.f32 0.0, %v841
      %843 = vmatmul.f32.gmra.mxu0 %v791
      %v844 = vpop.f32.mrf.mxu0
      %v845 = vadd.f32 0.0, %v844
      %846 = vmatmul.f32.gmra.mxu0 %v793
      %v847 = vpop.f32.mrf.mxu0
      %v848 = vadd.f32 0.0, %v847
      %849 = vmatmul.f32.gmra.mxu0 %v795
      %v850 = vpop.f32.mrf.mxu0
      %v851 = vadd.f32 0.0, %v850
      %852 = vmatmul.f32.gmra.mxu0 %v797
      %v853 = vpop.f32.mrf.mxu0
      %v854 = vadd.f32 0.0, %v853
      %855 = vmatmul.f32.gmra.mxu0 %v799
      %v856 = vpop.f32.mrf.mxu0
      %v857 = vadd.f32 0.0, %v856
      %858 = vmatmul.f32.gmra.mxu0 %v801
      %v859 = vpop.f32.mrf.mxu0
      %v860 = vadd.f32 0.0, %v859
      %861 = vmatmul.f32.gmra.mxu0 %v803
      %v862 = vpop.f32.mrf.mxu0
      %v863 = vadd.f32 0.0, %v862
      %864 = vmatmul.f32.gmra.mxu0 %v805
      %v865 = vpop.f32.mrf.mxu0
      %v866 = vadd.f32 0.0, %v865
      %867 = vmatmul.f32.gmra.mxu0 %v807
      %v868 = vpop.f32.mrf.mxu0
      %v869 = vadd.f32 0.0, %v868
      %870 = vmatmul.f32.gmra.mxu0 %v809
      %v871 = vpop.f32.mrf.mxu0
      %v872 = vadd.f32 0.0, %v871
      %873 = vmatmul.f32.gmra.mxu0 %v811
      %v874 = vpop.f32.mrf.mxu0
      %v875 = vadd.f32 0.0, %v874
      %876 = vmatmul.f32.gmra.mxu0 %v813
      %v877 = vpop.f32.mrf.mxu0
      %v878 = vadd.f32 0.0, %v877
      %879 = vmatmul.f32.gmra.mxu0 %v815
      %v880 = vpop.f32.mrf.mxu0
      %v881 = vadd.f32 0.0, %v880
      %882 = vmatmul.f32.gmra.mxu0 %v817
      %v883 = vpop.f32.mrf.mxu0
      %v884 = vadd.f32 0.0, %v883
      %885 = vmatmul.f32.gmra.mxu0 %v819
      %v886 = vpop.f32.mrf.mxu0
      %v887 = vadd.f32 0.0, %v886
      %888 = vdwg.mxu0
      %v889 = vadd.f32 %v699, %v842
      %v890 = vadd.f32 %v702, %v845
      %v891 = vadd.f32 %v705, %v848
      %v892 = vadd.f32 %v708, %v851
      %v893 = vadd.f32 %v711, %v854
      %v894 = vadd.f32 %v714, %v857
      %v895 = vadd.f32 %v717, %v860
      %v896 = vadd.f32 %v720, %v863
      %v897 = vadd.f32 %v723, %v866
      %v898 = vadd.f32 %v726, %v869
      %v899 = vadd.f32 %v729, %v872
      %v900 = vadd.f32 %v732, %v875
      %v901 = vadd.f32 %v735, %v878
      %v902 = vadd.f32 %v738, %v881
      %v903 = vadd.f32 %v741, %v884
      %v904 = vadd.f32 %v744, %v887
      %s905 = scalar_lea.vmem %s1, 12
      %v906 = vld [vmem:[%s905] sm:$0xf]
      %v908 = vsel %vm544, %v470, 0
      %v911 = vsel %vm544, %v471, 0
      %v914 = vsel %vm577, %v906, 0
      %916 = vmatpush.msra.mxu0 0.0
      %917 = vmatpush.msra.mxu0 0.0
      %918 = vmatpush.msra.mxu0 0.0
      %919 = vmatpush.msra.mxu0 0.0
      %920 = vmatpush.msra.mxu0 0.0
      %921 = vmatpush.msra.mxu0 0.0
      %922 = vmatpush.msra.mxu0 0.0
      %923 = vmatpush.msra.mxu0 0.0
      %924 = vmatpush.msra.mxu0 0.0
      %925 = vmatpush.msra.mxu0 0.0
      %926 = vmatpush.msra.mxu0 0.0
      %927 = vmatpush.msra.mxu0 0.0
      %928 = vmatpush.msra.mxu0 0.0
      %929 = vmatpush.msra.mxu0 0.0
      %930 = vmatpush.msra.mxu0 0.0
      %931 = vmatpush.msra.mxu0 %v914
      %932 = vmatmul.f32.gmra.mxu0 %v650
      %v933 = vpop.f32.mrf.mxu0
      %v934 = vadd.f32 0.0, %v933
      %935 = vmatmul.f32.gmra.mxu0 %v652
      %v936 = vpop.f32.mrf.mxu0
      %v937 = vadd.f32 0.0, %v936
      %938 = vmatmul.f32.gmra.mxu0 %v654
      %v939 = vpop.f32.mrf.mxu0
      %v940 = vadd.f32 0.0, %v939
      %941 = vmatmul.f32.gmra.mxu0 %v656
      %v942 = vpop.f32.mrf.mxu0
      %v943 = vadd.f32 0.0, %v942
      %944 = vmatmul.f32.gmra.mxu0 %v658
      %v945 = vpop.f32.mrf.mxu0
      %v946 = vadd.f32 0.0, %v945
      %947 = vmatmul.f32.gmra.mxu0 %v660
      %v948 = vpop.f32.mrf.mxu0
      %v949 = vadd.f32 0.0, %v948
      %950 = vmatmul.f32.gmra.mxu0 %v662
      %v951 = vpop.f32.mrf.mxu0
      %v952 = vadd.f32 0.0, %v951
      %953 = vmatmul.f32.gmra.mxu0 %v664
      %v954 = vpop.f32.mrf.mxu0
      %v955 = vadd.f32 0.0, %v954
      %956 = vmatmul.f32.gmra.mxu0 %v666
      %v957 = vpop.f32.mrf.mxu0
      %v958 = vadd.f32 0.0, %v957
      %959 = vmatmul.f32.gmra.mxu0 %v668
      %v960 = vpop.f32.mrf.mxu0
      %v961 = vadd.f32 0.0, %v960
      %962 = vmatmul.f32.gmra.mxu0 %v670
      %v963 = vpop.f32.mrf.mxu0
      %v964 = vadd.f32 0.0, %v963
      %965 = vmatmul.f32.gmra.mxu0 %v672
      %v966 = vpop.f32.mrf.mxu0
      %v967 = vadd.f32 0.0, %v966
      %968 = vmatmul.f32.gmra.mxu0 %v674
      %v969 = vpop.f32.mrf.mxu0
      %v970 = vadd.f32 0.0, %v969
      %971 = vmatmul.f32.gmra.mxu0 %v676
      %v972 = vpop.f32.mrf.mxu0
      %v973 = vadd.f32 0.0, %v972
      %974 = vmatmul.f32.gmra.mxu0 %v908
      %v975 = vpop.f32.mrf.mxu0
      %v976 = vadd.f32 0.0, %v975
      %977 = vmatmul.f32.gmra.mxu0 %v911
      %v978 = vpop.f32.mrf.mxu0
      %v979 = vadd.f32 0.0, %v978
      %980 = vdwg.mxu0
      %v981 = vadd.f32 %v889, %v934
      %v982 = vadd.f32 %v890, %v937
      %v983 = vadd.f32 %v891, %v940
      %v984 = vadd.f32 %v892, %v943
      %v985 = vadd.f32 %v893, %v946
      %v986 = vadd.f32 %v894, %v949
      %v987 = vadd.f32 %v895, %v952
      %v988 = vadd.f32 %v896, %v955
      %v989 = vadd.f32 %v897, %v958
      %v990 = vadd.f32 %v898, %v961
      %v991 = vadd.f32 %v899, %v964
      %v992 = vadd.f32 %v900, %v967
      %v993 = vadd.f32 %v901, %v970
      %v994 = vadd.f32 %v902, %v973
      %v995 = vadd.f32 %v903, %v976
      %v996 = vadd.f32 %v904, %v979
      %v998 = vrot.slane %v470, 1
      %v999 = vrot.slane %v471, 1
      %v1000 = vsel %vm501, %v998, %v999
      %v1001 = vrot.slane %v472, 1
      %v1002 = vsel %vm501, %v999, %v1001
      %s1003 = scalar_lea.vmem %s1, 16
      %v1004 = vld [vmem:[%s1003] sm:$0xf]
      %v1005 = vsel %vm544, %v1000, 0
      %v1007 = vsel %vm544, %v1002, 0
      %v1010 = vsel %vm577, %v1004, 0
      %1012 = vmatpush.msra.mxu0 0.0
      %1013 = vmatpush.msra.mxu0 0.0
      %1014 = vmatpush.msra.mxu0 0.0
      %1015 = vmatpush.msra.mxu0 0.0
      %1016 = vmatpush.msra.mxu0 0.0
      %1017 = vmatpush.msra.mxu0 0.0
      %1018 = vmatpush.msra.mxu0 0.0
      %1019 = vmatpush.msra.mxu0 0.0
      %1020 = vmatpush.msra.mxu0 0.0
      %1021 = vmatpush.msra.mxu0 0.0
      %1022 = vmatpush.msra.mxu0 0.0
      %1023 = vmatpush.msra.mxu0 0.0
      %1024 = vmatpush.msra.mxu0 0.0
      %1025 = vmatpush.msra.mxu0 0.0
      %1026 = vmatpush.msra.mxu0 0.0
      %1027 = vmatpush.msra.mxu0 %v1010
      %1028 = vmatmul.f32.gmra.mxu0 %v549
      %v1029 = vpop.f32.mrf.mxu0
      %v1030 = vadd.f32 0.0, %v1029
      %1031 = vmatmul.f32.gmra.mxu0 %v551
      %v1032 = vpop.f32.mrf.mxu0
      %v1033 = vadd.f32 0.0, %v1032
      %1034 = vmatmul.f32.gmra.mxu0 %v553
      %v1035 = vpop.f32.mrf.mxu0
      %v1036 = vadd.f32 0.0, %v1035
      %1037 = vmatmul.f32.gmra.mxu0 %v555
      %v1038 = vpop.f32.mrf.mxu0
      %v1039 = vadd.f32 0.0, %v1038
      %1040 = vmatmul.f32.gmra.mxu0 %v557
      %v1041 = vpop.f32.mrf.mxu0
      %v1042 = vadd.f32 0.0, %v1041
      %1043 = vmatmul.f32.gmra.mxu0 %v559
      %v1044 = vpop.f32.mrf.mxu0
      %v1045 = vadd.f32 0.0, %v1044
      %1046 = vmatmul.f32.gmra.mxu0 %v561
      %v1047 = vpop.f32.mrf.mxu0
      %v1048 = vadd.f32 0.0, %v1047
      %1049 = vmatmul.f32.gmra.mxu0 %v563
      %v1050 = vpop.f32.mrf.mxu0
      %v1051 = vadd.f32 0.0, %v1050
      %1052 = vmatmul.f32.gmra.mxu0 %v565
      %v1053 = vpop.f32.mrf.mxu0
      %v1054 = vadd.f32 0.0, %v1053
      %1055 = vmatmul.f32.gmra.mxu0 %v567
      %v1056 = vpop.f32.mrf.mxu0
      %v1057 = vadd.f32 0.0, %v1056
      %1058 = vmatmul.f32.gmra.mxu0 %v569
      %v1059 = vpop.f32.mrf.mxu0
      %v1060 = vadd.f32 0.0, %v1059
      %1061 = vmatmul.f32.gmra.mxu0 %v571
      %v1062 = vpop.f32.mrf.mxu0
      %v1063 = vadd.f32 0.0, %v1062
      %1064 = vmatmul.f32.gmra.mxu0 %v573
      %v1065 = vpop.f32.mrf.mxu0
      %v1066 = vadd.f32 0.0, %v1065
      %1067 = vmatmul.f32.gmra.mxu0 %v575
      %v1068 = vpop.f32.mrf.mxu0
      %v1069 = vadd.f32 0.0, %v1068
      %1070 = vmatmul.f32.gmra.mxu0 %v1005
      %v1071 = vpop.f32.mrf.mxu0
      %v1072 = vadd.f32 0.0, %v1071
      %1073 = vmatmul.f32.gmra.mxu0 %v1007
      %v1074 = vpop.f32.mrf.mxu0
      %v1075 = vadd.f32 0.0, %v1074
      %1076 = vdwg.mxu0
      %v1077 = vadd.f32 %v981, %v1030
      %v1078 = vadd.f32 %v982, %v1033
      %v1079 = vadd.f32 %v983, %v1036
      %v1080 = vadd.f32 %v984, %v1039
      %v1081 = vadd.f32 %v985, %v1042
      %v1082 = vadd.f32 %v986, %v1045
      %v1083 = vadd.f32 %v987, %v1048
      %v1084 = vadd.f32 %v988, %v1051
      %v1085 = vadd.f32 %v989, %v1054
      %v1086 = vadd.f32 %v990, %v1057
      %v1087 = vadd.f32 %v991, %v1060
      %v1088 = vadd.f32 %v992, %v1063
      %v1089 = vadd.f32 %v993, %v1066
      %v1090 = vadd.f32 %v994, %v1069
      %v1091 = vadd.f32 %v995, %v1072
      %v1092 = vadd.f32 %v996, %v1075
      %v1093 = vrot.slane %v470, 2
      %v1094 = vrot.slane %v471, 2
      %v1095 = vsel %vm746, %v1093, %v1094
      %v1096 = vrot.slane %v472, 2
      %v1097 = vsel %vm746, %v1094, %v1096
      %s1098 = scalar_lea.vmem %s1, 20
      %v1099 = vld [vmem:[%s1098] sm:$0xf]
      %v1100 = vsel %vm544, %v1095, 0
      %v1102 = vsel %vm544, %v1097, 0
      %v1105 = vsel %vm577, %v1099, 0
      %1107 = vmatpush.msra.mxu0 0.0
      %1108 = vmatpush.msra.mxu0 0.0
      %1109 = vmatpush.msra.mxu0 0.0
      %1110 = vmatpush.msra.mxu0 0.0
      %1111 = vmatpush.msra.mxu0 0.0
      %1112 = vmatpush.msra.mxu0 0.0
      %1113 = vmatpush.msra.mxu0 0.0
      %1114 = vmatpush.msra.mxu0 0.0
      %1115 = vmatpush.msra.mxu0 0.0
      %1116 = vmatpush.msra.mxu0 0.0
      %1117 = vmatpush.msra.mxu0 0.0
      %1118 = vmatpush.msra.mxu0 0.0
      %1119 = vmatpush.msra.mxu0 0.0
      %1120 = vmatpush.msra.mxu0 0.0
      %1121 = vmatpush.msra.mxu0 0.0
      %1122 = vmatpush.msra.mxu0 %v1105
      %1123 = vmatmul.f32.gmra.mxu0 %v793
      %v1124 = vpop.f32.mrf.mxu0
      %v1125 = vadd.f32 0.0, %v1124
      %1126 = vmatmul.f32.gmra.mxu0 %v795
      %v1127 = vpop.f32.mrf.mxu0
      %v1128 = vadd.f32 0.0, %v1127
      %1129 = vmatmul.f32.gmra.mxu0 %v797
      %v1130 = vpop.f32.mrf.mxu0
      %v1131 = vadd.f32 0.0, %v1130
      %1132 = vmatmul.f32.gmra.mxu0 %v799
      %v1133 = vpop.f32.mrf.mxu0
      %v1134 = vadd.f32 0.0, %v1133
      %1135 = vmatmul.f32.gmra.mxu0 %v801
      %v1136 = vpop.f32.mrf.mxu0
      %v1137 = vadd.f32 0.0, %v1136
      %1138 = vmatmul.f32.gmra.mxu0 %v803
      %v1139 = vpop.f32.mrf.mxu0
      %v1140 = vadd.f32 0.0, %v1139
      %1141 = vmatmul.f32.gmra.mxu0 %v805
      %v1142 = vpop.f32.mrf.mxu0
      %v1143 = vadd.f32 0.0, %v1142
      %1144 = vmatmul.f32.gmra.mxu0 %v807
      %v1145 = vpop.f32.mrf.mxu0
      %v1146 = vadd.f32 0.0, %v1145
      %1147 = vmatmul.f32.gmra.mxu0 %v809
      %v1148 = vpop.f32.mrf.mxu0
      %v1149 = vadd.f32 0.0, %v1148
      %1150 = vmatmul.f32.gmra.mxu0 %v811
      %v1151 = vpop.f32.mrf.mxu0
      %v1152 = vadd.f32 0.0, %v1151
      %1153 = vmatmul.f32.gmra.mxu0 %v813
      %v1154 = vpop.f32.mrf.mxu0
      %v1155 = vadd.f32 0.0, %v1154
      %1156 = vmatmul.f32.gmra.mxu0 %v815
      %v1157 = vpop.f32.mrf.mxu0
      %v1158 = vadd.f32 0.0, %v1157
      %1159 = vmatmul.f32.gmra.mxu0 %v817
      %v1160 = vpop.f32.mrf.mxu0
      %v1161 = vadd.f32 0.0, %v1160
      %1162 = vmatmul.f32.gmra.mxu0 %v819
      %v1163 = vpop.f32.mrf.mxu0
      %v1164 = vadd.f32 0.0, %v1163
      %1165 = vmatmul.f32.gmra.mxu0 %v1100
      %v1166 = vpop.f32.mrf.mxu0
      %v1167 = vadd.f32 0.0, %v1166
      %1168 = vmatmul.f32.gmra.mxu0 %v1102
      %v1169 = vpop.f32.mrf.mxu0
      %v1170 = vadd.f32 0.0, %v1169
      %1171 = vdwg.mxu0
      %v1172 = vadd.f32 %v1077, %v1125
      %v1173 = vadd.f32 %v1078, %v1128
      %v1174 = vadd.f32 %v1079, %v1131
      %v1175 = vadd.f32 %v1080, %v1134
      %v1176 = vadd.f32 %v1081, %v1137
      %v1177 = vadd.f32 %v1082, %v1140
      %v1178 = vadd.f32 %v1083, %v1143
      %v1179 = vadd.f32 %v1084, %v1146
      %v1180 = vadd.f32 %v1085, %v1149
      %v1181 = vadd.f32 %v1086, %v1152
      %v1182 = vadd.f32 %v1087, %v1155
      %v1183 = vadd.f32 %v1088, %v1158
      %v1184 = vadd.f32 %v1089, %v1161
      %v1185 = vadd.f32 %v1090, %v1164
      %v1186 = vadd.f32 %v1091, %v1167
      %v1187 = vadd.f32 %v1092, %v1170
      %s1188 = scalar_lea.vmem %s1, 24
      %v1189 = vld [vmem:[%s1188] sm:$0xf]
      %v1191 = vsel %vm544, %v473, 0
      %v1194 = vsel %vm544, %v474, 0
      %v1197 = vsel %vm577, %v1189, 0
      %1199 = vmatpush.msra.mxu0 0.0
      %1200 = vmatpush.msra.mxu0 0.0
      %1201 = vmatpush.msra.mxu0 0.0
      %1202 = vmatpush.msra.mxu0 0.0
      %1203 = vmatpush.msra.mxu0 0.0
      %1204 = vmatpush.msra.mxu0 0.0
      %1205 = vmatpush.msra.mxu0 0.0
      %1206 = vmatpush.msra.mxu0 0.0
      %1207 = vmatpush.msra.mxu0 0.0
      %1208 = vmatpush.msra.mxu0 0.0
      %1209 = vmatpush.msra.mxu0 0.0
      %1210 = vmatpush.msra.mxu0 0.0
      %1211 = vmatpush.msra.mxu0 0.0
      %1212 = vmatpush.msra.mxu0 0.0
      %1213 = vmatpush.msra.mxu0 0.0
      %1214 = vmatpush.msra.mxu0 %v1197
      %1215 = vmatmul.f32.gmra.mxu0 %v654
      %v1216 = vpop.f32.mrf.mxu0
      %v1217 = vadd.f32 0.0, %v1216
      %1218 = vmatmul.f32.gmra.mxu0 %v656
      %v1219 = vpop.f32.mrf.mxu0
      %v1220 = vadd.f32 0.0, %v1219
      %1221 = vmatmul.f32.gmra.mxu0 %v658
      %v1222 = vpop.f32.mrf.mxu0
      %v1223 = vadd.f32 0.0, %v1222
      %1224 = vmatmul.f32.gmra.mxu0 %v660
      %v1225 = vpop.f32.mrf.mxu0
      %v1226 = vadd.f32 0.0, %v1225
      %1227 = vmatmul.f32.gmra.mxu0 %v662
      %v1228 = vpop.f32.mrf.mxu0
      %v1229 = vadd.f32 0.0, %v1228
      %1230 = vmatmul.f32.gmra.mxu0 %v664
      %v1231 = vpop.f32.mrf.mxu0
      %v1232 = vadd.f32 0.0, %v1231
      %1233 = vmatmul.f32.gmra.mxu0 %v666
      %v1234 = vpop.f32.mrf.mxu0
      %v1235 = vadd.f32 0.0, %v1234
      %1236 = vmatmul.f32.gmra.mxu0 %v668
      %v1237 = vpop.f32.mrf.mxu0
      %v1238 = vadd.f32 0.0, %v1237
      %1239 = vmatmul.f32.gmra.mxu0 %v670
      %v1240 = vpop.f32.mrf.mxu0
      %v1241 = vadd.f32 0.0, %v1240
      %1242 = vmatmul.f32.gmra.mxu0 %v672
      %v1243 = vpop.f32.mrf.mxu0
      %v1244 = vadd.f32 0.0, %v1243
      %1245 = vmatmul.f32.gmra.mxu0 %v674
      %v1246 = vpop.f32.mrf.mxu0
      %v1247 = vadd.f32 0.0, %v1246
      %1248 = vmatmul.f32.gmra.mxu0 %v676
      %v1249 = vpop.f32.mrf.mxu0
      %v1250 = vadd.f32 0.0, %v1249
      %1251 = vmatmul.f32.gmra.mxu0 %v908
      %v1252 = vpop.f32.mrf.mxu0
      %v1253 = vadd.f32 0.0, %v1252
      %1254 = vmatmul.f32.gmra.mxu0 %v911
      %v1255 = vpop.f32.mrf.mxu0
      %v1256 = vadd.f32 0.0, %v1255
      %1257 = vmatmul.f32.gmra.mxu0 %v1191
      %v1258 = vpop.f32.mrf.mxu0
      %v1259 = vadd.f32 0.0, %v1258
      %1260 = vmatmul.f32.gmra.mxu0 %v1194
      %v1261 = vpop.f32.mrf.mxu0
      %v1262 = vadd.f32 0.0, %v1261
      %1263 = vdwg.mxu0
      %v1264 = vadd.f32 %v1172, %v1217
      %v1265 = vadd.f32 %v1173, %v1220
      %v1266 = vadd.f32 %v1174, %v1223
      %v1267 = vadd.f32 %v1175, %v1226
      %v1268 = vadd.f32 %v1176, %v1229
      %v1269 = vadd.f32 %v1177, %v1232
      %v1270 = vadd.f32 %v1178, %v1235
      %v1271 = vadd.f32 %v1179, %v1238
      %v1272 = vadd.f32 %v1180, %v1241
      %v1273 = vadd.f32 %v1181, %v1244
      %v1274 = vadd.f32 %v1182, %v1247
      %v1275 = vadd.f32 %v1183, %v1250
      %v1276 = vadd.f32 %v1184, %v1253
      %v1277 = vadd.f32 %v1185, %v1256
      %v1278 = vadd.f32 %v1186, %v1259
      %v1279 = vadd.f32 %v1187, %v1262
      %v1281 = vrot.slane %v473, 1
      %v1282 = vrot.slane %v474, 1
      %v1283 = vsel %vm501, %v1281, %v1282
      %v1284 = vrot.slane %v475, 1
      %v1285 = vsel %vm501, %v1282, %v1284
      %s1286 = scalar_lea.vmem %s1, 28
      %v1287 = vld [vmem:[%s1286] sm:$0xf]
      %v1288 = vsel %vm544, %v1283, 0
      %v1290 = vsel %vm544, %v1285, 0
      %v1293 = vsel %vm577, %v1287, 0
      %1295 = vmatpush.msra.mxu0 0.0
      %1296 = vmatpush.msra.mxu0 0.0
      %1297 = vmatpush.msra.mxu0 0.0
      %1298 = vmatpush.msra.mxu0 0.0
      %1299 = vmatpush.msra.mxu0 0.0
      %1300 = vmatpush.msra.mxu0 0.0
      %1301 = vmatpush.msra.mxu0 0.0
      %1302 = vmatpush.msra.mxu0 0.0
      %1303 = vmatpush.msra.mxu0 0.0
      %1304 = vmatpush.msra.mxu0 0.0
      %1305 = vmatpush.msra.mxu0 0.0
      %1306 = vmatpush.msra.mxu0 0.0
      %1307 = vmatpush.msra.mxu0 0.0
      %1308 = vmatpush.msra.mxu0 0.0
      %1309 = vmatpush.msra.mxu0 0.0
      %1310 = vmatpush.msra.mxu0 %v1293
      %1311 = vmatmul.f32.gmra.mxu0 %v553
      %v1312 = vpop.f32.mrf.mxu0
      %v1313 = vadd.f32 0.0, %v1312
      %1314 = vmatmul.f32.gmra.mxu0 %v555
      %v1315 = vpop.f32.mrf.mxu0
      %v1316 = vadd.f32 0.0, %v1315
      %1317 = vmatmul.f32.gmra.mxu0 %v557
      %v1318 = vpop.f32.mrf.mxu0
      %v1319 = vadd.f32 0.0, %v1318
      %1320 = vmatmul.f32.gmra.mxu0 %v559
      %v1321 = vpop.f32.mrf.mxu0
      %v1322 = vadd.f32 0.0, %v1321
      %1323 = vmatmul.f32.gmra.mxu0 %v561
      %v1324 = vpop.f32.mrf.mxu0
      %v1325 = vadd.f32 0.0, %v1324
      %1326 = vmatmul.f32.gmra.mxu0 %v563
      %v1327 = vpop.f32.mrf.mxu0
      %v1328 = vadd.f32 0.0, %v1327
      %1329 = vmatmul.f32.gmra.mxu0 %v565
      %v1330 = vpop.f32.mrf.mxu0
      %v1331 = vadd.f32 0.0, %v1330
      %1332 = vmatmul.f32.gmra.mxu0 %v567
      %v1333 = vpop.f32.mrf.mxu0
      %v1334 = vadd.f32 0.0, %v1333
      %1335 = vmatmul.f32.gmra.mxu0 %v569
      %v1336 = vpop.f32.mrf.mxu0
      %v1337 = vadd.f32 0.0, %v1336
      %1338 = vmatmul.f32.gmra.mxu0 %v571
      %v1339 = vpop.f32.mrf.mxu0
      %v1340 = vadd.f32 0.0, %v1339
      %1341 = vmatmul.f32.gmra.mxu0 %v573
      %v1342 = vpop.f32.mrf.mxu0
      %v1343 = vadd.f32 0.0, %v1342
      %1344 = vmatmul.f32.gmra.mxu0 %v575
      %v1345 = vpop.f32.mrf.mxu0
      %v1346 = vadd.f32 0.0, %v1345
      %1347 = vmatmul.f32.gmra.mxu0 %v1005
      %v1348 = vpop.f32.mrf.mxu0
      %v1349 = vadd.f32 0.0, %v1348
      %1350 = vmatmul.f32.gmra.mxu0 %v1007
      %v1351 = vpop.f32.mrf.mxu0
      %v1352 = vadd.f32 0.0, %v1351
      %1353 = vmatmul.f32.gmra.mxu0 %v1288
      %v1354 = vpop.f32.mrf.mxu0
      %v1355 = vadd.f32 0.0, %v1354
      %1356 = vmatmul.f32.gmra.mxu0 %v1290
      %v1357 = vpop.f32.mrf.mxu0
      %v1358 = vadd.f32 0.0, %v1357
      %1359 = vdwg.mxu0
      %v1360 = vadd.f32 %v1264, %v1313
      %v1361 = vadd.f32 %v1265, %v1316
      %v1362 = vadd.f32 %v1266, %v1319
      %v1363 = vadd.f32 %v1267, %v1322
      %v1364 = vadd.f32 %v1268, %v1325
      %v1365 = vadd.f32 %v1269, %v1328
      %v1366 = vadd.f32 %v1270, %v1331
      %v1367 = vadd.f32 %v1271, %v1334
      %v1368 = vadd.f32 %v1272, %v1337
      %v1369 = vadd.f32 %v1273, %v1340
      %v1370 = vadd.f32 %v1274, %v1343
      %v1371 = vadd.f32 %v1275, %v1346
      %v1372 = vadd.f32 %v1276, %v1349
      %v1373 = vadd.f32 %v1277, %v1352
      %v1374 = vadd.f32 %v1278, %v1355
      %v1375 = vadd.f32 %v1279, %v1358
      %v1376 = vrot.slane %v473, 2
      %v1377 = vrot.slane %v474, 2
      %v1378 = vsel %vm746, %v1376, %v1377
      %v1379 = vrot.slane %v475, 2
      %v1380 = vsel %vm746, %v1377, %v1379
      %s1381 = scalar_lea.vmem %s1, 32
      %v1382 = vld [vmem:[%s1381] sm:$0xf]
      %v1383 = vsel %vm544, %v1378, 0
      %v1385 = vsel %vm544, %v1380, 0
      %v1388 = vsel %vm577, %v1382, 0
      %1390 = vmatpush.msra.mxu0 0.0
      %1391 = vmatpush.msra.mxu0 0.0
      %1392 = vmatpush.msra.mxu0 0.0
      %1393 = vmatpush.msra.mxu0 0.0
      %1394 = vmatpush.msra.mxu0 0.0
      %1395 = vmatpush.msra.mxu0 0.0
      %1396 = vmatpush.msra.mxu0 0.0
      %1397 = vmatpush.msra.mxu0 0.0
      %1398 = vmatpush.msra.mxu0 0.0
      %1399 = vmatpush.msra.mxu0 0.0
      %1400 = vmatpush.msra.mxu0 0.0
      %1401 = vmatpush.msra.mxu0 0.0
      %1402 = vmatpush.msra.mxu0 0.0
      %1403 = vmatpush.msra.mxu0 0.0
      %1404 = vmatpush.msra.mxu0 0.0
      %1405 = vmatpush.msra.mxu0 %v1388
      %1406 = vmatmul.f32.gmra.mxu0 %v797
      %v1407 = vpop.f32.mrf.mxu0
      %v1408 = vadd.f32 0.0, %v1407
      %1409 = vmatmul.f32.gmra.mxu0 %v799
      %v1410 = vpop.f32.mrf.mxu0
      %v1411 = vadd.f32 0.0, %v1410
      %1412 = vmatmul.f32.gmra.mxu0 %v801
      %v1413 = vpop.f32.mrf.mxu0
      %v1414 = vadd.f32 0.0, %v1413
      %1415 = vmatmul.f32.gmra.mxu0 %v803
      %v1416 = vpop.f32.mrf.mxu0
      %v1417 = vadd.f32 0.0, %v1416
      %1418 = vmatmul.f32.gmra.mxu0 %v805
      %v1419 = vpop.f32.mrf.mxu0
      %v1420 = vadd.f32 0.0, %v1419
      %1421 = vmatmul.f32.gmra.mxu0 %v807
      %v1422 = vpop.f32.mrf.mxu0
      %v1423 = vadd.f32 0.0, %v1422
      %1424 = vmatmul.f32.gmra.mxu0 %v809
      %v1425 = vpop.f32.mrf.mxu0
      %v1426 = vadd.f32 0.0, %v1425
      %1427 = vmatmul.f32.gmra.mxu0 %v811
      %v1428 = vpop.f32.mrf.mxu0
      %v1429 = vadd.f32 0.0, %v1428
      %1430 = vmatmul.f32.gmra.mxu0 %v813
      %v1431 = vpop.f32.mrf.mxu0
      %v1432 = vadd.f32 0.0, %v1431
      %1433 = vmatmul.f32.gmra.mxu0 %v815
      %v1434 = vpop.f32.mrf.mxu0
      %v1435 = vadd.f32 0.0, %v1434
      %1436 = vmatmul.f32.gmra.mxu0 %v817
      %v1437 = vpop.f32.mrf.mxu0
      %v1438 = vadd.f32 0.0, %v1437
      %1439 = vmatmul.f32.gmra.mxu0 %v819
      %v1440 = vpop.f32.mrf.mxu0
      %v1441 = vadd.f32 0.0, %v1440
      %1442 = vmatmul.f32.gmra.mxu0 %v1100
      %v1443 = vpop.f32.mrf.mxu0
      %v1444 = vadd.f32 0.0, %v1443
      %1445 = vmatmul.f32.gmra.mxu0 %v1102
      %v1446 = vpop.f32.mrf.mxu0
      %v1447 = vadd.f32 0.0, %v1446
      %1448 = vmatmul.f32.gmra.mxu0 %v1383
      %v1449 = vpop.f32.mrf.mxu0
      %v1450 = vadd.f32 0.0, %v1449
      %1451 = vmatmul.f32.gmra.mxu0 %v1385
      %v1452 = vpop.f32.mrf.mxu0
      %v1453 = vadd.f32 0.0, %v1452
      %1454 = vdwg.mxu0
      %v1455 = vadd.f32 %v1360, %v1408
      %v1456 = vadd.f32 %v1361, %v1411
      %v1457 = vadd.f32 %v1362, %v1414
      %v1458 = vadd.f32 %v1363, %v1417
      %v1459 = vadd.f32 %v1364, %v1420
      %v1460 = vadd.f32 %v1365, %v1423
      %v1461 = vadd.f32 %v1366, %v1426
      %v1462 = vadd.f32 %v1367, %v1429
      %v1463 = vadd.f32 %v1368, %v1432
      %v1464 = vadd.f32 %v1369, %v1435
      %v1465 = vadd.f32 %v1370, %v1438
      %v1466 = vadd.f32 %v1371, %v1441
      %v1467 = vadd.f32 %v1372, %v1444
      %v1468 = vadd.f32 %v1373, %v1447
      %v1469 = vadd.f32 %v1374, %v1450
      %v1470 = vadd.f32 %v1375, %v1453
      %1471 = vst.msk [vmem:[%s271] sm:$0xff] %vm544, %v1455
      %1472 = vst.msk [vmem:[%s271 + $0x8] sm:$0xff] %vm544, %v1456
      %1473 = vst.msk [vmem:[%s271 + $0x10] sm:$0xff] %vm544, %v1457
      %1474 = vst.msk [vmem:[%s271 + $0x18] sm:$0xff] %vm544, %v1458
      %1475 = vst.msk [vmem:[%s271 + $0x20] sm:$0xff] %vm544, %v1459
      %1476 = vst.msk [vmem:[%s271 + $0x28] sm:$0xff] %vm544, %v1460
      %1477 = vst.msk [vmem:[%s271 + $0x30] sm:$0xff] %vm544, %v1461
      %1478 = vst.msk [vmem:[%s271 + $0x38] sm:$0xff] %vm544, %v1462
      %1479 = vst.msk [vmem:[%s271 + $0x40] sm:$0xff] %vm544, %v1463
      %1480 = vst.msk [vmem:[%s271 + $0x48] sm:$0xff] %vm544, %v1464
      %1481 = vst.msk [vmem:[%s271 + $0x50] sm:$0xff] %vm544, %v1465
      %1482 = vst.msk [vmem:[%s271 + $0x58] sm:$0xff] %vm544, %v1466
      %1483 = vst.msk [vmem:[%s271 + $0x60] sm:$0xff] %vm544, %v1467
      %1484 = vst.msk [vmem:[%s271 + $0x68] sm:$0xff] %vm544, %v1468
      %1485 = vst.msk [vmem:[%s271 + $0x70] sm:$0xff] %vm544, %v1469
      %1486 = vst.msk [vmem:[%s271 + $0x78] sm:$0xff] %vm544, %v1470
      %v1487 = vsel %vm544, %v1455, 0.0
      %v1488 = vsel %vm544, %v1456, 0.0
      %v1489 = vadd.f32 %v1487, %v1488
      %v1490 = vsel %vm544, %v1457, 0.0
      %v1491 = vadd.f32 %v1489, %v1490
      %v1492 = vsel %vm544, %v1458, 0.0
      %v1493 = vadd.f32 %v1491, %v1492
      %v1494 = vsel %vm544, %v1459, 0.0
      %v1495 = vadd.f32 %v1493, %v1494
      %v1496 = vsel %vm544, %v1460, 0.0
      %v1497 = vadd.f32 %v1495, %v1496
      %v1498 = vsel %vm544, %v1461, 0.0
      %v1499 = vadd.f32 %v1497, %v1498
      %v1500 = vsel %vm544, %v1462, 0.0
      %v1501 = vadd.f32 %v1499, %v1500
      %v1502 = vsel %vm544, %v1463, 0.0
      %v1503 = vadd.f32 %v1501, %v1502
      %v1504 = vsel %vm544, %v1464, 0.0
      %v1505 = vadd.f32 %v1503, %v1504
      %v1506 = vsel %vm544, %v1465, 0.0
      %v1507 = vadd.f32 %v1505, %v1506
      %v1508 = vsel %vm544, %v1466, 0.0
      %v1509 = vadd.f32 %v1507, %v1508
      %v1510 = vsel %vm544, %v1467, 0.0
      %v1511 = vadd.f32 %v1509, %v1510
      %v1512 = vsel %vm544, %v1468, 0.0
      %v1513 = vadd.f32 %v1511, %v1512
      %v1514 = vsel %vm544, %v1469, 0.0
      %v1515 = vadd.f32 %v1513, %v1514
      %v1516 = vsel %vm544, %v1470, 0.0
      %v1517 = vadd.f32 %v1515, %v1516
      %v1518 = vrot.slane %v1517, 4
      %v1519 = vadd.f32 %v1517, %v1518
      %v1520 = vrot.slane %v1519, 2
      %v1521 = vadd.f32 %v1519, %v1520
      %v1522 = vrot.slane %v1521, 1
      %v1523 = vadd.f32 %v1521, %v1522
      %v1524 = vmul.f32 %v1455, %v1455
      %v1525 = vmul.f32 %v1456, %v1456
      %v1526 = vmul.f32 %v1457, %v1457
      %v1527 = vmul.f32 %v1458, %v1458
      %v1528 = vmul.f32 %v1459, %v1459
      %v1529 = vmul.f32 %v1460, %v1460
      %v1530 = vmul.f32 %v1461, %v1461
      %v1531 = vmul.f32 %v1462, %v1462
      %v1532 = vmul.f32 %v1463, %v1463
      %v1533 = vmul.f32 %v1464, %v1464
      %v1534 = vmul.f32 %v1465, %v1465
      %v1535 = vmul.f32 %v1466, %v1466
      %v1536 = vmul.f32 %v1467, %v1467
      %v1537 = vmul.f32 %v1468, %v1468
      %v1538 = vmul.f32 %v1469, %v1469
      %v1539 = vmul.f32 %v1470, %v1470
      %v1540 = vsel %vm544, %v1524, 0.0
      %v1541 = vsel %vm544, %v1525, 0.0
      %v1542 = vadd.f32 %v1540, %v1541
      %v1543 = vsel %vm544, %v1526, 0.0
      %v1544 = vadd.f32 %v1542, %v1543
      %v1545 = vsel %vm544, %v1527, 0.0
      %v1546 = vadd.f32 %v1544, %v1545
      %v1547 = vsel %vm544, %v1528, 0.0
      %v1548 = vadd.f32 %v1546, %v1547
      %v1549 = vsel %vm544, %v1529, 0.0
      %v1550 = vadd.f32 %v1548, %v1549
      %v1551 = vsel %vm544, %v1530, 0.0
      %v1552 = vadd.f32 %v1550, %v1551
      %v1553 = vsel %vm544, %v1531, 0.0
      %v1554 = vadd.f32 %v1552, %v1553
      %v1555 = vsel %vm544, %v1532, 0.0
      %v1556 = vadd.f32 %v1554, %v1555
      %v1557 = vsel %vm544, %v1533, 0.0
      %v1558 = vadd.f32 %v1556, %v1557
      %v1559 = vsel %vm544, %v1534, 0.0
      %v1560 = vadd.f32 %v1558, %v1559
      %v1561 = vsel %vm544, %v1535, 0.0
      %v1562 = vadd.f32 %v1560, %v1561
      %v1563 = vsel %vm544, %v1536, 0.0
      %v1564 = vadd.f32 %v1562, %v1563
      %v1565 = vsel %vm544, %v1537, 0.0
      %v1566 = vadd.f32 %v1564, %v1565
      %v1567 = vsel %vm544, %v1538, 0.0
      %v1568 = vadd.f32 %v1566, %v1567
      %v1569 = vsel %vm544, %v1539, 0.0
      %v1570 = vadd.f32 %v1568, %v1569
      %v1571 = vrot.slane %v1570, 4
      %v1572 = vadd.f32 %v1570, %v1571
      %v1573 = vrot.slane %v1572, 2
      %v1574 = vadd.f32 %v1572, %v1573
      %v1575 = vrot.slane %v1574, 1
      %v1576 = vadd.f32 %v1574, %v1575
      %vm1577 = vcmask 1040384
      %v1578 = vsel %vm1577, %v1523, %v1576
      %vm1579 = vcmask 25600
      %1580 = vst.msk [vmem:[%s279] sm:$0x3] %vm1579, %v1578
      %s1581 = smul.u32 %s21, 2
      %s1582 = sadd.s32 %s1581, %s22
      %p1583 = scmp.lt.s32.totalorder %s1582, 3
      %s1584 = scalar_select %p1583, %s1582, 3
      %s1585 = smul.addr %s1584, 16
      %s1586 = smul.addr %s1585, 8
      %s1587 = scalar_lea.vmem %s4, %s1586
      %s1588 = smul.u32 %s21, 2
      %s1589 = sadd.s32 %s1588, %s22
      %p1590 = scmp.lt.s32.totalorder %s1589, 3
      %s1591 = scalar_select %p1590, %s1589, 3
      %s1592 = smul.addr %s1591, 2
      %s1593 = scalar_lea.vmem %s5, %s1592
      // Predicated region
      $region37: #{coronary_identification_forward.4} parent=35 // pred_check
        %p1594 = pneg %p144
      $region38: #{coronary_identification_forward.4} parent=35 // pred_check_branch
        %1596 = sbr.rel (%p1594) target = $region40
      $region39: #{coronary_identification_forward.4} parent=35 // pred_region
        %s1597 = smul.u32 %s21, 2
        %s1598 = sadd.s32 %s1597, %s22
      $region40: #{coronary_identification_forward.4} parent=35 // pred_fallthru
        _
      // Predicated region
      $region41: #{coronary_identification_forward.4} parent=35 // pred_check
        %p1599 = pneg %p174
      $region42: #{coronary_identification_forward.4} parent=35 // pred_check_branch
        %1601 = sbr.rel (%p1599) target = $region44
      $region43: #{coronary_identification_forward.4} parent=35 // pred_region
        %s1602 = smul.u32 %s21, 2
        %s1603 = sadd.s32 %s1602, %s22
      $region44: #{coronary_identification_forward.4} parent=35 // pred_fallthru
        _
    $region36: #{coronary_identification_forward.4} parent=5 // pred_fallthru
      _
    %p1604 = scmp.le.s32.totalorder 2, %s12
    // Predicated region
    $region45: #{coronary_identification_forward.4} parent=5 // pred_check
      %p1605 = pneg %p1604
    $region46: #{coronary_identification_forward.4} parent=5 // pred_check_branch
      %1607 = sbr.rel (%p1605) target = $region48
    $region47: #{coronary_identification_forward.4} parent=5 // pred_region
      %s1608 = ssub.s32 %s12, 2
      // Predicated region
      $region49: #{coronary_identification_forward.4} parent=47 // pred_check
        %p1609 = pneg %p150
      $region50: #{coronary_identification_forward.4} parent=47 // pred_check_branch
        %1611 = sbr.rel (%p1609) target = $region52
      $region51: #{coronary_identification_forward.4} parent=47 // pred_region
        %s1612 = smul.u32 %s23, 2
        %s1613 = sadd.s32 %s1612, %s24
        %p1614 = scmp.lt.s32.totalorder %s1613, 3
        %s1615 = scalar_select %p1614, %s1613, 3
        %s1616 = smul.addr %s1615, 16
        %s1617 = smul.addr %s1616, 8
        %s1618 = scalar_lea.vmem %s4, %s1617
      $region52: #{coronary_identification_forward.4} parent=47 // pred_fallthru
        _
      // Predicated region
      $region53: #{coronary_identification_forward.4} parent=47 // pred_check
        %p1619 = pneg %p180
      $region54: #{coronary_identification_forward.4} parent=47 // pred_check_branch
        %1621 = sbr.rel (%p1619) target = $region56
      $region55: #{coronary_identification_forward.4} parent=47 // pred_region
        %s1622 = smul.u32 %s23, 2
        %s1623 = sadd.s32 %s1622, %s24
        %p1624 = scmp.lt.s32.totalorder %s1623, 3
        %s1625 = scalar_select %p1624, %s1623, 3
        %s1626 = smul.addr %s1625, 2
        %s1627 = scalar_lea.vmem %s5, %s1626
      $region56: #{coronary_identification_forward.4} parent=47 // pred_fallthru
        _
    $region48: #{coronary_identification_forward.4} parent=5 // pred_fallthru
      _
  $region6: #{coronary_identification_forward.4} parent=0 // loop_footer
    %s16 = sadd.s32 1, %s12
  $region7: #{coronary_identification_forward.4} parent=0 // loop_footer_branch
    %11 = sbr.rel target = $region3
  $region8: #{coronary_identification_forward.4} parent=0 // loop_exit
    _

// kernel: coronary_identification_forward.5
$region0: #{coronary_identification_forward.5}
  #allocation0 [shape = 'u32[]', space=smem, size = 0x4, offset = 0x4, fixed_abs, tag = 'smem constant byte address 0x4 - core index']
  #allocation1 [shape = 'u32[72,128]{1,0:T(1,128)}', space=vmem, size = 0x9000, scoped, tag = 'internal scratch']
  %s0 = inlined_call_operand.vmem [shape: f32[512,4], index: 0, kind: input, shape index: {}]
  %s1 = inlined_call_operand.vmem [shape: f32[512,4], index: 1, kind: input, shape index: {}]
  %s2 = inlined_call_operand.vmem [shape: f32[1,4], index: 2, kind: input, shape index: {}]
  %s3 = inlined_call_operand.vmem [shape: f32[1,4], index: 3, kind: input, shape index: {}]
  %s4 = inlined_call_operand.vmem [shape: f32[4,12], index: 4, kind: input, shape index: {}]
  %s5 = inlined_call_operand.vmem [shape: f32[1,12], index: 5, kind: input, shape index: {}]
  %s6 = inlined_call_operand.vmem [shape: f32[4,8], index: 6, kind: input, shape index: {}]
  %s7 = inlined_call_operand.vmem [shape: f32[1,8], index: 7, kind: input, shape index: {}]
  %s8 = inlined_call_operand.vmem [shape: f32[512,8], index: 8, kind: output, shape index: {}]
  %s9 = sld [smem:[#allocation0]]
  $region65: #{coronary_identification_forward.5} parent=0
    _
  %s11 = ssub.s32 1, %s9
  %s12 = scalar_select 0, %s11, %s9
  loop: start=0, step=1, limit=6
  $region2: #{coronary_identification_forward.5} parent=0 // loop_pre_header
    _
  $region3: #{coronary_identification_forward.5} parent=0 // loop_header
    %s14 = sphi 0, %s18
    %p15 = scmp.ge.s32.totalorder %s14, 6
    %s24 = sphi 0, %s26
    %s27 = sphi 0, %s24
    %s28 = sphi 0, %s27
    %s44 = sphi 0, %s28
    %s50 = sphi 0, %s52
    %s53 = sphi 0, %s50
    %s54 = sphi 0, %s53
    %s70 = sphi 0, %s54
    %s74 = sphi 0, %s74
    %s76 = sphi 0, %s74
    %s77 = sphi 0, %s76
    %s91 = sphi 0, %s77
    %s95 = sphi 0, %s95
    %s97 = sphi 0, %s95
    %s98 = sphi 0, %s97
    %s112 = sphi 0, %s98
    %s116 = sphi 0, %s116
    %s118 = sphi 0, %s116
    %s119 = sphi 0, %s118
    %s133 = sphi 0, %s119
    %s137 = sphi 0, %s137
    %s139 = sphi 0, %s137
    %s140 = sphi 0, %s139
    %s154 = sphi 0, %s140
    %s158 = sphi 0, %s158
    %s160 = sphi 0, %s158
    %s161 = sphi 0, %s160
    %s175 = sphi 0, %s161
    %s179 = sphi 0, %s179
    %s181 = sphi 0, %s179
    %s182 = sphi 0, %s181
    %s196 = sphi 0, %s182
    %s202 = sphi 0, %s204
    %s205 = sphi 0, %s202
    %s206 = sphi 0, %s205
    %s222 = sphi 0, %s206
  $region4: #{coronary_identification_forward.5} parent=0 // loop_header_branch
    %17 = sbr.rel (%p15) target = $region8
  $region5: #{coronary_identification_forward.5} parent=0 // loop_body
    %s19 = ssub.s32 %s14, 1
    %s20 = ssub.s32 %s14, 2
    %s21 = sadd.s32 %s14, 1
    %s22 = ssub.s32 %s14, %s21
    %p23 = scmp.eq.s32.totalorder %s22, 0
    %s25 = sadd.s32 %s24, 1
    %s26 = scalar_select %p23, %s24, %s25
    %p29 = pneg %p23
    %p30 = scmp.eq.s32.totalorder %s14, 3
    %p31 = por %p29, %p30
    %p32 = scmp.ne.s32.totalorder %s24, %s27
    %p33 = scmp.eq.s32.totalorder %s14, 0
    %p34 = por %p32, %p33
    %p35 = scmp.ne.s32.totalorder %s24, %s27
    %p36 = scmp.eq.s32.totalorder %s19, 3
    %p37 = por %p35, %p36
    %p38 = scmp.ne.s32.totalorder %s27, %s28
    %p39 = scmp.eq.s32.totalorder %s19, 0
    %p40 = por %p38, %p39
    %p41 = scmp.ne.s32.totalorder %s27, %s28
    %p42 = scmp.eq.s32.totalorder %s20, 3
    %p43 = por %p41, %p42
    %p45 = scmp.ne.s32.totalorder %s28, %s44
    %p46 = scmp.eq.s32.totalorder %s20, 0
    %p47 = por %p45, %p46
    %s48 = ssub.s32 %s14, %s21
    %p49 = scmp.eq.s32.totalorder %s48, 0
    %s51 = sadd.s32 %s50, 1
    %s52 = scalar_select %p49, %s50, %s51
    %p55 = pneg %p49
    %p56 = scmp.eq.s32.totalorder %s14, 3
    %p57 = por %p55, %p56
    %p58 = scmp.ne.s32.totalorder %s50, %s53
    %p59 = scmp.eq.s32.totalorder %s14, 0
    %p60 = por %p58, %p59
    %p61 = scmp.ne.s32.totalorder %s50, %s53
    %p62 = scmp.eq.s32.totalorder %s19, 3
    %p63 = por %p61, %p62
    %p64 = scmp.ne.s32.totalorder %s53, %s54
    %p65 = scmp.eq.s32.totalorder %s19, 0
    %p66 = por %p64, %p65
    %p67 = scmp.ne.s32.totalorder %s53, %s54
    %p68 = scmp.eq.s32.totalorder %s20, 3
    %p69 = por %p67, %p68
    %p71 = scmp.ne.s32.totalorder %s54, %s70
    %p72 = scmp.eq.s32.totalorder %s20, 0
    %p73 = por %p71, %p72
    %s75 = sadd.s32 %s74, 1
    %p78 = scmp.eq.s32.totalorder %s14, 3
    %p79 = scmp.ne.s32.totalorder %s74, %s76
    %p80 = scmp.eq.s32.totalorder %s14, 0
    %p81 = por %p79, %p80
    %p82 = scmp.ne.s32.totalorder %s74, %s76
    %p83 = scmp.eq.s32.totalorder %s19, 3
    %p84 = por %p82, %p83
    %p85 = scmp.ne.s32.totalorder %s76, %s77
    %p86 = scmp.eq.s32.totalorder %s19, 0
    %p87 = por %p85, %p86
    %p88 = scmp.ne.s32.totalorder %s76, %s77
    %p89 = scmp.eq.s32.totalorder %s20, 3
    %p90 = por %p88, %p89
    %p92 = scmp.ne.s32.totalorder %s77, %s91
    %p93 = scmp.eq.s32.totalorder %s20, 0
    %p94 = por %p92, %p93
    %s96 = sadd.s32 %s95, 1
    %p99 = scmp.eq.s32.totalorder %s14, 3
    %p100 = scmp.ne.s32.totalorder %s95, %s97
    %p101 = scmp.eq.s32.totalorder %s14, 0
    %p102 = por %p100, %p101
    %p103 = scmp.ne.s32.totalorder %s95, %s97
    %p104 = scmp.eq.s32.totalorder %s19, 3
    %p105 = por %p103, %p104
    %p106 = scmp.ne.s32.totalorder %s97, %s98
    %p107 = scmp.eq.s32.totalorder %s19, 0
    %p108 = por %p106, %p107
    %p109 = scmp.ne.s32.totalorder %s97, %s98
    %p110 = scmp.eq.s32.totalorder %s20, 3
    %p111 = por %p109, %p110
    %p113 = scmp.ne.s32.totalorder %s98, %s112
    %p114 = scmp.eq.s32.totalorder %s20, 0
    %p115 = por %p113, %p114
    %s117 = sadd.s32 %s116, 1
    %p120 = scmp.eq.s32.totalorder %s14, 3
    %p121 = scmp.ne.s32.totalorder %s116, %s118
    %p122 = scmp.eq.s32.totalorder %s14, 0
    %p123 = por %p121, %p122
    %p124 = scmp.ne.s32.totalorder %s116, %s118
    %p125 = scmp.eq.s32.totalorder %s19, 3
    %p126 = por %p124, %p125
    %p127 = scmp.ne.s32.totalorder %s118, %s119
    %p128 = scmp.eq.s32.totalorder %s19, 0
    %p129 = por %p127, %p128
    %p130 = scmp.ne.s32.totalorder %s118, %s119
    %p131 = scmp.eq.s32.totalorder %s20, 3
    %p132 = por %p130, %p131
    %p134 = scmp.ne.s32.totalorder %s119, %s133
    %p135 = scmp.eq.s32.totalorder %s20, 0
    %p136 = por %p134, %p135
    %s138 = sadd.s32 %s137, 1
    %p141 = scmp.eq.s32.totalorder %s14, 3
    %p142 = scmp.ne.s32.totalorder %s137, %s139
    %p143 = scmp.eq.s32.totalorder %s14, 0
    %p144 = por %p142, %p143
    %p145 = scmp.ne.s32.totalorder %s137, %s139
    %p146 = scmp.eq.s32.totalorder %s19, 3
    %p147 = por %p145, %p146
    %p148 = scmp.ne.s32.totalorder %s139, %s140
    %p149 = scmp.eq.s32.totalorder %s19, 0
    %p150 = por %p148, %p149
    %p151 = scmp.ne.s32.totalorder %s139, %s140
    %p152 = scmp.eq.s32.totalorder %s20, 3
    %p153 = por %p151, %p152
    %p155 = scmp.ne.s32.totalorder %s140, %s154
    %p156 = scmp.eq.s32.totalorder %s20, 0
    %p157 = por %p155, %p156
    %s159 = sadd.s32 %s158, 1
    %p162 = scmp.eq.s32.totalorder %s14, 3
    %p163 = scmp.ne.s32.totalorder %s158, %s160
    %p164 = scmp.eq.s32.totalorder %s14, 0
    %p165 = por %p163, %p164
    %p166 = scmp.ne.s32.totalorder %s158, %s160
    %p167 = scmp.eq.s32.totalorder %s19, 3
    %p168 = por %p166, %p167
    %p169 = scmp.ne.s32.totalorder %s160, %s161
    %p170 = scmp.eq.s32.totalorder %s19, 0
    %p171 = por %p169, %p170
    %p172 = scmp.ne.s32.totalorder %s160, %s161
    %p173 = scmp.eq.s32.totalorder %s20, 3
    %p174 = por %p172, %p173
    %p176 = scmp.ne.s32.totalorder %s161, %s175
    %p177 = scmp.eq.s32.totalorder %s20, 0
    %p178 = por %p176, %p177
    %s180 = sadd.s32 %s179, 1
    %p183 = scmp.eq.s32.totalorder %s14, 3
    %p184 = scmp.ne.s32.totalorder %s179, %s181
    %p185 = scmp.eq.s32.totalorder %s14, 0
    %p186 = por %p184, %p185
    %p187 = scmp.ne.s32.totalorder %s179, %s181
    %p188 = scmp.eq.s32.totalorder %s19, 3
    %p189 = por %p187, %p188
    %p190 = scmp.ne.s32.totalorder %s181, %s182
    %p191 = scmp.eq.s32.totalorder %s19, 0
    %p192 = por %p190, %p191
    %p193 = scmp.ne.s32.totalorder %s181, %s182
    %p194 = scmp.eq.s32.totalorder %s20, 3
    %p195 = por %p193, %p194
    %p197 = scmp.ne.s32.totalorder %s182, %s196
    %p198 = scmp.eq.s32.totalorder %s20, 0
    %p199 = por %p197, %p198
    %s200 = ssub.s32 %s14, %s21
    %p201 = scmp.eq.s32.totalorder %s200, 0
    %s203 = sadd.s32 %s202, 1
    %s204 = scalar_select %p201, %s202, %s203
    %p207 = pneg %p201
    %p208 = scmp.eq.s32.totalorder %s14, 3
    %p209 = por %p207, %p208
    %p210 = scmp.ne.s32.totalorder %s202, %s205
    %p211 = scmp.eq.s32.totalorder %s14, 0
    %p212 = por %p210, %p211
    %p213 = scmp.ne.s32.totalorder %s202, %s205
    %p214 = scmp.eq.s32.totalorder %s19, 3
    %p215 = por %p213, %p214
    %p216 = scmp.ne.s32.totalorder %s205, %s206
    %p217 = scmp.eq.s32.totalorder %s19, 0
    %p218 = por %p216, %p217
    %p219 = scmp.ne.s32.totalorder %s205, %s206
    %p220 = scmp.eq.s32.totalorder %s20, 3
    %p221 = por %p219, %p220
    %p223 = scmp.ne.s32.totalorder %s206, %s222
    %p224 = scmp.eq.s32.totalorder %s20, 0
    %p225 = por %p223, %p224
    %p226 = scmp.le.s32.totalorder 1, %s14
    %p227 = scmp.lt.s32.totalorder %s14, 5
    %p228 = pnand %p226, %p227
    %p229 = pneg %p228
    // Predicated region
    $region9: #{coronary_identification_forward.5} parent=5 // pred_check
      _
    $region10: #{coronary_identification_forward.5} parent=5 // pred_check_branch
      %231 = sbr.rel (%p228) target = $region12
    $region11: #{coronary_identification_forward.5} parent=5 // pred_region
      %s232 = ssub.s32 %s14, 1
      // Predicated region
      $region13: #{coronary_identification_forward.5} parent=11 // pred_check
        %p233 = pneg %p87
      $region14: #{coronary_identification_forward.5} parent=11 // pred_check_branch
        %235 = sbr.rel (%p233) target = $region16
      $region15: #{coronary_identification_forward.5} parent=11 // pred_region
        _
      $region16: #{coronary_identification_forward.5} parent=11 // pred_fallthru
        _
      // Predicated region
      $region17: #{coronary_identification_forward.5} parent=11 // pred_check
        %p236 = pneg %p108
      $region18: #{coronary_identification_forward.5} parent=11 // pred_check_branch
        %238 = sbr.rel (%p236) target = $region20
      $region19: #{coronary_identification_forward.5} parent=11 // pred_region
        _
      $region20: #{coronary_identification_forward.5} parent=11 // pred_fallthru
        _
      // Predicated region
      $region21: #{coronary_identification_forward.5} parent=11 // pred_check
        %p239 = pneg %p129
      $region22: #{coronary_identification_forward.5} parent=11 // pred_check_branch
        %241 = sbr.rel (%p239) target = $region24
      $region23: #{coronary_identification_forward.5} parent=11 // pred_region
        _
      $region24: #{coronary_identification_forward.5} parent=11 // pred_fallthru
        _
      // Predicated region
      $region25: #{coronary_identification_forward.5} parent=11 // pred_check
        %p242 = pneg %p150
      $region26: #{coronary_identification_forward.5} parent=11 // pred_check_branch
        %244 = sbr.rel (%p242) target = $region28
      $region27: #{coronary_identification_forward.5} parent=11 // pred_region
        _
      $region28: #{coronary_identification_forward.5} parent=11 // pred_fallthru
        _
      // Predicated region
      $region29: #{coronary_identification_forward.5} parent=11 // pred_check
        %p245 = pneg %p171
      $region30: #{coronary_identification_forward.5} parent=11 // pred_check_branch
        %247 = sbr.rel (%p245) target = $region32
      $region31: #{coronary_identification_forward.5} parent=11 // pred_region
        _
      $region32: #{coronary_identification_forward.5} parent=11 // pred_fallthru
        _
      // Predicated region
      $region33: #{coronary_identification_forward.5} parent=11 // pred_check
        %p248 = pneg %p192
      $region34: #{coronary_identification_forward.5} parent=11 // pred_check_branch
        %250 = sbr.rel (%p248) target = $region36
      $region35: #{coronary_identification_forward.5} parent=11 // pred_region
        _
      $region36: #{coronary_identification_forward.5} parent=11 // pred_fallthru
        _
    $region12: #{coronary_identification_forward.5} parent=5 // pred_fallthru
      _
    %p251 = scmp.lt.s32.totalorder %s14, 4
    // Predicated region
    $region37: #{coronary_identification_forward.5} parent=5 // pred_check
      %p252 = pneg %p251
    $region38: #{coronary_identification_forward.5} parent=5 // pred_check_branch
      %254 = sbr.rel (%p252) target = $region40
    $region39: #{coronary_identification_forward.5} parent=5 // pred_region
      // Predicated region
      $region41: #{coronary_identification_forward.5} parent=39 // pred_check
        %p255 = pneg %p34
      $region42: #{coronary_identification_forward.5} parent=39 // pred_check_branch
        %257 = sbr.rel (%p255) target = $region44
      $region43: #{coronary_identification_forward.5} parent=39 // pred_region
        %s258 = smul.u32 16, %s14
        %p259 = scmp.lt.s32.totalorder %s258, 63
        %s260 = scalar_select %p259, %s258, 63
        %s261 = smul.addr %s260, 8
        %s262 = scalar_lea.vmem %s0, %s261
        %s263 = smul.u32 16, %s14
      $region44: #{coronary_identification_forward.5} parent=39 // pred_fallthru
        _
      // Predicated region
      $region45: #{coronary_identification_forward.5} parent=39 // pred_check
        %p264 = pneg %p60
      $region46: #{coronary_identification_forward.5} parent=39 // pred_check_branch
        %266 = sbr.rel (%p264) target = $region48
      $region47: #{coronary_identification_forward.5} parent=39 // pred_region
        %s267 = smul.u32 16, %s14
        %p268 = scmp.lt.s32.totalorder %s267, 63
        %s269 = scalar_select %p268, %s267, 63
        %s270 = smul.addr %s269, 8
        %s271 = scalar_lea.vmem %s1, %s270
        %s272 = smul.u32 16, %s14
      $region48: #{coronary_identification_forward.5} parent=39 // pred_fallthru
        _
    $region40: #{coronary_identification_forward.5} parent=5 // pred_fallthru
      _
    %p273 = scmp.le.s32.totalorder 1, %s14
    %p274 = scmp.lt.s32.totalorder %s14, 5
    %p275 = pnand %p273, %p274
    %p276 = pneg %p275
    // Predicated region
    $region49: #{coronary_identification_forward.5} parent=5 // pred_check
      _
    $region50: #{coronary_identification_forward.5} parent=5 // pred_check_branch
      %278 = sbr.rel (%p275) target = $region52
    $region51: #{coronary_identification_forward.5} parent=5 // pred_region
      %s279 = ssub.s32 %s14, 1
      %s280 = smul.u32 16, %s19
      %p281 = scmp.lt.s32.totalorder %s280, 63
      %s282 = scalar_select %p281, %s280, 63
      %s283 = smul.addr %s282, 8
      %s284 = scalar_lea.vmem %s0, %s283
      %p285 = pneg %p40
      %p286 = pneg %p37
      %s287 = smul.u32 16, %s19
      %p288 = scmp.lt.s32.totalorder %s287, 63
      %s289 = scalar_select %p288, %s287, 63
      %s290 = smul.addr %s289, 8
      %s291 = scalar_lea.vmem %s1, %s290
      %p292 = pneg %p66
      %p293 = pneg %p63
      %p294 = pneg %p87
      %p295 = pneg %p84
      %p296 = pneg %p108
      %p297 = pneg %p105
      %p298 = pneg %p129
      %p299 = pneg %p126
      %p300 = pneg %p150
      %p301 = pneg %p147
      %p302 = pneg %p171
      %p303 = pneg %p168
      %p304 = pneg %p192
      %p305 = pneg %p189
      %p306 = pneg %p218
      %p307 = pneg %p215
      %s308 = smul.u32 16, %s19
      %p309 = scmp.lt.s32.totalorder %s308, 63
      %s310 = scalar_select %p309, %s308, 63
      %s311 = smul.addr %s310, 8
      %s312 = scalar_lea.vmem %s8, %s311
      %s313 = smul.u32 16, %s19
      %p314 = scmp.lt.s32.totalorder %s313, 63
      %s315 = scalar_select %p314, %s313, 63
      %s316 = smul.addr %s315, 8
      %s317 = scalar_lea.vmem %s0, %s316
      %s318 = smul.u32 16, %s19
      %s319 = smul.u32 16, %s19
      %p320 = scmp.lt.s32.totalorder %s319, 63
      %s321 = scalar_select %p320, %s319, 63
      %s322 = smul.addr %s321, 8
      %s323 = scalar_lea.vmem %s1, %s322
      %s324 = smul.u32 16, %s19
      %s325 = smul.u32 16, %s19
      %p326 = scmp.lt.s32.totalorder %s325, 63
      %s327 = scalar_select %p326, %s325, 63
      %s328 = smul.addr %s327, 8
      %s329 = scalar_lea.vmem %s8, %s328
      %s330 = smul.u32 16, %s19
      %v331 = vld [vmem:[%s317] sm:$0xff]
      %v332 = vld [vmem:[%s317 + $0x8] sm:$0xff]
      %v333 = vld [vmem:[%s317 + $0x10] sm:$0xff]
      %v334 = vld [vmem:[%s317 + $0x18] sm:$0xff]
      %v335 = vld [vmem:[%s317 + $0x20] sm:$0xff]
      %v336 = vld [vmem:[%s317 + $0x28] sm:$0xff]
      %v337 = vld [vmem:[%s317 + $0x30] sm:$0xff]
      %v338 = vld [vmem:[%s317 + $0x38] sm:$0xff]
      %v339 = vld [vmem:[%s317 + $0x40] sm:$0xff]
      %v340 = vld [vmem:[%s317 + $0x48] sm:$0xff]
      %v341 = vld [vmem:[%s317 + $0x50] sm:$0xff]
      %v342 = vld [vmem:[%s317 + $0x58] sm:$0xff]
      %v343 = vld [vmem:[%s317 + $0x60] sm:$0xff]
      %v344 = vld [vmem:[%s317 + $0x68] sm:$0xff]
      %v345 = vld [vmem:[%s317 + $0x70] sm:$0xff]
      %v346 = vld [vmem:[%s317 + $0x78] sm:$0xff]
      %v347 = vld [vmem:[%s323] sm:$0xff]
      %v348 = vld [vmem:[%s323 + $0x8] sm:$0xff]
      %v349 = vld [vmem:[%s323 + $0x10] sm:$0xff]
      %v350 = vld [vmem:[%s323 + $0x18] sm:$0xff]
      %v351 = vld [vmem:[%s323 + $0x20] sm:$0xff]
      %v352 = vld [vmem:[%s323 + $0x28] sm:$0xff]
      %v353 = vld [vmem:[%s323 + $0x30] sm:$0xff]
      %v354 = vld [vmem:[%s323 + $0x38] sm:$0xff]
      %v355 = vld [vmem:[%s323 + $0x40] sm:$0xff]
      %v356 = vld [vmem:[%s323 + $0x48] sm:$0xff]
      %v357 = vld [vmem:[%s323 + $0x50] sm:$0xff]
      %v358 = vld [vmem:[%s323 + $0x58] sm:$0xff]
      %v359 = vld [vmem:[%s323 + $0x60] sm:$0xff]
      %v360 = vld [vmem:[%s323 + $0x68] sm:$0xff]
      %v361 = vld [vmem:[%s323 + $0x70] sm:$0xff]
      %v362 = vld [vmem:[%s323 + $0x78] sm:$0xff]
      %v363 = vld [vmem:[%s2] sm:$0x1]
      %v365 = vperm.slane %v363, 0
      %v367 = vmul.f32 %v347, %v365
      %v368 = vmul.f32 %v348, %v365
      %v369 = vmul.f32 %v349, %v365
      %v370 = vmul.f32 %v350, %v365
      %v371 = vmul.f32 %v351, %v365
      %v372 = vmul.f32 %v352, %v365
      %v373 = vmul.f32 %v353, %v365
      %v374 = vmul.f32 %v354, %v365
      %v375 = vmul.f32 %v355, %v365
      %v376 = vmul.f32 %v356, %v365
      %v377 = vmul.f32 %v357, %v365
      %v378 = vmul.f32 %v358, %v365
      %v379 = vmul.f32 %v359, %v365
      %v380 = vmul.f32 %v360, %v365
      %v381 = vmul.f32 %v361, %v365
      %v382 = vmul.f32 %v362, %v365
      %v383 = vld [vmem:[%s3] sm:$0x1]
      %v385 = vperm.slane %v383, 0
      %v387 = vadd.f32 %v367, %v385
      %v388 = vadd.f32 %v368, %v385
      %v389 = vadd.f32 %v369, %v385
      %v390 = vadd.f32 %v370, %v385
      %v391 = vadd.f32 %v371, %v385
      %v392 = vadd.f32 %v372, %v385
      %v393 = vadd.f32 %v373, %v385
      %v394 = vadd.f32 %v374, %v385
      %v395 = vadd.f32 %v375, %v385
      %v396 = vadd.f32 %v376, %v385
      %v397 = vadd.f32 %v377, %v385
      %v398 = vadd.f32 %v378, %v385
      %v399 = vadd.f32 %v379, %v385
      %v400 = vadd.f32 %v380, %v385
      %v401 = vadd.f32 %v381, %v385
      %v402 = vadd.f32 %v382, %v385
      %v403 = vmax.f32 %v387, 0.0
      %v404 = vmax.f32 %v388, 0.0
      %v405 = vmax.f32 %v389, 0.0
      %v406 = vmax.f32 %v390, 0.0
      %v407 = vmax.f32 %v391, 0.0
      %v408 = vmax.f32 %v392, 0.0
      %v409 = vmax.f32 %v393, 0.0
      %v410 = vmax.f32 %v394, 0.0
      %v411 = vmax.f32 %v395, 0.0
      %v412 = vmax.f32 %v396, 0.0
      %v413 = vmax.f32 %v397, 0.0
      %v414 = vmax.f32 %v398, 0.0
      %v415 = vmax.f32 %v399, 0.0
      %v416 = vmax.f32 %v400, 0.0
      %v417 = vmax.f32 %v401, 0.0
      %v418 = vmax.f32 %v402, 0.0
      %v419 = vld [vmem:[%s4] sm:$0xf]
      %v420 = vld [vmem:[%s5] sm:$0x1]
      %v422 = vperm.slane %v420, 0
      %vm424 = vcmask 31744
      %v426 = vsel %vm424, %v331, 0
      %v429 = vsel %vm424, %v332, 0
      %v432 = vsel %vm424, %v333, 0
      %v435 = vsel %vm424, %v334, 0
      %v438 = vsel %vm424, %v335, 0
      %v441 = vsel %vm424, %v336, 0
      %v444 = vsel %vm424, %v337, 0
      %v447 = vsel %vm424, %v338, 0
      %v450 = vsel %vm424, %v339, 0
      %v453 = vsel %vm424, %v340, 0
      %v456 = vsel %vm424, %v341, 0
      %v459 = vsel %vm424, %v342, 0
      %v462 = vsel %vm424, %v343, 0
      %v465 = vsel %vm424, %v344, 0
      %v468 = vsel %vm424, %v345, 0
      %v471 = vsel %vm424, %v346, 0
      %vm473 = vcmask 1043456
      %v475 = vsel %vm473, %v419, 0
      %477 = vmatpush.msra.mxu0 0.0
      %478 = vmatpush.msra.mxu0 0.0
      %479 = vmatpush.msra.mxu0 0.0
      %480 = vmatpush.msra.mxu0 0.0
      %481 = vmatpush.msra.mxu0 0.0
      %482 = vmatpush.msra.mxu0 0.0
      %483 = vmatpush.msra.mxu0 0.0
      %484 = vmatpush.msra.mxu0 0.0
      %485 = vmatpush.msra.mxu0 0.0
      %486 = vmatpush.msra.mxu0 0.0
      %487 = vmatpush.msra.mxu0 0.0
      %488 = vmatpush.msra.mxu0 0.0
      %489 = vmatpush.msra.mxu0 0.0
      %490 = vmatpush.msra.mxu0 0.0
      %491 = vmatpush.msra.mxu0 0.0
      %492 = vmatpush.msra.mxu0 %v475
      %493 = vmatmul.f32.gmra.mxu0 %v426
      %v494 = vpop.f32.mrf.mxu0
      %v495 = vadd.f32 %v422, %v494
      %496 = vmatmul.f32.gmra.mxu0 %v429
      %v497 = vpop.f32.mrf.mxu0
      %v498 = vadd.f32 %v422, %v497
      %499 = vmatmul.f32.gmra.mxu0 %v432
      %v500 = vpop.f32.mrf.mxu0
      %v501 = vadd.f32 %v422, %v500
      %502 = vmatmul.f32.gmra.mxu0 %v435
      %v503 = vpop.f32.mrf.mxu0
      %v504 = vadd.f32 %v422, %v503
      %505 = vmatmul.f32.gmra.mxu0 %v438
      %v506 = vpop.f32.mrf.mxu0
      %v507 = vadd.f32 %v422, %v506
      %508 = vmatmul.f32.gmra.mxu0 %v441
      %v509 = vpop.f32.mrf.mxu0
      %v510 = vadd.f32 %v422, %v509
      %511 = vmatmul.f32.gmra.mxu0 %v444
      %v512 = vpop.f32.mrf.mxu0
      %v513 = vadd.f32 %v422, %v512
      %514 = vmatmul.f32.gmra.mxu0 %v447
      %v515 = vpop.f32.mrf.mxu0
      %v516 = vadd.f32 %v422, %v515
      %517 = vmatmul.f32.gmra.mxu0 %v450
      %v518 = vpop.f32.mrf.mxu0
      %v519 = vadd.f32 %v422, %v518
      %520 = vmatmul.f32.gmra.mxu0 %v453
      %v521 = vpop.f32.mrf.mxu0
      %v522 = vadd.f32 %v422, %v521
      %523 = vmatmul.f32.gmra.mxu0 %v456
      %v524 = vpop.f32.mrf.mxu0
      %v525 = vadd.f32 %v422, %v524
      %526 = vmatmul.f32.gmra.mxu0 %v459
      %v527 = vpop.f32.mrf.mxu0
      %v528 = vadd.f32 %v422, %v527
      %529 = vmatmul.f32.gmra.mxu0 %v462
      %v530 = vpop.f32.mrf.mxu0
      %v531 = vadd.f32 %v422, %v530
      %532 = vmatmul.f32.gmra.mxu0 %v465
      %v533 = vpop.f32.mrf.mxu0
      %v534 = vadd.f32 %v422, %v533
      %535 = vmatmul.f32.gmra.mxu0 %v468
      %v536 = vpop.f32.mrf.mxu0
      %v537 = vadd.f32 %v422, %v536
      %538 = vmatmul.f32.gmra.mxu0 %v471
      %v539 = vpop.f32.mrf.mxu0
      %v540 = vadd.f32 %v422, %v539
      %541 = vdwg.mxu0
      %558 = vrot.lane.b32.xlu0 %v495, 124
      %v559 = vpop.permute.xlu0 %558
      %560 = vrot.lane.b32.xlu0 %v498, 124
      %v561 = vpop.permute.xlu0 %560
      %562 = vrot.lane.b32.xlu0 %v501, 124
      %v563 = vpop.permute.xlu0 %562
      %564 = vrot.lane.b32.xlu0 %v504, 124
      %v565 = vpop.permute.xlu0 %564
      %566 = vrot.lane.b32.xlu0 %v507, 124
      %v567 = vpop.permute.xlu0 %566
      %568 = vrot.lane.b32.xlu0 %v510, 124
      %v569 = vpop.permute.xlu0 %568
      %570 = vrot.lane.b32.xlu0 %v513, 124
      %v571 = vpop.permute.xlu0 %570
      %572 = vrot.lane.b32.xlu0 %v516, 124
      %v573 = vpop.permute.xlu0 %572
      %574 = vrot.lane.b32.xlu0 %v519, 124
      %v575 = vpop.permute.xlu0 %574
      %576 = vrot.lane.b32.xlu0 %v522, 124
      %v577 = vpop.permute.xlu0 %576
      %578 = vrot.lane.b32.xlu0 %v525, 124
      %v579 = vpop.permute.xlu0 %578
      %580 = vrot.lane.b32.xlu0 %v528, 124
      %v581 = vpop.permute.xlu0 %580
      %582 = vrot.lane.b32.xlu0 %v531, 124
      %v583 = vpop.permute.xlu0 %582
      %584 = vrot.lane.b32.xlu0 %v534, 124
      %v585 = vpop.permute.xlu0 %584
      %586 = vrot.lane.b32.xlu0 %v537, 124
      %v587 = vpop.permute.xlu0 %586
      %588 = vrot.lane.b32.xlu0 %v540, 124
      %v589 = vpop.permute.xlu0 %588
      %v606 = vmul.f32 %v495, %v559
      %v607 = vmul.f32 %v498, %v561
      %v608 = vmul.f32 %v501, %v563
      %v609 = vmul.f32 %v504, %v565
      %v610 = vmul.f32 %v507, %v567
      %v611 = vmul.f32 %v510, %v569
      %v612 = vmul.f32 %v513, %v571
      %v613 = vmul.f32 %v516, %v573
      %v614 = vmul.f32 %v519, %v575
      %v615 = vmul.f32 %v522, %v577
      %v616 = vmul.f32 %v525, %v579
      %v617 = vmul.f32 %v528, %v581
      %v618 = vmul.f32 %v531, %v583
      %v619 = vmul.f32 %v534, %v585
      %v620 = vmul.f32 %v537, %v587
      %v621 = vmul.f32 %v540, %v589
      %v622 = vsel %vm424, %v606, -inf
      %623 = vmax.xlane.f32.xlu0 %v622
      %v624 = vpop.xlane.xlu0 %623
      %v625 = vsel %vm424, %v607, -inf
      %626 = vmax.xlane.f32.xlu0 %v625
      %v627 = vpop.xlane.xlu0 %626
      %v628 = vsel %vm424, %v608, -inf
      %629 = vmax.xlane.f32.xlu0 %v628
      %v630 = vpop.xlane.xlu0 %629
      %v631 = vsel %vm424, %v609, -inf
      %632 = vmax.xlane.f32.xlu0 %v631
      %v633 = vpop.xlane.xlu0 %632
      %v634 = vsel %vm424, %v610, -inf
      %635 = vmax.xlane.f32.xlu0 %v634
      %v636 = vpop.xlane.xlu0 %635
      %v637 = vsel %vm424, %v611, -inf
      %638 = vmax.xlane.f32.xlu0 %v637
      %v639 = vpop.xlane.xlu0 %638
      %v640 = vsel %vm424, %v612, -inf
      %641 = vmax.xlane.f32.xlu0 %v640
      %v642 = vpop.xlane.xlu0 %641
      %v643 = vsel %vm424, %v613, -inf
      %644 = vmax.xlane.f32.xlu0 %v643
      %v645 = vpop.xlane.xlu0 %644
      %v646 = vsel %vm424, %v614, -inf
      %647 = vmax.xlane.f32.xlu0 %v646
      %v648 = vpop.xlane.xlu0 %647
      %v649 = vsel %vm424, %v615, -inf
      %650 = vmax.xlane.f32.xlu0 %v649
      %v651 = vpop.xlane.xlu0 %650
      %v652 = vsel %vm424, %v616, -inf
      %653 = vmax.xlane.f32.xlu0 %v652
      %v654 = vpop.xlane.xlu0 %653
      %v655 = vsel %vm424, %v617, -inf
      %656 = vmax.xlane.f32.xlu0 %v655
      %v657 = vpop.xlane.xlu0 %656
      %v658 = vsel %vm424, %v618, -inf
      %659 = vmax.xlane.f32.xlu0 %v658
      %v660 = vpop.xlane.xlu0 %659
      %v661 = vsel %vm424, %v619, -inf
      %662 = vmax.xlane.f32.xlu0 %v661
      %v663 = vpop.xlane.xlu0 %662
      %v664 = vsel %vm424, %v620, -inf
      %665 = vmax.xlane.f32.xlu0 %v664
      %v666 = vpop.xlane.xlu0 %665
      %v667 = vsel %vm424, %v621, -inf
      %668 = vmax.xlane.f32.xlu0 %v667
      %v669 = vpop.xlane.xlu0 %668
      %v670 = vsub.f32 %v606, %v624
      %v671 = vsub.f32 %v607, %v627
      %v672 = vsub.f32 %v608, %v630
      %v673 = vsub.f32 %v609, %v633
      %v674 = vsub.f32 %v610, %v636
      %v675 = vsub.f32 %v611, %v639
      %v676 = vsub.f32 %v612, %v642
      %v677 = vsub.f32 %v613, %v645
      %v678 = vsub.f32 %v614, %v648
      %v679 = vsub.f32 %v615, %v651
      %v680 = vsub.f32 %v616, %v654
      %v681 = vsub.f32 %v617, %v657
      %v682 = vsub.f32 %v618, %v660
      %v683 = vsub.f32 %v619, %v663
      %v684 = vsub.f32 %v620, %v666
      %v685 = vsub.f32 %v621, %v669
      %v686 = vmul.f32 %v670, 1.442695
      %v687 = vpow.pop %v686
      %v688 = vmul.f32 %v671, 1.442695
      %v689 = vpow.pop %v688
      %v690 = vmul.f32 %v672, 1.442695
      %v691 = vpow.pop %v690
      %v692 = vmul.f32 %v673, 1.442695
      %v693 = vpow.pop %v692
      %v694 = vmul.f32 %v674, 1.442695
      %v695 = vpow.pop %v694
      %v696 = vmul.f32 %v675, 1.442695
      %v697 = vpow.pop %v696
      %v698 = vmul.f32 %v676, 1.442695
      %v699 = vpow.pop %v698
      %v700 = vmul.f32 %v677, 1.442695
      %v701 = vpow.pop %v700
      %v702 = vmul.f32 %v678, 1.442695
      %v703 = vpow.pop %v702
      %v704 = vmul.f32 %v679, 1.442695
      %v705 = vpow.pop %v704
      %v706 = vmul.f32 %v680, 1.442695
      %v707 = vpow.pop %v706
      %v708 = vmul.f32 %v681, 1.442695
      %v709 = vpow.pop %v708
      %v710 = vmul.f32 %v682, 1.442695
      %v711 = vpow.pop %v710
      %v712 = vmul.f32 %v683, 1.442695
      %v713 = vpow.pop %v712
      %v714 = vmul.f32 %v684, 1.442695
      %v715 = vpow.pop %v714
      %v716 = vmul.f32 %v685, 1.442695
      %v717 = vpow.pop %v716
      %v718 = vsel %vm424, %v687, 0.0
      %719 = vadd.xlane.f32.xlu0 %v718
      %v720 = vpop.xlane.xlu0 %719
      %v721 = vsel %vm424, %v689, 0.0
      %722 = vadd.xlane.f32.xlu0 %v721
      %v723 = vpop.xlane.xlu0 %722
      %v724 = vsel %vm424, %v691, 0.0
      %725 = vadd.xlane.f32.xlu0 %v724
      %v726 = vpop.xlane.xlu0 %725
      %v727 = vsel %vm424, %v693, 0.0
      %728 = vadd.xlane.f32.xlu0 %v727
      %v729 = vpop.xlane.xlu0 %728
      %v730 = vsel %vm424, %v695, 0.0
      %731 = vadd.xlane.f32.xlu0 %v730
      %v732 = vpop.xlane.xlu0 %731
      %v733 = vsel %vm424, %v697, 0.0
      %734 = vadd.xlane.f32.xlu0 %v733
      %v735 = vpop.xlane.xlu0 %734
      %v736 = vsel %vm424, %v699, 0.0
      %737 = vadd.xlane.f32.xlu0 %v736
      %v738 = vpop.xlane.xlu0 %737
      %v739 = vsel %vm424, %v701, 0.0
      %740 = vadd.xlane.f32.xlu0 %v739
      %v741 = vpop.xlane.xlu0 %740
      %v742 = vsel %vm424, %v703, 0.0
      %743 = vadd.xlane.f32.xlu0 %v742
      %v744 = vpop.xlane.xlu0 %743
      %v745 = vsel %vm424, %v705, 0.0
      %746 = vadd.xlane.f32.xlu0 %v745
      %v747 = vpop.xlane.xlu0 %746
      %v748 = vsel %vm424, %v707, 0.0
      %749 = vadd.xlane.f32.xlu0 %v748
      %v750 = vpop.xlane.xlu0 %749
      %v751 = vsel %vm424, %v709, 0.0
      %752 = vadd.xlane.f32.xlu0 %v751
      %v753 = vpop.xlane.xlu0 %752
      %v754 = vsel %vm424, %v711, 0.0
      %755 = vadd.xlane.f32.xlu0 %v754
      %v756 = vpop.xlane.xlu0 %755
      %v757 = vsel %vm424, %v713, 0.0
      %758 = vadd.xlane.f32.xlu0 %v757
      %v759 = vpop.xlane.xlu0 %758
      %v760 = vsel %vm424, %v715, 0.0
      %761 = vadd.xlane.f32.xlu0 %v760
      %v762 = vpop.xlane.xlu0 %761
      %v763 = vsel %vm424, %v717, 0.0
      %764 = vadd.xlane.f32.xlu0 %v763
      %v765 = vpop.xlane.xlu0 %764
      %v766 = vrcp.pop %v720
      %v767 = vmul.f32 %v720, %v766
      %v768 = vsub.f32 1.0, %v767
      %v769 = vmul.f32 %v766, %v768
      %v770 = vadd.f32 %v766, %v769
      %vm771 = vweird.f32 %v720
      %vm772 = vweird.f32 %v766
      %vm773 = vmor %vm771, %vm772
      %v774 = vsel %vm773, %v766, %v770
      %v775 = vand.u32 2147483647, %v720
      %vm776 = vcmp.eq.f32.partialorder %v775, 8.507059e+37
      %v777 = vand.u32 %v720, 2147483648
      %v778 = vor.u32 1.1754944e-38, %v777
      %v779 = vsel %vm776, %v778, %v774
      %v780 = vrcp.pop %v723
      %v781 = vmul.f32 %v723, %v780
      %v782 = vsub.f32 1.0, %v781
      %v783 = vmul.f32 %v780, %v782
      %v784 = vadd.f32 %v780, %v783
      %vm785 = vweird.f32 %v723
      %vm786 = vweird.f32 %v780
      %vm787 = vmor %vm785, %vm786
      %v788 = vsel %vm787, %v780, %v784
      %v789 = vand.u32 2147483647, %v723
      %vm790 = vcmp.eq.f32.partialorder %v789, 8.507059e+37
      %v791 = vand.u32 %v723, 2147483648
      %v792 = vor.u32 1.1754944e-38, %v791
      %v793 = vsel %vm790, %v792, %v788
      %v794 = vrcp.pop %v726
      %v795 = vmul.f32 %v726, %v794
      %v796 = vsub.f32 1.0, %v795
      %v797 = vmul.f32 %v794, %v796
      %v798 = vadd.f32 %v794, %v797
      %vm799 = vweird.f32 %v726
      %vm800 = vweird.f32 %v794
      %vm801 = vmor %vm799, %vm800
      %v802 = vsel %vm801, %v794, %v798
      %v803 = vand.u32 2147483647, %v726
      %vm804 = vcmp.eq.f32.partialorder %v803, 8.507059e+37
      %v805 = vand.u32 %v726, 2147483648
      %v806 = vor.u32 1.1754944e-38, %v805
      %v807 = vsel %vm804, %v806, %v802
      %v808 = vrcp.pop %v729
      %v809 = vmul.f32 %v729, %v808
      %v810 = vsub.f32 1.0, %v809
      %v811 = vmul.f32 %v808, %v810
      %v812 = vadd.f32 %v808, %v811
      %vm813 = vweird.f32 %v729
      %vm814 = vweird.f32 %v808
      %vm815 = vmor %vm813, %vm814
      %v816 = vsel %vm815, %v808, %v812
      %v817 = vand.u32 2147483647, %v729
      %vm818 = vcmp.eq.f32.partialorder %v817, 8.507059e+37
      %v819 = vand.u32 %v729, 2147483648
      %v820 = vor.u32 1.1754944e-38, %v819
      %v821 = vsel %vm818, %v820, %v816
      %v822 = vrcp.pop %v732
      %v823 = vmul.f32 %v732, %v822
      %v824 = vsub.f32 1.0, %v823
      %v825 = vmul.f32 %v822, %v824
      %v826 = vadd.f32 %v822, %v825
      %vm827 = vweird.f32 %v732
      %vm828 = vweird.f32 %v822
      %vm829 = vmor %vm827, %vm828
      %v830 = vsel %vm829, %v822, %v826
      %v831 = vand.u32 2147483647, %v732
      %vm832 = vcmp.eq.f32.partialorder %v831, 8.507059e+37
      %v833 = vand.u32 %v732, 2147483648
      %v834 = vor.u32 1.1754944e-38, %v833
      %v835 = vsel %vm832, %v834, %v830
      %v836 = vrcp.pop %v735
      %v837 = vmul.f32 %v735, %v836
      %v838 = vsub.f32 1.0, %v837
      %v839 = vmul.f32 %v836, %v838
      %v840 = vadd.f32 %v836, %v839
      %vm841 = vweird.f32 %v735
      %vm842 = vweird.f32 %v836
      %vm843 = vmor %vm841, %vm842
      %v844 = vsel %vm843, %v836, %v840
      %v845 = vand.u32 2147483647, %v735
      %vm846 = vcmp.eq.f32.partialorder %v845, 8.507059e+37
      %v847 = vand.u32 %v735, 2147483648
      %v848 = vor.u32 1.1754944e-38, %v847
      %v849 = vsel %vm846, %v848, %v844
      %v850 = vrcp.pop %v738
      %v851 = vmul.f32 %v738, %v850
      %v852 = vsub.f32 1.0, %v851
      %v853 = vmul.f32 %v850, %v852
      %v854 = vadd.f32 %v850, %v853
      %vm855 = vweird.f32 %v738
      %vm856 = vweird.f32 %v850
      %vm857 = vmor %vm855, %vm856
      %v858 = vsel %vm857, %v850, %v854
      %v859 = vand.u32 2147483647, %v738
      %vm860 = vcmp.eq.f32.partialorder %v859, 8.507059e+37
      %v861 = vand.u32 %v738, 2147483648
      %v862 = vor.u32 1.1754944e-38, %v861
      %v863 = vsel %vm860, %v862, %v858
      %v864 = vrcp.pop %v741
      %v865 = vmul.f32 %v741, %v864
      %v866 = vsub.f32 1.0, %v865
      %v867 = vmul.f32 %v864, %v866
      %v868 = vadd.f32 %v864, %v867
      %vm869 = vweird.f32 %v741
      %vm870 = vweird.f32 %v864
      %vm871 = vmor %vm869, %vm870
      %v872 = vsel %vm871, %v864, %v868
      %v873 = vand.u32 2147483647, %v741
      %vm874 = vcmp.eq.f32.partialorder %v873, 8.507059e+37
      %v875 = vand.u32 %v741, 2147483648
      %v876 = vor.u32 1.1754944e-38, %v875
      %v877 = vsel %vm874, %v876, %v872
      %v878 = vrcp.pop %v744
      %v879 = vmul.f32 %v744, %v878
      %v880 = vsub.f32 1.0, %v879
      %v881 = vmul.f32 %v878, %v880
      %v882 = vadd.f32 %v878, %v881
      %vm883 = vweird.f32 %v744
      %vm884 = vweird.f32 %v878
      %vm885 = vmor %vm883, %vm884
      %v886 = vsel %vm885, %v878, %v882
      %v887 = vand.u32 2147483647, %v744
      %vm888 = vcmp.eq.f32.partialorder %v887, 8.507059e+37
      %v889 = vand.u32 %v744, 2147483648
      %v890 = vor.u32 1.1754944e-38, %v889
      %v891 = vsel %vm888, %v890, %v886
      %v892 = vrcp.pop %v747
      %v893 = vmul.f32 %v747, %v892
      %v894 = vsub.f32 1.0, %v893
      %v895 = vmul.f32 %v892, %v894
      %v896 = vadd.f32 %v892, %v895
      %vm897 = vweird.f32 %v747
      %vm898 = vweird.f32 %v892
      %vm899 = vmor %vm897, %vm898
      %v900 = vsel %vm899, %v892, %v896
      %v901 = vand.u32 2147483647, %v747
      %vm902 = vcmp.eq.f32.partialorder %v901, 8.507059e+37
      %v903 = vand.u32 %v747, 2147483648
      %v904 = vor.u32 1.1754944e-38, %v903
      %v905 = vsel %vm902, %v904, %v900
      %v906 = vrcp.pop %v750
      %v907 = vmul.f32 %v750, %v906
      %v908 = vsub.f32 1.0, %v907
      %v909 = vmul.f32 %v906, %v908
      %v910 = vadd.f32 %v906, %v909
      %vm911 = vweird.f32 %v750
      %vm912 = vweird.f32 %v906
      %vm913 = vmor %vm911, %vm912
      %v914 = vsel %vm913, %v906, %v910
      %v915 = vand.u32 2147483647, %v750
      %vm916 = vcmp.eq.f32.partialorder %v915, 8.507059e+37
      %v917 = vand.u32 %v750, 2147483648
      %v918 = vor.u32 1.1754944e-38, %v917
      %v919 = vsel %vm916, %v918, %v914
      %v920 = vrcp.pop %v753
      %v921 = vmul.f32 %v753, %v920
      %v922 = vsub.f32 1.0, %v921
      %v923 = vmul.f32 %v920, %v922
      %v924 = vadd.f32 %v920, %v923
      %vm925 = vweird.f32 %v753
      %vm926 = vweird.f32 %v920
      %vm927 = vmor %vm925, %vm926
      %v928 = vsel %vm927, %v920, %v924
      %v929 = vand.u32 2147483647, %v753
      %vm930 = vcmp.eq.f32.partialorder %v929, 8.507059e+37
      %v931 = vand.u32 %v753, 2147483648
      %v932 = vor.u32 1.1754944e-38, %v931
      %v933 = vsel %vm930, %v932, %v928
      %v934 = vrcp.pop %v756
      %v935 = vmul.f32 %v756, %v934
      %v936 = vsub.f32 1.0, %v935
      %v937 = vmul.f32 %v934, %v936
      %v938 = vadd.f32 %v934, %v937
      %vm939 = vweird.f32 %v756
      %vm940 = vweird.f32 %v934
      %vm941 = vmor %vm939, %vm940
      %v942 = vsel %vm941, %v934, %v938
      %v943 = vand.u32 2147483647, %v756
      %vm944 = vcmp.eq.f32.partialorder %v943, 8.507059e+37
      %v945 = vand.u32 %v756, 2147483648
      %v946 = vor.u32 1.1754944e-38, %v945
      %v947 = vsel %vm944, %v946, %v942
      %v948 = vrcp.pop %v759
      %v949 = vmul.f32 %v759, %v948
      %v950 = vsub.f32 1.0, %v949
      %v951 = vmul.f32 %v948, %v950
      %v952 = vadd.f32 %v948, %v951
      %vm953 = vweird.f32 %v759
      %vm954 = vweird.f32 %v948
      %vm955 = vmor %vm953, %vm954
      %v956 = vsel %vm955, %v948, %v952
      %v957 = vand.u32 2147483647, %v759
      %vm958 = vcmp.eq.f32.partialorder %v957, 8.507059e+37
      %v959 = vand.u32 %v759, 2147483648
      %v960 = vor.u32 1.1754944e-38, %v959
      %v961 = vsel %vm958, %v960, %v956
      %v962 = vrcp.pop %v762
      %v963 = vmul.f32 %v762, %v962
      %v964 = vsub.f32 1.0, %v963
      %v965 = vmul.f32 %v962, %v964
      %v966 = vadd.f32 %v962, %v965
      %vm967 = vweird.f32 %v762
      %vm968 = vweird.f32 %v962
      %vm969 = vmor %vm967, %vm968
      %v970 = vsel %vm969, %v962, %v966
      %v971 = vand.u32 2147483647, %v762
      %vm972 = vcmp.eq.f32.partialorder %v971, 8.507059e+37
      %v973 = vand.u32 %v762, 2147483648
      %v974 = vor.u32 1.1754944e-38, %v973
      %v975 = vsel %vm972, %v974, %v970
      %v976 = vrcp.pop %v765
      %v977 = vmul.f32 %v765, %v976
      %v978 = vsub.f32 1.0, %v977
      %v979 = vmul.f32 %v976, %v978
      %v980 = vadd.f32 %v976, %v979
      %vm981 = vweird.f32 %v765
      %vm982 = vweird.f32 %v976
      %vm983 = vmor %vm981, %vm982
      %v984 = vsel %vm983, %v976, %v980
      %v985 = vand.u32 2147483647, %v765
      %vm986 = vcmp.eq.f32.partialorder %v985, 8.507059e+37
      %v987 = vand.u32 %v765, 2147483648
      %v988 = vor.u32 1.1754944e-38, %v987
      %v989 = vsel %vm986, %v988, %v984
      %v990 = vmul.f32 %v687, %v779
      %v991 = vmul.f32 %v689, %v793
      %v992 = vmul.f32 %v691, %v807
      %v993 = vmul.f32 %v693, %v821
      %v994 = vmul.f32 %v695, %v835
      %v995 = vmul.f32 %v697, %v849
      %v996 = vmul.f32 %v699, %v863
      %v997 = vmul.f32 %v701, %v877
      %v998 = vmul.f32 %v703, %v891
      %v999 = vmul.f32 %v705, %v905
      %v1000 = vmul.f32 %v707, %v919
      %v1001 = vmul.f32 %v709, %v933
      %v1002 = vmul.f32 %v711, %v947
      %v1003 = vmul.f32 %v713, %v961
      %v1004 = vmul.f32 %v715, %v975
      %v1005 = vmul.f32 %v717, %v989
      %1022 = vrot.lane.b32.xlu0 %v990, 8
      %v1023 = vpop.permute.xlu0 %1022
      %1024 = vrot.lane.b32.xlu0 %v991, 8
      %v1025 = vpop.permute.xlu0 %1024
      %1026 = vrot.lane.b32.xlu0 %v992, 8
      %v1027 = vpop.permute.xlu0 %1026
      %1028 = vrot.lane.b32.xlu0 %v993, 8
      %v1029 = vpop.permute.xlu0 %1028
      %1030 = vrot.lane.b32.xlu0 %v994, 8
      %v1031 = vpop.permute.xlu0 %1030
      %1032 = vrot.lane.b32.xlu0 %v995, 8
      %v1033 = vpop.permute.xlu0 %1032
      %1034 = vrot.lane.b32.xlu0 %v996, 8
      %v1035 = vpop.permute.xlu0 %1034
      %1036 = vrot.lane.b32.xlu0 %v997, 8
      %v1037 = vpop.permute.xlu0 %1036
      %1038 = vrot.lane.b32.xlu0 %v998, 8
      %v1039 = vpop.permute.xlu0 %1038
      %1040 = vrot.lane.b32.xlu0 %v999, 8
      %v1041 = vpop.permute.xlu0 %1040
      %1042 = vrot.lane.b32.xlu0 %v1000, 8
      %v1043 = vpop.permute.xlu0 %1042
      %1044 = vrot.lane.b32.xlu0 %v1001, 8
      %v1045 = vpop.permute.xlu0 %1044
      %1046 = vrot.lane.b32.xlu0 %v1002, 8
      %v1047 = vpop.permute.xlu0 %1046
      %1048 = vrot.lane.b32.xlu0 %v1003, 8
      %v1049 = vpop.permute.xlu0 %1048
      %1050 = vrot.lane.b32.xlu0 %v1004, 8
      %v1051 = vpop.permute.xlu0 %1050
      %1052 = vrot.lane.b32.xlu0 %v1005, 8
      %v1053 = vpop.permute.xlu0 %1052
      %v1070 = vmul.f32 %v495, %v1023
      %v1071 = vmul.f32 %v498, %v1025
      %v1072 = vmul.f32 %v501, %v1027
      %v1073 = vmul.f32 %v504, %v1029
      %v1074 = vmul.f32 %v507, %v1031
      %v1075 = vmul.f32 %v510, %v1033
      %v1076 = vmul.f32 %v513, %v1035
      %v1077 = vmul.f32 %v516, %v1037
      %v1078 = vmul.f32 %v519, %v1039
      %v1079 = vmul.f32 %v522, %v1041
      %v1080 = vmul.f32 %v525, %v1043
      %v1081 = vmul.f32 %v528, %v1045
      %v1082 = vmul.f32 %v531, %v1047
      %v1083 = vmul.f32 %v534, %v1049
      %v1084 = vmul.f32 %v537, %v1051
      %v1085 = vmul.f32 %v540, %v1053
      %1086 = vrot.lane.b32.xlu0 %v331, 8
      %v1087 = vpop.permute.xlu0 %1086
      %1088 = vrot.lane.b32.xlu0 %v332, 8
      %v1089 = vpop.permute.xlu0 %1088
      %1090 = vrot.lane.b32.xlu0 %v333, 8
      %v1091 = vpop.permute.xlu0 %1090
      %1092 = vrot.lane.b32.xlu0 %v334, 8
      %v1093 = vpop.permute.xlu0 %1092
      %1094 = vrot.lane.b32.xlu0 %v335, 8
      %v1095 = vpop.permute.xlu0 %1094
      %1096 = vrot.lane.b32.xlu0 %v336, 8
      %v1097 = vpop.permute.xlu0 %1096
      %1098 = vrot.lane.b32.xlu0 %v337, 8
      %v1099 = vpop.permute.xlu0 %1098
      %1100 = vrot.lane.b32.xlu0 %v338, 8
      %v1101 = vpop.permute.xlu0 %1100
      %1102 = vrot.lane.b32.xlu0 %v339, 8
      %v1103 = vpop.permute.xlu0 %1102
      %1104 = vrot.lane.b32.xlu0 %v340, 8
      %v1105 = vpop.permute.xlu0 %1104
      %1106 = vrot.lane.b32.xlu0 %v341, 8
      %v1107 = vpop.permute.xlu0 %1106
      %1108 = vrot.lane.b32.xlu0 %v342, 8
      %v1109 = vpop.permute.xlu0 %1108
      %1110 = vrot.lane.b32.xlu0 %v343, 8
      %v1111 = vpop.permute.xlu0 %1110
      %1112 = vrot.lane.b32.xlu0 %v344, 8
      %v1113 = vpop.permute.xlu0 %1112
      %1114 = vrot.lane.b32.xlu0 %v345, 8
      %v1115 = vpop.permute.xlu0 %1114
      %1116 = vrot.lane.b32.xlu0 %v346, 8
      %v1117 = vpop.permute.xlu0 %1116
      %v1134 = vadd.f32 %v1070, %v1087
      %v1135 = vadd.f32 %v1071, %v1089
      %v1136 = vadd.f32 %v1072, %v1091
      %v1137 = vadd.f32 %v1073, %v1093
      %v1138 = vadd.f32 %v1074, %v1095
      %v1139 = vadd.f32 %v1075, %v1097
      %v1140 = vadd.f32 %v1076, %v1099
      %v1141 = vadd.f32 %v1077, %v1101
      %v1142 = vadd.f32 %v1078, %v1103
      %v1143 = vadd.f32 %v1079, %v1105
      %v1144 = vadd.f32 %v1080, %v1107
      %v1145 = vadd.f32 %v1081, %v1109
      %v1146 = vadd.f32 %v1082, %v1111
      %v1147 = vadd.f32 %v1083, %v1113
      %v1148 = vadd.f32 %v1084, %v1115
      %v1149 = vadd.f32 %v1085, %v1117
      %v1150 = vxor.u32 %v403, 2147483648
      %v1151 = vxor.u32 %v404, 2147483648
      %v1152 = vxor.u32 %v405, 2147483648
      %v1153 = vxor.u32 %v406, 2147483648
      %v1154 = vxor.u32 %v407, 2147483648
      %v1155 = vxor.u32 %v408, 2147483648
      %v1156 = vxor.u32 %v409, 2147483648
      %v1157 = vxor.u32 %v410, 2147483648
      %v1158 = vxor.u32 %v411, 2147483648
      %v1159 = vxor.u32 %v412, 2147483648
      %v1160 = vxor.u32 %v413, 2147483648
      %v1161 = vxor.u32 %v414, 2147483648
      %v1162 = vxor.u32 %v415, 2147483648
      %v1163 = vxor.u32 %v416, 2147483648
      %v1164 = vxor.u32 %v417, 2147483648
      %v1165 = vxor.u32 %v418, 2147483648
      %v1166 = vmul.f32 %v1150, 1.442695
      %v1167 = vpow.pop %v1166
      %v1168 = vmul.f32 %v1151, 1.442695
      %v1169 = vpow.pop %v1168
      %v1170 = vmul.f32 %v1152, 1.442695
      %v1171 = vpow.pop %v1170
      %v1172 = vmul.f32 %v1153, 1.442695
      %v1173 = vpow.pop %v1172
      %v1174 = vmul.f32 %v1154, 1.442695
      %v1175 = vpow.pop %v1174
      %v1176 = vmul.f32 %v1155, 1.442695
      %v1177 = vpow.pop %v1176
      %v1178 = vmul.f32 %v1156, 1.442695
      %v1179 = vpow.pop %v1178
      %v1180 = vmul.f32 %v1157, 1.442695
      %v1181 = vpow.pop %v1180
      %v1182 = vmul.f32 %v1158, 1.442695
      %v1183 = vpow.pop %v1182
      %v1184 = vmul.f32 %v1159, 1.442695
      %v1185 = vpow.pop %v1184
      %v1186 = vmul.f32 %v1160, 1.442695
      %v1187 = vpow.pop %v1186
      %v1188 = vmul.f32 %v1161, 1.442695
      %v1189 = vpow.pop %v1188
      %v1190 = vmul.f32 %v1162, 1.442695
      %v1191 = vpow.pop %v1190
      %v1192 = vmul.f32 %v1163, 1.442695
      %v1193 = vpow.pop %v1192
      %v1194 = vmul.f32 %v1164, 1.442695
      %v1195 = vpow.pop %v1194
      %v1196 = vmul.f32 %v1165, 1.442695
      %v1197 = vpow.pop %v1196
      %v1198 = vadd.f32 %v1167, 1.0
      %v1199 = vadd.f32 %v1169, 1.0
      %v1200 = vadd.f32 %v1171, 1.0
      %v1201 = vadd.f32 %v1173, 1.0
      %v1202 = vadd.f32 %v1175, 1.0
      %v1203 = vadd.f32 %v1177, 1.0
      %v1204 = vadd.f32 %v1179, 1.0
      %v1205 = vadd.f32 %v1181, 1.0
      %v1206 = vadd.f32 %v1183, 1.0
      %v1207 = vadd.f32 %v1185, 1.0
      %v1208 = vadd.f32 %v1187, 1.0
      %v1209 = vadd.f32 %v1189, 1.0
      %v1210 = vadd.f32 %v1191, 1.0
      %v1211 = vadd.f32 %v1193, 1.0
      %v1212 = vadd.f32 %v1195, 1.0
      %v1213 = vadd.f32 %v1197, 1.0
      %v1214 = vrcp.pop %v1198
      %v1215 = vmul.f32 %v1198, %v1214
      %v1216 = vsub.f32 1.0, %v1215
      %v1217 = vmul.f32 %v1214, %v1216
      %v1218 = vadd.f32 %v1214, %v1217
      %vm1219 = vweird.f32 %v1198
      %vm1220 = vweird.f32 %v1214
      %vm1221 = vmor %vm1219, %vm1220
      %v1222 = vsel %vm1221, %v1214, %v1218
      %v1223 = vand.u32 2147483647, %v1198
      %vm1224 = vcmp.eq.f32.partialorder %v1223, 8.507059e+37
      %v1225 = vand.u32 %v1198, 2147483648
      %v1226 = vor.u32 1.1754944e-38, %v1225
      %v1227 = vsel %vm1224, %v1226, %v1222
      %v1228 = vmul.f32 1.0, %v1227
      %v1229 = vrcp.pop %v1199
      %v1230 = vmul.f32 %v1199, %v1229
      %v1231 = vsub.f32 1.0, %v1230
      %v1232 = vmul.f32 %v1229, %v1231
      %v1233 = vadd.f32 %v1229, %v1232
      %vm1234 = vweird.f32 %v1199
      %vm1235 = vweird.f32 %v1229
      %vm1236 = vmor %vm1234, %vm1235
      %v1237 = vsel %vm1236, %v1229, %v1233
      %v1238 = vand.u32 2147483647, %v1199
      %vm1239 = vcmp.eq.f32.partialorder %v1238, 8.507059e+37
      %v1240 = vand.u32 %v1199, 2147483648
      %v1241 = vor.u32 1.1754944e-38, %v1240
      %v1242 = vsel %vm1239, %v1241, %v1237
      %v1243 = vmul.f32 1.0, %v1242
      %v1244 = vrcp.pop %v1200
      %v1245 = vmul.f32 %v1200, %v1244
      %v1246 = vsub.f32 1.0, %v1245
      %v1247 = vmul.f32 %v1244, %v1246
      %v1248 = vadd.f32 %v1244, %v1247
      %vm1249 = vweird.f32 %v1200
      %vm1250 = vweird.f32 %v1244
      %vm1251 = vmor %vm1249, %vm1250
      %v1252 = vsel %vm1251, %v1244, %v1248
      %v1253 = vand.u32 2147483647, %v1200
      %vm1254 = vcmp.eq.f32.partialorder %v1253, 8.507059e+37
      %v1255 = vand.u32 %v1200, 2147483648
      %v1256 = vor.u32 1.1754944e-38, %v1255
      %v1257 = vsel %vm1254, %v1256, %v1252
      %v1258 = vmul.f32 1.0, %v1257
      %v1259 = vrcp.pop %v1201
      %v1260 = vmul.f32 %v1201, %v1259
      %v1261 = vsub.f32 1.0, %v1260
      %v1262 = vmul.f32 %v1259, %v1261
      %v1263 = vadd.f32 %v1259, %v1262
      %vm1264 = vweird.f32 %v1201
      %vm1265 = vweird.f32 %v1259
      %vm1266 = vmor %vm1264, %vm1265
      %v1267 = vsel %vm1266, %v1259, %v1263
      %v1268 = vand.u32 2147483647, %v1201
      %vm1269 = vcmp.eq.f32.partialorder %v1268, 8.507059e+37
      %v1270 = vand.u32 %v1201, 2147483648
      %v1271 = vor.u32 1.1754944e-38, %v1270
      %v1272 = vsel %vm1269, %v1271, %v1267
      %v1273 = vmul.f32 1.0, %v1272
      %v1274 = vrcp.pop %v1202
      %v1275 = vmul.f32 %v1202, %v1274
      %v1276 = vsub.f32 1.0, %v1275
      %v1277 = vmul.f32 %v1274, %v1276
      %v1278 = vadd.f32 %v1274, %v1277
      %vm1279 = vweird.f32 %v1202
      %vm1280 = vweird.f32 %v1274
      %vm1281 = vmor %vm1279, %vm1280
      %v1282 = vsel %vm1281, %v1274, %v1278
      %v1283 = vand.u32 2147483647, %v1202
      %vm1284 = vcmp.eq.f32.partialorder %v1283, 8.507059e+37
      %v1285 = vand.u32 %v1202, 2147483648
      %v1286 = vor.u32 1.1754944e-38, %v1285
      %v1287 = vsel %vm1284, %v1286, %v1282
      %v1288 = vmul.f32 1.0, %v1287
      %v1289 = vrcp.pop %v1203
      %v1290 = vmul.f32 %v1203, %v1289
      %v1291 = vsub.f32 1.0, %v1290
      %v1292 = vmul.f32 %v1289, %v1291
      %v1293 = vadd.f32 %v1289, %v1292
      %vm1294 = vweird.f32 %v1203
      %vm1295 = vweird.f32 %v1289
      %vm1296 = vmor %vm1294, %vm1295
      %v1297 = vsel %vm1296, %v1289, %v1293
      %v1298 = vand.u32 2147483647, %v1203
      %vm1299 = vcmp.eq.f32.partialorder %v1298, 8.507059e+37
      %v1300 = vand.u32 %v1203, 2147483648
      %v1301 = vor.u32 1.1754944e-38, %v1300
      %v1302 = vsel %vm1299, %v1301, %v1297
      %v1303 = vmul.f32 1.0, %v1302
      %v1304 = vrcp.pop %v1204
      %v1305 = vmul.f32 %v1204, %v1304
      %v1306 = vsub.f32 1.0, %v1305
      %v1307 = vmul.f32 %v1304, %v1306
      %v1308 = vadd.f32 %v1304, %v1307
      %vm1309 = vweird.f32 %v1204
      %vm1310 = vweird.f32 %v1304
      %vm1311 = vmor %vm1309, %vm1310
      %v1312 = vsel %vm1311, %v1304, %v1308
      %v1313 = vand.u32 2147483647, %v1204
      %vm1314 = vcmp.eq.f32.partialorder %v1313, 8.507059e+37
      %v1315 = vand.u32 %v1204, 2147483648
      %v1316 = vor.u32 1.1754944e-38, %v1315
      %v1317 = vsel %vm1314, %v1316, %v1312
      %v1318 = vmul.f32 1.0, %v1317
      %v1319 = vrcp.pop %v1205
      %v1320 = vmul.f32 %v1205, %v1319
      %v1321 = vsub.f32 1.0, %v1320
      %v1322 = vmul.f32 %v1319, %v1321
      %v1323 = vadd.f32 %v1319, %v1322
      %vm1324 = vweird.f32 %v1205
      %vm1325 = vweird.f32 %v1319
      %vm1326 = vmor %vm1324, %vm1325
      %v1327 = vsel %vm1326, %v1319, %v1323
      %v1328 = vand.u32 2147483647, %v1205
      %vm1329 = vcmp.eq.f32.partialorder %v1328, 8.507059e+37
      %v1330 = vand.u32 %v1205, 2147483648
      %v1331 = vor.u32 1.1754944e-38, %v1330
      %v1332 = vsel %vm1329, %v1331, %v1327
      %v1333 = vmul.f32 1.0, %v1332
      %v1334 = vrcp.pop %v1206
      %v1335 = vmul.f32 %v1206, %v1334
      %v1336 = vsub.f32 1.0, %v1335
      %v1337 = vmul.f32 %v1334, %v1336
      %v1338 = vadd.f32 %v1334, %v1337
      %vm1339 = vweird.f32 %v1206
      %vm1340 = vweird.f32 %v1334
      %vm1341 = vmor %vm1339, %vm1340
      %v1342 = vsel %vm1341, %v1334, %v1338
      %v1343 = vand.u32 2147483647, %v1206
      %vm1344 = vcmp.eq.f32.partialorder %v1343, 8.507059e+37
      %v1345 = vand.u32 %v1206, 2147483648
      %v1346 = vor.u32 1.1754944e-38, %v1345
      %v1347 = vsel %vm1344, %v1346, %v1342
      %v1348 = vmul.f32 1.0, %v1347
      %v1349 = vrcp.pop %v1207
      %v1350 = vmul.f32 %v1207, %v1349
      %v1351 = vsub.f32 1.0, %v1350
      %v1352 = vmul.f32 %v1349, %v1351
      %v1353 = vadd.f32 %v1349, %v1352
      %vm1354 = vweird.f32 %v1207
      %vm1355 = vweird.f32 %v1349
      %vm1356 = vmor %vm1354, %vm1355
      %v1357 = vsel %vm1356, %v1349, %v1353
      %v1358 = vand.u32 2147483647, %v1207
      %vm1359 = vcmp.eq.f32.partialorder %v1358, 8.507059e+37
      %v1360 = vand.u32 %v1207, 2147483648
      %v1361 = vor.u32 1.1754944e-38, %v1360
      %v1362 = vsel %vm1359, %v1361, %v1357
      %v1363 = vmul.f32 1.0, %v1362
      %v1364 = vrcp.pop %v1208
      %v1365 = vmul.f32 %v1208, %v1364
      %v1366 = vsub.f32 1.0, %v1365
      %v1367 = vmul.f32 %v1364, %v1366
      %v1368 = vadd.f32 %v1364, %v1367
      %vm1369 = vweird.f32 %v1208
      %vm1370 = vweird.f32 %v1364
      %vm1371 = vmor %vm1369, %vm1370
      %v1372 = vsel %vm1371, %v1364, %v1368
      %v1373 = vand.u32 2147483647, %v1208
      %vm1374 = vcmp.eq.f32.partialorder %v1373, 8.507059e+37
      %v1375 = vand.u32 %v1208, 2147483648
      %v1376 = vor.u32 1.1754944e-38, %v1375
      %v1377 = vsel %vm1374, %v1376, %v1372
      %v1378 = vmul.f32 1.0, %v1377
      %v1379 = vrcp.pop %v1209
      %v1380 = vmul.f32 %v1209, %v1379
      %v1381 = vsub.f32 1.0, %v1380
      %v1382 = vmul.f32 %v1379, %v1381
      %v1383 = vadd.f32 %v1379, %v1382
      %vm1384 = vweird.f32 %v1209
      %vm1385 = vweird.f32 %v1379
      %vm1386 = vmor %vm1384, %vm1385
      %v1387 = vsel %vm1386, %v1379, %v1383
      %v1388 = vand.u32 2147483647, %v1209
      %vm1389 = vcmp.eq.f32.partialorder %v1388, 8.507059e+37
      %v1390 = vand.u32 %v1209, 2147483648
      %v1391 = vor.u32 1.1754944e-38, %v1390
      %v1392 = vsel %vm1389, %v1391, %v1387
      %v1393 = vmul.f32 1.0, %v1392
      %v1394 = vrcp.pop %v1210
      %v1395 = vmul.f32 %v1210, %v1394
      %v1396 = vsub.f32 1.0, %v1395
      %v1397 = vmul.f32 %v1394, %v1396
      %v1398 = vadd.f32 %v1394, %v1397
      %vm1399 = vweird.f32 %v1210
      %vm1400 = vweird.f32 %v1394
      %vm1401 = vmor %vm1399, %vm1400
      %v1402 = vsel %vm1401, %v1394, %v1398
      %v1403 = vand.u32 2147483647, %v1210
      %vm1404 = vcmp.eq.f32.partialorder %v1403, 8.507059e+37
      %v1405 = vand.u32 %v1210, 2147483648
      %v1406 = vor.u32 1.1754944e-38, %v1405
      %v1407 = vsel %vm1404, %v1406, %v1402
      %v1408 = vmul.f32 1.0, %v1407
      %v1409 = vrcp.pop %v1211
      %v1410 = vmul.f32 %v1211, %v1409
      %v1411 = vsub.f32 1.0, %v1410
      %v1412 = vmul.f32 %v1409, %v1411
      %v1413 = vadd.f32 %v1409, %v1412
      %vm1414 = vweird.f32 %v1211
      %vm1415 = vweird.f32 %v1409
      %vm1416 = vmor %vm1414, %vm1415
      %v1417 = vsel %vm1416, %v1409, %v1413
      %v1418 = vand.u32 2147483647, %v1211
      %vm1419 = vcmp.eq.f32.partialorder %v1418, 8.507059e+37
      %v1420 = vand.u32 %v1211, 2147483648
      %v1421 = vor.u32 1.1754944e-38, %v1420
      %v1422 = vsel %vm1419, %v1421, %v1417
      %v1423 = vmul.f32 1.0, %v1422
      %v1424 = vrcp.pop %v1212
      %v1425 = vmul.f32 %v1212, %v1424
      %v1426 = vsub.f32 1.0, %v1425
      %v1427 = vmul.f32 %v1424, %v1426
      %v1428 = vadd.f32 %v1424, %v1427
      %vm1429 = vweird.f32 %v1212
      %vm1430 = vweird.f32 %v1424
      %vm1431 = vmor %vm1429, %vm1430
      %v1432 = vsel %vm1431, %v1424, %v1428
      %v1433 = vand.u32 2147483647, %v1212
      %vm1434 = vcmp.eq.f32.partialorder %v1433, 8.507059e+37
      %v1435 = vand.u32 %v1212, 2147483648
      %v1436 = vor.u32 1.1754944e-38, %v1435
      %v1437 = vsel %vm1434, %v1436, %v1432
      %v1438 = vmul.f32 1.0, %v1437
      %v1439 = vrcp.pop %v1213
      %v1440 = vmul.f32 %v1213, %v1439
      %v1441 = vsub.f32 1.0, %v1440
      %v1442 = vmul.f32 %v1439, %v1441
      %v1443 = vadd.f32 %v1439, %v1442
      %vm1444 = vweird.f32 %v1213
      %vm1445 = vweird.f32 %v1439
      %vm1446 = vmor %vm1444, %vm1445
      %v1447 = vsel %vm1446, %v1439, %v1443
      %v1448 = vand.u32 2147483647, %v1213
      %vm1449 = vcmp.eq.f32.partialorder %v1448, 8.507059e+37
      %v1450 = vand.u32 %v1213, 2147483648
      %v1451 = vor.u32 1.1754944e-38, %v1450
      %v1452 = vsel %vm1449, %v1451, %v1447
      %v1453 = vmul.f32 1.0, %v1452
      %v1454 = vxor.u32 %v1134, 2147483648
      %v1455 = vxor.u32 %v1135, 2147483648
      %v1456 = vxor.u32 %v1136, 2147483648
      %v1457 = vxor.u32 %v1137, 2147483648
      %v1458 = vxor.u32 %v1138, 2147483648
      %v1459 = vxor.u32 %v1139, 2147483648
      %v1460 = vxor.u32 %v1140, 2147483648
      %v1461 = vxor.u32 %v1141, 2147483648
      %v1462 = vxor.u32 %v1142, 2147483648
      %v1463 = vxor.u32 %v1143, 2147483648
      %v1464 = vxor.u32 %v1144, 2147483648
      %v1465 = vxor.u32 %v1145, 2147483648
      %v1466 = vxor.u32 %v1146, 2147483648
      %v1467 = vxor.u32 %v1147, 2147483648
      %v1468 = vxor.u32 %v1148, 2147483648
      %v1469 = vxor.u32 %v1149, 2147483648
      %v1470 = vmul.f32 %v1454, 1.442695
      %v1471 = vpow.pop %v1470
      %v1472 = vmul.f32 %v1455, 1.442695
      %v1473 = vpow.pop %v1472
      %v1474 = vmul.f32 %v1456, 1.442695
      %v1475 = vpow.pop %v1474
      %v1476 = vmul.f32 %v1457, 1.442695
      %v1477 = vpow.pop %v1476
      %v1478 = vmul.f32 %v1458, 1.442695
      %v1479 = vpow.pop %v1478
      %v1480 = vmul.f32 %v1459, 1.442695
      %v1481 = vpow.pop %v1480
      %v1482 = vmul.f32 %v1460, 1.442695
      %v1483 = vpow.pop %v1482
      %v1484 = vmul.f32 %v1461, 1.442695
      %v1485 = vpow.pop %v1484
      %v1486 = vmul.f32 %v1462, 1.442695
      %v1487 = vpow.pop %v1486
      %v1488 = vmul.f32 %v1463, 1.442695
      %v1489 = vpow.pop %v1488
      %v1490 = vmul.f32 %v1464, 1.442695
      %v1491 = vpow.pop %v1490
      %v1492 = vmul.f32 %v1465, 1.442695
      %v1493 = vpow.pop %v1492
      %v1494 = vmul.f32 %v1466, 1.442695
      %v1495 = vpow.pop %v1494
      %v1496 = vmul.f32 %v1467, 1.442695
      %v1497 = vpow.pop %v1496
      %v1498 = vmul.f32 %v1468, 1.442695
      %v1499 = vpow.pop %v1498
      %v1500 = vmul.f32 %v1469, 1.442695
      %v1501 = vpow.pop %v1500
      %v1502 = vadd.f32 %v1471, 1.0
      %v1503 = vadd.f32 %v1473, 1.0
      %v1504 = vadd.f32 %v1475, 1.0
      %v1505 = vadd.f32 %v1477, 1.0
      %v1506 = vadd.f32 %v1479, 1.0
      %v1507 = vadd.f32 %v1481, 1.0
      %v1508 = vadd.f32 %v1483, 1.0
      %v1509 = vadd.f32 %v1485, 1.0
      %v1510 = vadd.f32 %v1487, 1.0
      %v1511 = vadd.f32 %v1489, 1.0
      %v1512 = vadd.f32 %v1491, 1.0
      %v1513 = vadd.f32 %v1493, 1.0
      %v1514 = vadd.f32 %v1495, 1.0
      %v1515 = vadd.f32 %v1497, 1.0
      %v1516 = vadd.f32 %v1499, 1.0
      %v1517 = vadd.f32 %v1501, 1.0
      %v1518 = vrcp.pop %v1502
      %v1519 = vmul.f32 %v1502, %v1518
      %v1520 = vsub.f32 1.0, %v1519
      %v1521 = vmul.f32 %v1518, %v1520
      %v1522 = vadd.f32 %v1518, %v1521
      %vm1523 = vweird.f32 %v1502
      %vm1524 = vweird.f32 %v1518
      %vm1525 = vmor %vm1523, %vm1524
      %v1526 = vsel %vm1525, %v1518, %v1522
      %v1527 = vand.u32 2147483647, %v1502
      %vm1528 = vcmp.eq.f32.partialorder %v1527, 8.507059e+37
      %v1529 = vand.u32 %v1502, 2147483648
      %v1530 = vor.u32 1.1754944e-38, %v1529
      %v1531 = vsel %vm1528, %v1530, %v1526
      %v1532 = vmul.f32 1.0, %v1531
      %v1533 = vrcp.pop %v1503
      %v1534 = vmul.f32 %v1503, %v1533
      %v1535 = vsub.f32 1.0, %v1534
      %v1536 = vmul.f32 %v1533, %v1535
      %v1537 = vadd.f32 %v1533, %v1536
      %vm1538 = vweird.f32 %v1503
      %vm1539 = vweird.f32 %v1533
      %vm1540 = vmor %vm1538, %vm1539
      %v1541 = vsel %vm1540, %v1533, %v1537
      %v1542 = vand.u32 2147483647, %v1503
      %vm1543 = vcmp.eq.f32.partialorder %v1542, 8.507059e+37
      %v1544 = vand.u32 %v1503, 2147483648
      %v1545 = vor.u32 1.1754944e-38, %v1544
      %v1546 = vsel %vm1543, %v1545, %v1541
      %v1547 = vmul.f32 1.0, %v1546
      %v1548 = vrcp.pop %v1504
      %v1549 = vmul.f32 %v1504, %v1548
      %v1550 = vsub.f32 1.0, %v1549
      %v1551 = vmul.f32 %v1548, %v1550
      %v1552 = vadd.f32 %v1548, %v1551
      %vm1553 = vweird.f32 %v1504
      %vm1554 = vweird.f32 %v1548
      %vm1555 = vmor %vm1553, %vm1554
      %v1556 = vsel %vm1555, %v1548, %v1552
      %v1557 = vand.u32 2147483647, %v1504
      %vm1558 = vcmp.eq.f32.partialorder %v1557, 8.507059e+37
      %v1559 = vand.u32 %v1504, 2147483648
      %v1560 = vor.u32 1.1754944e-38, %v1559
      %v1561 = vsel %vm1558, %v1560, %v1556
      %v1562 = vmul.f32 1.0, %v1561
      %v1563 = vrcp.pop %v1505
      %v1564 = vmul.f32 %v1505, %v1563
      %v1565 = vsub.f32 1.0, %v1564
      %v1566 = vmul.f32 %v1563, %v1565
      %v1567 = vadd.f32 %v1563, %v1566
      %vm1568 = vweird.f32 %v1505
      %vm1569 = vweird.f32 %v1563
      %vm1570 = vmor %vm1568, %vm1569
      %v1571 = vsel %vm1570, %v1563, %v1567
      %v1572 = vand.u32 2147483647, %v1505
      %vm1573 = vcmp.eq.f32.partialorder %v1572, 8.507059e+37
      %v1574 = vand.u32 %v1505, 2147483648
      %v1575 = vor.u32 1.1754944e-38, %v1574
      %v1576 = vsel %vm1573, %v1575, %v1571
      %v1577 = vmul.f32 1.0, %v1576
      %v1578 = vrcp.pop %v1506
      %v1579 = vmul.f32 %v1506, %v1578
      %v1580 = vsub.f32 1.0, %v1579
      %v1581 = vmul.f32 %v1578, %v1580
      %v1582 = vadd.f32 %v1578, %v1581
      %vm1583 = vweird.f32 %v1506
      %vm1584 = vweird.f32 %v1578
      %vm1585 = vmor %vm1583, %vm1584
      %v1586 = vsel %vm1585, %v1578, %v1582
      %v1587 = vand.u32 2147483647, %v1506
      %vm1588 = vcmp.eq.f32.partialorder %v1587, 8.507059e+37
      %v1589 = vand.u32 %v1506, 2147483648
      %v1590 = vor.u32 1.1754944e-38, %v1589
      %v1591 = vsel %vm1588, %v1590, %v1586
      %v1592 = vmul.f32 1.0, %v1591
      %v1593 = vrcp.pop %v1507
      %v1594 = vmul.f32 %v1507, %v1593
      %v1595 = vsub.f32 1.0, %v1594
      %v1596 = vmul.f32 %v1593, %v1595
      %v1597 = vadd.f32 %v1593, %v1596
      %vm1598 = vweird.f32 %v1507
      %vm1599 = vweird.f32 %v1593
      %vm1600 = vmor %vm1598, %vm1599
      %v1601 = vsel %vm1600, %v1593, %v1597
      %v1602 = vand.u32 2147483647, %v1507
      %vm1603 = vcmp.eq.f32.partialorder %v1602, 8.507059e+37
      %v1604 = vand.u32 %v1507, 2147483648
      %v1605 = vor.u32 1.1754944e-38, %v1604
      %v1606 = vsel %vm1603, %v1605, %v1601
      %v1607 = vmul.f32 1.0, %v1606
      %v1608 = vrcp.pop %v1508
      %v1609 = vmul.f32 %v1508, %v1608
      %v1610 = vsub.f32 1.0, %v1609
      %v1611 = vmul.f32 %v1608, %v1610
      %v1612 = vadd.f32 %v1608, %v1611
      %vm1613 = vweird.f32 %v1508
      %vm1614 = vweird.f32 %v1608
      %vm1615 = vmor %vm1613, %vm1614
      %v1616 = vsel %vm1615, %v1608, %v1612
      %v1617 = vand.u32 2147483647, %v1508
      %vm1618 = vcmp.eq.f32.partialorder %v1617, 8.507059e+37
      %v1619 = vand.u32 %v1508, 2147483648
      %v1620 = vor.u32 1.1754944e-38, %v1619
      %v1621 = vsel %vm1618, %v1620, %v1616
      %v1622 = vmul.f32 1.0, %v1621
      %v1623 = vrcp.pop %v1509
      %v1624 = vmul.f32 %v1509, %v1623
      %v1625 = vsub.f32 1.0, %v1624
      %v1626 = vmul.f32 %v1623, %v1625
      %v1627 = vadd.f32 %v1623, %v1626
      %vm1628 = vweird.f32 %v1509
      %vm1629 = vweird.f32 %v1623
      %vm1630 = vmor %vm1628, %vm1629
      %v1631 = vsel %vm1630, %v1623, %v1627
      %v1632 = vand.u32 2147483647, %v1509
      %vm1633 = vcmp.eq.f32.partialorder %v1632, 8.507059e+37
      %v1634 = vand.u32 %v1509, 2147483648
      %v1635 = vor.u32 1.1754944e-38, %v1634
      %v1636 = vsel %vm1633, %v1635, %v1631
      %v1637 = vmul.f32 1.0, %v1636
      %v1638 = vrcp.pop %v1510
      %v1639 = vmul.f32 %v1510, %v1638
      %v1640 = vsub.f32 1.0, %v1639
      %v1641 = vmul.f32 %v1638, %v1640
      %v1642 = vadd.f32 %v1638, %v1641
      %vm1643 = vweird.f32 %v1510
      %vm1644 = vweird.f32 %v1638
      %vm1645 = vmor %vm1643, %vm1644
      %v1646 = vsel %vm1645, %v1638, %v1642
      %v1647 = vand.u32 2147483647, %v1510
      %vm1648 = vcmp.eq.f32.partialorder %v1647, 8.507059e+37
      %v1649 = vand.u32 %v1510, 2147483648
      %v1650 = vor.u32 1.1754944e-38, %v1649
      %v1651 = vsel %vm1648, %v1650, %v1646
      %v1652 = vmul.f32 1.0, %v1651
      %v1653 = vrcp.pop %v1511
      %v1654 = vmul.f32 %v1511, %v1653
      %v1655 = vsub.f32 1.0, %v1654
      %v1656 = vmul.f32 %v1653, %v1655
      %v1657 = vadd.f32 %v1653, %v1656
      %vm1658 = vweird.f32 %v1511
      %vm1659 = vweird.f32 %v1653
      %vm1660 = vmor %vm1658, %vm1659
      %v1661 = vsel %vm1660, %v1653, %v1657
      %v1662 = vand.u32 2147483647, %v1511
      %vm1663 = vcmp.eq.f32.partialorder %v1662, 8.507059e+37
      %v1664 = vand.u32 %v1511, 2147483648
      %v1665 = vor.u32 1.1754944e-38, %v1664
      %v1666 = vsel %vm1663, %v1665, %v1661
      %v1667 = vmul.f32 1.0, %v1666
      %v1668 = vrcp.pop %v1512
      %v1669 = vmul.f32 %v1512, %v1668
      %v1670 = vsub.f32 1.0, %v1669
      %v1671 = vmul.f32 %v1668, %v1670
      %v1672 = vadd.f32 %v1668, %v1671
      %vm1673 = vweird.f32 %v1512
      %vm1674 = vweird.f32 %v1668
      %vm1675 = vmor %vm1673, %vm1674
      %v1676 = vsel %vm1675, %v1668, %v1672
      %v1677 = vand.u32 2147483647, %v1512
      %vm1678 = vcmp.eq.f32.partialorder %v1677, 8.507059e+37
      %v1679 = vand.u32 %v1512, 2147483648
      %v1680 = vor.u32 1.1754944e-38, %v1679
      %v1681 = vsel %vm1678, %v1680, %v1676
      %v1682 = vmul.f32 1.0, %v1681
      %v1683 = vrcp.pop %v1513
      %v1684 = vmul.f32 %v1513, %v1683
      %v1685 = vsub.f32 1.0, %v1684
      %v1686 = vmul.f32 %v1683, %v1685
      %v1687 = vadd.f32 %v1683, %v1686
      %vm1688 = vweird.f32 %v1513
      %vm1689 = vweird.f32 %v1683
      %vm1690 = vmor %vm1688, %vm1689
      %v1691 = vsel %vm1690, %v1683, %v1687
      %v1692 = vand.u32 2147483647, %v1513
      %vm1693 = vcmp.eq.f32.partialorder %v1692, 8.507059e+37
      %v1694 = vand.u32 %v1513, 2147483648
      %v1695 = vor.u32 1.1754944e-38, %v1694
      %v1696 = vsel %vm1693, %v1695, %v1691
      %v1697 = vmul.f32 1.0, %v1696
      %v1698 = vrcp.pop %v1514
      %v1699 = vmul.f32 %v1514, %v1698
      %v1700 = vsub.f32 1.0, %v1699
      %v1701 = vmul.f32 %v1698, %v1700
      %v1702 = vadd.f32 %v1698, %v1701
      %vm1703 = vweird.f32 %v1514
      %vm1704 = vweird.f32 %v1698
      %vm1705 = vmor %vm1703, %vm1704
      %v1706 = vsel %vm1705, %v1698, %v1702
      %v1707 = vand.u32 2147483647, %v1514
      %vm1708 = vcmp.eq.f32.partialorder %v1707, 8.507059e+37
      %v1709 = vand.u32 %v1514, 2147483648
      %v1710 = vor.u32 1.1754944e-38, %v1709
      %v1711 = vsel %vm1708, %v1710, %v1706
      %v1712 = vmul.f32 1.0, %v1711
      %v1713 = vrcp.pop %v1515
      %v1714 = vmul.f32 %v1515, %v1713
      %v1715 = vsub.f32 1.0, %v1714
      %v1716 = vmul.f32 %v1713, %v1715
      %v1717 = vadd.f32 %v1713, %v1716
      %vm1718 = vweird.f32 %v1515
      %vm1719 = vweird.f32 %v1713
      %vm1720 = vmor %vm1718, %vm1719
      %v1721 = vsel %vm1720, %v1713, %v1717
      %v1722 = vand.u32 2147483647, %v1515
      %vm1723 = vcmp.eq.f32.partialorder %v1722, 8.507059e+37
      %v1724 = vand.u32 %v1515, 2147483648
      %v1725 = vor.u32 1.1754944e-38, %v1724
      %v1726 = vsel %vm1723, %v1725, %v1721
      %v1727 = vmul.f32 1.0, %v1726
      %v1728 = vrcp.pop %v1516
      %v1729 = vmul.f32 %v1516, %v1728
      %v1730 = vsub.f32 1.0, %v1729
      %v1731 = vmul.f32 %v1728, %v1730
      %v1732 = vadd.f32 %v1728, %v1731
      %vm1733 = vweird.f32 %v1516
      %vm1734 = vweird.f32 %v1728
      %vm1735 = vmor %vm1733, %vm1734
      %v1736 = vsel %vm1735, %v1728, %v1732
      %v1737 = vand.u32 2147483647, %v1516
      %vm1738 = vcmp.eq.f32.partialorder %v1737, 8.507059e+37
      %v1739 = vand.u32 %v1516, 2147483648
      %v1740 = vor.u32 1.1754944e-38, %v1739
      %v1741 = vsel %vm1738, %v1740, %v1736
      %v1742 = vmul.f32 1.0, %v1741
      %v1743 = vrcp.pop %v1517
      %v1744 = vmul.f32 %v1517, %v1743
      %v1745 = vsub.f32 1.0, %v1744
      %v1746 = vmul.f32 %v1743, %v1745
      %v1747 = vadd.f32 %v1743, %v1746
      %vm1748 = vweird.f32 %v1517
      %vm1749 = vweird.f32 %v1743
      %vm1750 = vmor %vm1748, %vm1749
      %v1751 = vsel %vm1750, %v1743, %v1747
      %v1752 = vand.u32 2147483647, %v1517
      %vm1753 = vcmp.eq.f32.partialorder %v1752, 8.507059e+37
      %v1754 = vand.u32 %v1517, 2147483648
      %v1755 = vor.u32 1.1754944e-38, %v1754
      %v1756 = vsel %vm1753, %v1755, %v1751
      %v1757 = vmul.f32 1.0, %v1756
      %v1758 = vadd.f32 %v1228, 1e-08
      %v1759 = vadd.f32 %v1243, 1e-08
      %v1760 = vadd.f32 %v1258, 1e-08
      %v1761 = vadd.f32 %v1273, 1e-08
      %v1762 = vadd.f32 %v1288, 1e-08
      %v1763 = vadd.f32 %v1303, 1e-08
      %v1764 = vadd.f32 %v1318, 1e-08
      %v1765 = vadd.f32 %v1333, 1e-08
      %v1766 = vadd.f32 %v1348, 1e-08
      %v1767 = vadd.f32 %v1363, 1e-08
      %v1768 = vadd.f32 %v1378, 1e-08
      %v1769 = vadd.f32 %v1393, 1e-08
      %v1770 = vadd.f32 %v1408, 1e-08
      %v1771 = vadd.f32 %v1423, 1e-08
      %v1772 = vadd.f32 %v1438, 1e-08
      %v1773 = vadd.f32 %v1453, 1e-08
      %v1774 = vlog2.pop %v1758
      %v1775 = vmul.f32 %v1774, 0.6931472
      %v1776 = vlog2.pop %v1759
      %v1777 = vmul.f32 %v1776, 0.6931472
      %v1778 = vlog2.pop %v1760
      %v1779 = vmul.f32 %v1778, 0.6931472
      %v1780 = vlog2.pop %v1761
      %v1781 = vmul.f32 %v1780, 0.6931472
      %v1782 = vlog2.pop %v1762
      %v1783 = vmul.f32 %v1782, 0.6931472
      %v1784 = vlog2.pop %v1763
      %v1785 = vmul.f32 %v1784, 0.6931472
      %v1786 = vlog2.pop %v1764
      %v1787 = vmul.f32 %v1786, 0.6931472
      %v1788 = vlog2.pop %v1765
      %v1789 = vmul.f32 %v1788, 0.6931472
      %v1790 = vlog2.pop %v1766
      %v1791 = vmul.f32 %v1790, 0.6931472
      %v1792 = vlog2.pop %v1767
      %v1793 = vmul.f32 %v1792, 0.6931472
      %v1794 = vlog2.pop %v1768
      %v1795 = vmul.f32 %v1794, 0.6931472
      %v1796 = vlog2.pop %v1769
      %v1797 = vmul.f32 %v1796, 0.6931472
      %v1798 = vlog2.pop %v1770
      %v1799 = vmul.f32 %v1798, 0.6931472
      %v1800 = vlog2.pop %v1771
      %v1801 = vmul.f32 %v1800, 0.6931472
      %v1802 = vlog2.pop %v1772
      %v1803 = vmul.f32 %v1802, 0.6931472
      %v1804 = vlog2.pop %v1773
      %v1805 = vmul.f32 %v1804, 0.6931472
      %v1806 = vmul.f32 %v1228, %v1775
      %v1807 = vmul.f32 %v1243, %v1777
      %v1808 = vmul.f32 %v1258, %v1779
      %v1809 = vmul.f32 %v1273, %v1781
      %v1810 = vmul.f32 %v1288, %v1783
      %v1811 = vmul.f32 %v1303, %v1785
      %v1812 = vmul.f32 %v1318, %v1787
      %v1813 = vmul.f32 %v1333, %v1789
      %v1814 = vmul.f32 %v1348, %v1791
      %v1815 = vmul.f32 %v1363, %v1793
      %v1816 = vmul.f32 %v1378, %v1795
      %v1817 = vmul.f32 %v1393, %v1797
      %v1818 = vmul.f32 %v1408, %v1799
      %v1819 = vmul.f32 %v1423, %v1801
      %v1820 = vmul.f32 %v1438, %v1803
      %v1821 = vmul.f32 %v1453, %v1805
      %v1822 = vsel %vm424, %v1806, 0.0
      %1823 = vadd.xlane.f32.xlu0 %v1822
      %v1824 = vpop.xlane.xlu0 %1823
      %v1825 = vsel %vm424, %v1807, 0.0
      %1826 = vadd.xlane.f32.xlu0 %v1825
      %v1827 = vpop.xlane.xlu0 %1826
      %v1828 = vsel %vm424, %v1808, 0.0
      %1829 = vadd.xlane.f32.xlu0 %v1828
      %v1830 = vpop.xlane.xlu0 %1829
      %v1831 = vsel %vm424, %v1809, 0.0
      %1832 = vadd.xlane.f32.xlu0 %v1831
      %v1833 = vpop.xlane.xlu0 %1832
      %v1834 = vsel %vm424, %v1810, 0.0
      %1835 = vadd.xlane.f32.xlu0 %v1834
      %v1836 = vpop.xlane.xlu0 %1835
      %v1837 = vsel %vm424, %v1811, 0.0
      %1838 = vadd.xlane.f32.xlu0 %v1837
      %v1839 = vpop.xlane.xlu0 %1838
      %v1840 = vsel %vm424, %v1812, 0.0
      %1841 = vadd.xlane.f32.xlu0 %v1840
      %v1842 = vpop.xlane.xlu0 %1841
      %v1843 = vsel %vm424, %v1813, 0.0
      %1844 = vadd.xlane.f32.xlu0 %v1843
      %v1845 = vpop.xlane.xlu0 %1844
      %v1846 = vsel %vm424, %v1814, 0.0
      %1847 = vadd.xlane.f32.xlu0 %v1846
      %v1848 = vpop.xlane.xlu0 %1847
      %v1849 = vsel %vm424, %v1815, 0.0
      %1850 = vadd.xlane.f32.xlu0 %v1849
      %v1851 = vpop.xlane.xlu0 %1850
      %v1852 = vsel %vm424, %v1816, 0.0
      %1853 = vadd.xlane.f32.xlu0 %v1852
      %v1854 = vpop.xlane.xlu0 %1853
      %v1855 = vsel %vm424, %v1817, 0.0
      %1856 = vadd.xlane.f32.xlu0 %v1855
      %v1857 = vpop.xlane.xlu0 %1856
      %v1858 = vsel %vm424, %v1818, 0.0
      %1859 = vadd.xlane.f32.xlu0 %v1858
      %v1860 = vpop.xlane.xlu0 %1859
      %v1861 = vsel %vm424, %v1819, 0.0
      %1862 = vadd.xlane.f32.xlu0 %v1861
      %v1863 = vpop.xlane.xlu0 %1862
      %v1864 = vsel %vm424, %v1820, 0.0
      %1865 = vadd.xlane.f32.xlu0 %v1864
      %v1866 = vpop.xlane.xlu0 %1865
      %v1867 = vsel %vm424, %v1821, 0.0
      %1868 = vadd.xlane.f32.xlu0 %v1867
      %v1869 = vpop.xlane.xlu0 %1868
      %v1870 = vsub.f32 0.0, %v1824
      %v1871 = vsub.f32 0.0, %v1827
      %v1872 = vsub.f32 0.0, %v1830
      %v1873 = vsub.f32 0.0, %v1833
      %v1874 = vsub.f32 0.0, %v1836
      %v1875 = vsub.f32 0.0, %v1839
      %v1876 = vsub.f32 0.0, %v1842
      %v1877 = vsub.f32 0.0, %v1845
      %v1878 = vsub.f32 0.0, %v1848
      %v1879 = vsub.f32 0.0, %v1851
      %v1880 = vsub.f32 0.0, %v1854
      %v1881 = vsub.f32 0.0, %v1857
      %v1882 = vsub.f32 0.0, %v1860
      %v1883 = vsub.f32 0.0, %v1863
      %v1884 = vsub.f32 0.0, %v1866
      %v1885 = vsub.f32 0.0, %v1869
      %v1886 = vadd.f32 %v1532, 1e-08
      %v1887 = vadd.f32 %v1547, 1e-08
      %v1888 = vadd.f32 %v1562, 1e-08
      %v1889 = vadd.f32 %v1577, 1e-08
      %v1890 = vadd.f32 %v1592, 1e-08
      %v1891 = vadd.f32 %v1607, 1e-08
      %v1892 = vadd.f32 %v1622, 1e-08
      %v1893 = vadd.f32 %v1637, 1e-08
      %v1894 = vadd.f32 %v1652, 1e-08
      %v1895 = vadd.f32 %v1667, 1e-08
      %v1896 = vadd.f32 %v1682, 1e-08
      %v1897 = vadd.f32 %v1697, 1e-08
      %v1898 = vadd.f32 %v1712, 1e-08
      %v1899 = vadd.f32 %v1727, 1e-08
      %v1900 = vadd.f32 %v1742, 1e-08
      %v1901 = vadd.f32 %v1757, 1e-08
      %v1902 = vlog2.pop %v1886
      %v1903 = vmul.f32 %v1902, 0.6931472
      %v1904 = vlog2.pop %v1887
      %v1905 = vmul.f32 %v1904, 0.6931472
      %v1906 = vlog2.pop %v1888
      %v1907 = vmul.f32 %v1906, 0.6931472
      %v1908 = vlog2.pop %v1889
      %v1909 = vmul.f32 %v1908, 0.6931472
      %v1910 = vlog2.pop %v1890
      %v1911 = vmul.f32 %v1910, 0.6931472
      %v1912 = vlog2.pop %v1891
      %v1913 = vmul.f32 %v1912, 0.6931472
      %v1914 = vlog2.pop %v1892
      %v1915 = vmul.f32 %v1914, 0.6931472
      %v1916 = vlog2.pop %v1893
      %v1917 = vmul.f32 %v1916, 0.6931472
      %v1918 = vlog2.pop %v1894
      %v1919 = vmul.f32 %v1918, 0.6931472
      %v1920 = vlog2.pop %v1895
      %v1921 = vmul.f32 %v1920, 0.6931472
      %v1922 = vlog2.pop %v1896
      %v1923 = vmul.f32 %v1922, 0.6931472
      %v1924 = vlog2.pop %v1897
      %v1925 = vmul.f32 %v1924, 0.6931472
      %v1926 = vlog2.pop %v1898
      %v1927 = vmul.f32 %v1926, 0.6931472
      %v1928 = vlog2.pop %v1899
      %v1929 = vmul.f32 %v1928, 0.6931472
      %v1930 = vlog2.pop %v1900
      %v1931 = vmul.f32 %v1930, 0.6931472
      %v1932 = vlog2.pop %v1901
      %v1933 = vmul.f32 %v1932, 0.6931472
      %v1934 = vmul.f32 %v1532, %v1903
      %v1935 = vmul.f32 %v1547, %v1905
      %v1936 = vmul.f32 %v1562, %v1907
      %v1937 = vmul.f32 %v1577, %v1909
      %v1938 = vmul.f32 %v1592, %v1911
      %v1939 = vmul.f32 %v1607, %v1913
      %v1940 = vmul.f32 %v1622, %v1915
      %v1941 = vmul.f32 %v1637, %v1917
      %v1942 = vmul.f32 %v1652, %v1919
      %v1943 = vmul.f32 %v1667, %v1921
      %v1944 = vmul.f32 %v1682, %v1923
      %v1945 = vmul.f32 %v1697, %v1925
      %v1946 = vmul.f32 %v1712, %v1927
      %v1947 = vmul.f32 %v1727, %v1929
      %v1948 = vmul.f32 %v1742, %v1931
      %v1949 = vmul.f32 %v1757, %v1933
      %1966 = vrot.lane.b32.xlu0 %v1934, 120
      %v1967 = vpop.permute.xlu0 %1966
      %1968 = vrot.lane.b32.xlu0 %v1935, 120
      %v1969 = vpop.permute.xlu0 %1968
      %1970 = vrot.lane.b32.xlu0 %v1936, 120
      %v1971 = vpop.permute.xlu0 %1970
      %1972 = vrot.lane.b32.xlu0 %v1937, 120
      %v1973 = vpop.permute.xlu0 %1972
      %1974 = vrot.lane.b32.xlu0 %v1938, 120
      %v1975 = vpop.permute.xlu0 %1974
      %1976 = vrot.lane.b32.xlu0 %v1939, 120
      %v1977 = vpop.permute.xlu0 %1976
      %1978 = vrot.lane.b32.xlu0 %v1940, 120
      %v1979 = vpop.permute.xlu0 %1978
      %1980 = vrot.lane.b32.xlu0 %v1941, 120
      %v1981 = vpop.permute.xlu0 %1980
      %1982 = vrot.lane.b32.xlu0 %v1942, 120
      %v1983 = vpop.permute.xlu0 %1982
      %1984 = vrot.lane.b32.xlu0 %v1943, 120
      %v1985 = vpop.permute.xlu0 %1984
      %1986 = vrot.lane.b32.xlu0 %v1944, 120
      %v1987 = vpop.permute.xlu0 %1986
      %1988 = vrot.lane.b32.xlu0 %v1945, 120
      %v1989 = vpop.permute.xlu0 %1988
      %1990 = vrot.lane.b32.xlu0 %v1946, 120
      %v1991 = vpop.permute.xlu0 %1990
      %1992 = vrot.lane.b32.xlu0 %v1947, 120
      %v1993 = vpop.permute.xlu0 %1992
      %1994 = vrot.lane.b32.xlu0 %v1948, 120
      %v1995 = vpop.permute.xlu0 %1994
      %1996 = vrot.lane.b32.xlu0 %v1949, 120
      %v1997 = vpop.permute.xlu0 %1996
      %v2014 = vsel %vm424, %v1967, 0.0
      %2015 = vadd.xlane.f32.xlu0 %v2014
      %v2016 = vpop.xlane.xlu0 %2015
      %v2017 = vsel %vm424, %v1969, 0.0
      %2018 = vadd.xlane.f32.xlu0 %v2017
      %v2019 = vpop.xlane.xlu0 %2018
      %v2020 = vsel %vm424, %v1971, 0.0
      %2021 = vadd.xlane.f32.xlu0 %v2020
      %v2022 = vpop.xlane.xlu0 %2021
      %v2023 = vsel %vm424, %v1973, 0.0
      %2024 = vadd.xlane.f32.xlu0 %v2023
      %v2025 = vpop.xlane.xlu0 %2024
      %v2026 = vsel %vm424, %v1975, 0.0
      %2027 = vadd.xlane.f32.xlu0 %v2026
      %v2028 = vpop.xlane.xlu0 %2027
      %v2029 = vsel %vm424, %v1977, 0.0
      %2030 = vadd.xlane.f32.xlu0 %v2029
      %v2031 = vpop.xlane.xlu0 %2030
      %v2032 = vsel %vm424, %v1979, 0.0
      %2033 = vadd.xlane.f32.xlu0 %v2032
      %v2034 = vpop.xlane.xlu0 %2033
      %v2035 = vsel %vm424, %v1981, 0.0
      %2036 = vadd.xlane.f32.xlu0 %v2035
      %v2037 = vpop.xlane.xlu0 %2036
      %v2038 = vsel %vm424, %v1983, 0.0
      %2039 = vadd.xlane.f32.xlu0 %v2038
      %v2040 = vpop.xlane.xlu0 %2039
      %v2041 = vsel %vm424, %v1985, 0.0
      %2042 = vadd.xlane.f32.xlu0 %v2041
      %v2043 = vpop.xlane.xlu0 %2042
      %v2044 = vsel %vm424, %v1987, 0.0
      %2045 = vadd.xlane.f32.xlu0 %v2044
      %v2046 = vpop.xlane.xlu0 %2045
      %v2047 = vsel %vm424, %v1989, 0.0
      %2048 = vadd.xlane.f32.xlu0 %v2047
      %v2049 = vpop.xlane.xlu0 %2048
      %v2050 = vsel %vm424, %v1991, 0.0
      %2051 = vadd.xlane.f32.xlu0 %v2050
      %v2052 = vpop.xlane.xlu0 %2051
      %v2053 = vsel %vm424, %v1993, 0.0
      %2054 = vadd.xlane.f32.xlu0 %v2053
      %v2055 = vpop.xlane.xlu0 %2054
      %v2056 = vsel %vm424, %v1995, 0.0
      %2057 = vadd.xlane.f32.xlu0 %v2056
      %v2058 = vpop.xlane.xlu0 %2057
      %v2059 = vsel %vm424, %v1997, 0.0
      %2060 = vadd.xlane.f32.xlu0 %v2059
      %v2061 = vpop.xlane.xlu0 %2060
      %v2062 = vsub.f32 0.0, %v2016
      %v2063 = vsub.f32 0.0, %v2019
      %v2064 = vsub.f32 0.0, %v2022
      %v2065 = vsub.f32 0.0, %v2025
      %v2066 = vsub.f32 0.0, %v2028
      %v2067 = vsub.f32 0.0, %v2031
      %v2068 = vsub.f32 0.0, %v2034
      %v2069 = vsub.f32 0.0, %v2037
      %v2070 = vsub.f32 0.0, %v2040
      %v2071 = vsub.f32 0.0, %v2043
      %v2072 = vsub.f32 0.0, %v2046
      %v2073 = vsub.f32 0.0, %v2049
      %v2074 = vsub.f32 0.0, %v2052
      %v2075 = vsub.f32 0.0, %v2055
      %v2076 = vsub.f32 0.0, %v2058
      %v2077 = vsub.f32 0.0, %v2061
      %v2078 = vsub.f32 1.0, %v1870
      %v2079 = vsub.f32 1.0, %v1871
      %v2080 = vsub.f32 1.0, %v1872
      %v2081 = vsub.f32 1.0, %v1873
      %v2082 = vsub.f32 1.0, %v1874
      %v2083 = vsub.f32 1.0, %v1875
      %v2084 = vsub.f32 1.0, %v1876
      %v2085 = vsub.f32 1.0, %v1877
      %v2086 = vsub.f32 1.0, %v1878
      %v2087 = vsub.f32 1.0, %v1879
      %v2088 = vsub.f32 1.0, %v1880
      %v2089 = vsub.f32 1.0, %v1881
      %v2090 = vsub.f32 1.0, %v1882
      %v2091 = vsub.f32 1.0, %v1883
      %v2092 = vsub.f32 1.0, %v1884
      %v2093 = vsub.f32 1.0, %v1885
      %v2094 = vsub.f32 1.0, %v2062
      %v2095 = vsub.f32 1.0, %v2063
      %v2096 = vsub.f32 1.0, %v2064
      %v2097 = vsub.f32 1.0, %v2065
      %v2098 = vsub.f32 1.0, %v2066
      %v2099 = vsub.f32 1.0, %v2067
      %v2100 = vsub.f32 1.0, %v2068
      %v2101 = vsub.f32 1.0, %v2069
      %v2102 = vsub.f32 1.0, %v2070
      %v2103 = vsub.f32 1.0, %v2071
      %v2104 = vsub.f32 1.0, %v2072
      %v2105 = vsub.f32 1.0, %v2073
      %v2106 = vsub.f32 1.0, %v2074
      %v2107 = vsub.f32 1.0, %v2075
      %v2108 = vsub.f32 1.0, %v2076
      %v2109 = vsub.f32 1.0, %v2077
      %v2110 = vadd.f32 %v2078, %v2094
      %v2111 = vadd.f32 %v2079, %v2095
      %v2112 = vadd.f32 %v2080, %v2096
      %v2113 = vadd.f32 %v2081, %v2097
      %v2114 = vadd.f32 %v2082, %v2098
      %v2115 = vadd.f32 %v2083, %v2099
      %v2116 = vadd.f32 %v2084, %v2100
      %v2117 = vadd.f32 %v2085, %v2101
      %v2118 = vadd.f32 %v2086, %v2102
      %v2119 = vadd.f32 %v2087, %v2103
      %v2120 = vadd.f32 %v2088, %v2104
      %v2121 = vadd.f32 %v2089, %v2105
      %v2122 = vadd.f32 %v2090, %v2106
      %v2123 = vadd.f32 %v2091, %v2107
      %v2124 = vadd.f32 %v2092, %v2108
      %v2125 = vadd.f32 %v2093, %v2109
      %v2126 = vadd.f32 %v2110, 1e-08
      %v2127 = vadd.f32 %v2111, 1e-08
      %v2128 = vadd.f32 %v2112, 1e-08
      %v2129 = vadd.f32 %v2113, 1e-08
      %v2130 = vadd.f32 %v2114, 1e-08
      %v2131 = vadd.f32 %v2115, 1e-08
      %v2132 = vadd.f32 %v2116, 1e-08
      %v2133 = vadd.f32 %v2117, 1e-08
      %v2134 = vadd.f32 %v2118, 1e-08
      %v2135 = vadd.f32 %v2119, 1e-08
      %v2136 = vadd.f32 %v2120, 1e-08
      %v2137 = vadd.f32 %v2121, 1e-08
      %v2138 = vadd.f32 %v2122, 1e-08
      %v2139 = vadd.f32 %v2123, 1e-08
      %v2140 = vadd.f32 %v2124, 1e-08
      %v2141 = vadd.f32 %v2125, 1e-08
      %v2142 = vrcp.pop %v2126
      %v2143 = vmul.f32 %v2126, %v2142
      %v2144 = vsub.f32 1.0, %v2143
      %v2145 = vmul.f32 %v2142, %v2144
      %v2146 = vadd.f32 %v2142, %v2145
      %vm2147 = vweird.f32 %v2126
      %vm2148 = vweird.f32 %v2142
      %vm2149 = vmor %vm2147, %vm2148
      %v2150 = vsel %vm2149, %v2142, %v2146
      %v2151 = vand.u32 2147483647, %v2126
      %vm2152 = vcmp.eq.f32.partialorder %v2151, 8.507059e+37
      %v2153 = vand.u32 %v2126, 2147483648
      %v2154 = vor.u32 1.1754944e-38, %v2153
      %v2155 = vsel %vm2152, %v2154, %v2150
      %v2156 = vrcp.pop %v2127
      %v2157 = vmul.f32 %v2127, %v2156
      %v2158 = vsub.f32 1.0, %v2157
      %v2159 = vmul.f32 %v2156, %v2158
      %v2160 = vadd.f32 %v2156, %v2159
      %vm2161 = vweird.f32 %v2127
      %vm2162 = vweird.f32 %v2156
      %vm2163 = vmor %vm2161, %vm2162
      %v2164 = vsel %vm2163, %v2156, %v2160
      %v2165 = vand.u32 2147483647, %v2127
      %vm2166 = vcmp.eq.f32.partialorder %v2165, 8.507059e+37
      %v2167 = vand.u32 %v2127, 2147483648
      %v2168 = vor.u32 1.1754944e-38, %v2167
      %v2169 = vsel %vm2166, %v2168, %v2164
      %v2170 = vrcp.pop %v2128
      %v2171 = vmul.f32 %v2128, %v2170
      %v2172 = vsub.f32 1.0, %v2171
      %v2173 = vmul.f32 %v2170, %v2172
      %v2174 = vadd.f32 %v2170, %v2173
      %vm2175 = vweird.f32 %v2128
      %vm2176 = vweird.f32 %v2170
      %vm2177 = vmor %vm2175, %vm2176
      %v2178 = vsel %vm2177, %v2170, %v2174
      %v2179 = vand.u32 2147483647, %v2128
      %vm2180 = vcmp.eq.f32.partialorder %v2179, 8.507059e+37
      %v2181 = vand.u32 %v2128, 2147483648
      %v2182 = vor.u32 1.1754944e-38, %v2181
      %v2183 = vsel %vm2180, %v2182, %v2178
      %v2184 = vrcp.pop %v2129
      %v2185 = vmul.f32 %v2129, %v2184
      %v2186 = vsub.f32 1.0, %v2185
      %v2187 = vmul.f32 %v2184, %v2186
      %v2188 = vadd.f32 %v2184, %v2187
      %vm2189 = vweird.f32 %v2129
      %vm2190 = vweird.f32 %v2184
      %vm2191 = vmor %vm2189, %vm2190
      %v2192 = vsel %vm2191, %v2184, %v2188
      %v2193 = vand.u32 2147483647, %v2129
      %vm2194 = vcmp.eq.f32.partialorder %v2193, 8.507059e+37
      %v2195 = vand.u32 %v2129, 2147483648
      %v2196 = vor.u32 1.1754944e-38, %v2195
      %v2197 = vsel %vm2194, %v2196, %v2192
      %v2198 = vrcp.pop %v2130
      %v2199 = vmul.f32 %v2130, %v2198
      %v2200 = vsub.f32 1.0, %v2199
      %v2201 = vmul.f32 %v2198, %v2200
      %v2202 = vadd.f32 %v2198, %v2201
      %vm2203 = vweird.f32 %v2130
      %vm2204 = vweird.f32 %v2198
      %vm2205 = vmor %vm2203, %vm2204
      %v2206 = vsel %vm2205, %v2198, %v2202
      %v2207 = vand.u32 2147483647, %v2130
      %vm2208 = vcmp.eq.f32.partialorder %v2207, 8.507059e+37
      %v2209 = vand.u32 %v2130, 2147483648
      %v2210 = vor.u32 1.1754944e-38, %v2209
      %v2211 = vsel %vm2208, %v2210, %v2206
      %v2212 = vrcp.pop %v2131
      %v2213 = vmul.f32 %v2131, %v2212
      %v2214 = vsub.f32 1.0, %v2213
      %v2215 = vmul.f32 %v2212, %v2214
      %v2216 = vadd.f32 %v2212, %v2215
      %vm2217 = vweird.f32 %v2131
      %vm2218 = vweird.f32 %v2212
      %vm2219 = vmor %vm2217, %vm2218
      %v2220 = vsel %vm2219, %v2212, %v2216
      %v2221 = vand.u32 2147483647, %v2131
      %vm2222 = vcmp.eq.f32.partialorder %v2221, 8.507059e+37
      %v2223 = vand.u32 %v2131, 2147483648
      %v2224 = vor.u32 1.1754944e-38, %v2223
      %v2225 = vsel %vm2222, %v2224, %v2220
      %v2226 = vrcp.pop %v2132
      %v2227 = vmul.f32 %v2132, %v2226
      %v2228 = vsub.f32 1.0, %v2227
      %v2229 = vmul.f32 %v2226, %v2228
      %v2230 = vadd.f32 %v2226, %v2229
      %vm2231 = vweird.f32 %v2132
      %vm2232 = vweird.f32 %v2226
      %vm2233 = vmor %vm2231, %vm2232
      %v2234 = vsel %vm2233, %v2226, %v2230
      %v2235 = vand.u32 2147483647, %v2132
      %vm2236 = vcmp.eq.f32.partialorder %v2235, 8.507059e+37
      %v2237 = vand.u32 %v2132, 2147483648
      %v2238 = vor.u32 1.1754944e-38, %v2237
      %v2239 = vsel %vm2236, %v2238, %v2234
      %v2240 = vrcp.pop %v2133
      %v2241 = vmul.f32 %v2133, %v2240
      %v2242 = vsub.f32 1.0, %v2241
      %v2243 = vmul.f32 %v2240, %v2242
      %v2244 = vadd.f32 %v2240, %v2243
      %vm2245 = vweird.f32 %v2133
      %vm2246 = vweird.f32 %v2240
      %vm2247 = vmor %vm2245, %vm2246
      %v2248 = vsel %vm2247, %v2240, %v2244
      %v2249 = vand.u32 2147483647, %v2133
      %vm2250 = vcmp.eq.f32.partialorder %v2249, 8.507059e+37
      %v2251 = vand.u32 %v2133, 2147483648
      %v2252 = vor.u32 1.1754944e-38, %v2251
      %v2253 = vsel %vm2250, %v2252, %v2248
      %v2254 = vrcp.pop %v2134
      %v2255 = vmul.f32 %v2134, %v2254
      %v2256 = vsub.f32 1.0, %v2255
      %v2257 = vmul.f32 %v2254, %v2256
      %v2258 = vadd.f32 %v2254, %v2257
      %vm2259 = vweird.f32 %v2134
      %vm2260 = vweird.f32 %v2254
      %vm2261 = vmor %vm2259, %vm2260
      %v2262 = vsel %vm2261, %v2254, %v2258
      %v2263 = vand.u32 2147483647, %v2134
      %vm2264 = vcmp.eq.f32.partialorder %v2263, 8.507059e+37
      %v2265 = vand.u32 %v2134, 2147483648
      %v2266 = vor.u32 1.1754944e-38, %v2265
      %v2267 = vsel %vm2264, %v2266, %v2262
      %v2268 = vrcp.pop %v2135
      %v2269 = vmul.f32 %v2135, %v2268
      %v2270 = vsub.f32 1.0, %v2269
      %v2271 = vmul.f32 %v2268, %v2270
      %v2272 = vadd.f32 %v2268, %v2271
      %vm2273 = vweird.f32 %v2135
      %vm2274 = vweird.f32 %v2268
      %vm2275 = vmor %vm2273, %vm2274
      %v2276 = vsel %vm2275, %v2268, %v2272
      %v2277 = vand.u32 2147483647, %v2135
      %vm2278 = vcmp.eq.f32.partialorder %v2277, 8.507059e+37
      %v2279 = vand.u32 %v2135, 2147483648
      %v2280 = vor.u32 1.1754944e-38, %v2279
      %v2281 = vsel %vm2278, %v2280, %v2276
      %v2282 = vrcp.pop %v2136
      %v2283 = vmul.f32 %v2136, %v2282
      %v2284 = vsub.f32 1.0, %v2283
      %v2285 = vmul.f32 %v2282, %v2284
      %v2286 = vadd.f32 %v2282, %v2285
      %vm2287 = vweird.f32 %v2136
      %vm2288 = vweird.f32 %v2282
      %vm2289 = vmor %vm2287, %vm2288
      %v2290 = vsel %vm2289, %v2282, %v2286
      %v2291 = vand.u32 2147483647, %v2136
      %vm2292 = vcmp.eq.f32.partialorder %v2291, 8.507059e+37
      %v2293 = vand.u32 %v2136, 2147483648
      %v2294 = vor.u32 1.1754944e-38, %v2293
      %v2295 = vsel %vm2292, %v2294, %v2290
      %v2296 = vrcp.pop %v2137
      %v2297 = vmul.f32 %v2137, %v2296
      %v2298 = vsub.f32 1.0, %v2297
      %v2299 = vmul.f32 %v2296, %v2298
      %v2300 = vadd.f32 %v2296, %v2299
      %vm2301 = vweird.f32 %v2137
      %vm2302 = vweird.f32 %v2296
      %vm2303 = vmor %vm2301, %vm2302
      %v2304 = vsel %vm2303, %v2296, %v2300
      %v2305 = vand.u32 2147483647, %v2137
      %vm2306 = vcmp.eq.f32.partialorder %v2305, 8.507059e+37
      %v2307 = vand.u32 %v2137, 2147483648
      %v2308 = vor.u32 1.1754944e-38, %v2307
      %v2309 = vsel %vm2306, %v2308, %v2304
      %v2310 = vrcp.pop %v2138
      %v2311 = vmul.f32 %v2138, %v2310
      %v2312 = vsub.f32 1.0, %v2311
      %v2313 = vmul.f32 %v2310, %v2312
      %v2314 = vadd.f32 %v2310, %v2313
      %vm2315 = vweird.f32 %v2138
      %vm2316 = vweird.f32 %v2310
      %vm2317 = vmor %vm2315, %vm2316
      %v2318 = vsel %vm2317, %v2310, %v2314
      %v2319 = vand.u32 2147483647, %v2138
      %vm2320 = vcmp.eq.f32.partialorder %v2319, 8.507059e+37
      %v2321 = vand.u32 %v2138, 2147483648
      %v2322 = vor.u32 1.1754944e-38, %v2321
      %v2323 = vsel %vm2320, %v2322, %v2318
      %v2324 = vrcp.pop %v2139
      %v2325 = vmul.f32 %v2139, %v2324
      %v2326 = vsub.f32 1.0, %v2325
      %v2327 = vmul.f32 %v2324, %v2326
      %v2328 = vadd.f32 %v2324, %v2327
      %vm2329 = vweird.f32 %v2139
      %vm2330 = vweird.f32 %v2324
      %vm2331 = vmor %vm2329, %vm2330
      %v2332 = vsel %vm2331, %v2324, %v2328
      %v2333 = vand.u32 2147483647, %v2139
      %vm2334 = vcmp.eq.f32.partialorder %v2333, 8.507059e+37
      %v2335 = vand.u32 %v2139, 2147483648
      %v2336 = vor.u32 1.1754944e-38, %v2335
      %v2337 = vsel %vm2334, %v2336, %v2332
      %v2338 = vrcp.pop %v2140
      %v2339 = vmul.f32 %v2140, %v2338
      %v2340 = vsub.f32 1.0, %v2339
      %v2341 = vmul.f32 %v2338, %v2340
      %v2342 = vadd.f32 %v2338, %v2341
      %vm2343 = vweird.f32 %v2140
      %vm2344 = vweird.f32 %v2338
      %vm2345 = vmor %vm2343, %vm2344
      %v2346 = vsel %vm2345, %v2338, %v2342
      %v2347 = vand.u32 2147483647, %v2140
      %vm2348 = vcmp.eq.f32.partialorder %v2347, 8.507059e+37
      %v2349 = vand.u32 %v2140, 2147483648
      %v2350 = vor.u32 1.1754944e-38, %v2349
      %v2351 = vsel %vm2348, %v2350, %v2346
      %v2352 = vrcp.pop %v2141
      %v2353 = vmul.f32 %v2141, %v2352
      %v2354 = vsub.f32 1.0, %v2353
      %v2355 = vmul.f32 %v2352, %v2354
      %v2356 = vadd.f32 %v2352, %v2355
      %vm2357 = vweird.f32 %v2141
      %vm2358 = vweird.f32 %v2352
      %vm2359 = vmor %vm2357, %vm2358
      %v2360 = vsel %vm2359, %v2352, %v2356
      %v2361 = vand.u32 2147483647, %v2141
      %vm2362 = vcmp.eq.f32.partialorder %v2361, 8.507059e+37
      %v2363 = vand.u32 %v2141, 2147483648
      %v2364 = vor.u32 1.1754944e-38, %v2363
      %v2365 = vsel %vm2362, %v2364, %v2360
      %v2366 = vmul.f32 %v2078, %v2155
      %v2367 = vmul.f32 %v2079, %v2169
      %v2368 = vmul.f32 %v2080, %v2183
      %v2369 = vmul.f32 %v2081, %v2197
      %v2370 = vmul.f32 %v2082, %v2211
      %v2371 = vmul.f32 %v2083, %v2225
      %v2372 = vmul.f32 %v2084, %v2239
      %v2373 = vmul.f32 %v2085, %v2253
      %v2374 = vmul.f32 %v2086, %v2267
      %v2375 = vmul.f32 %v2087, %v2281
      %v2376 = vmul.f32 %v2088, %v2295
      %v2377 = vmul.f32 %v2089, %v2309
      %v2378 = vmul.f32 %v2090, %v2323
      %v2379 = vmul.f32 %v2091, %v2337
      %v2380 = vmul.f32 %v2092, %v2351
      %v2381 = vmul.f32 %v2093, %v2365
      %v2382 = vmul.f32 %v2366, %v403
      %v2383 = vmul.f32 %v2367, %v404
      %v2384 = vmul.f32 %v2368, %v405
      %v2385 = vmul.f32 %v2369, %v406
      %v2386 = vmul.f32 %v2370, %v407
      %v2387 = vmul.f32 %v2371, %v408
      %v2388 = vmul.f32 %v2372, %v409
      %v2389 = vmul.f32 %v2373, %v410
      %v2390 = vmul.f32 %v2374, %v411
      %v2391 = vmul.f32 %v2375, %v412
      %v2392 = vmul.f32 %v2376, %v413
      %v2393 = vmul.f32 %v2377, %v414
      %v2394 = vmul.f32 %v2378, %v415
      %v2395 = vmul.f32 %v2379, %v416
      %v2396 = vmul.f32 %v2380, %v417
      %v2397 = vmul.f32 %v2381, %v418
      %v2398 = vmul.f32 %v2094, %v2155
      %v2399 = vmul.f32 %v2095, %v2169
      %v2400 = vmul.f32 %v2096, %v2183
      %v2401 = vmul.f32 %v2097, %v2197
      %v2402 = vmul.f32 %v2098, %v2211
      %v2403 = vmul.f32 %v2099, %v2225
      %v2404 = vmul.f32 %v2100, %v2239
      %v2405 = vmul.f32 %v2101, %v2253
      %v2406 = vmul.f32 %v2102, %v2267
      %v2407 = vmul.f32 %v2103, %v2281
      %v2408 = vmul.f32 %v2104, %v2295
      %v2409 = vmul.f32 %v2105, %v2309
      %v2410 = vmul.f32 %v2106, %v2323
      %v2411 = vmul.f32 %v2107, %v2337
      %v2412 = vmul.f32 %v2108, %v2351
      %v2413 = vmul.f32 %v2109, %v2365
      %v2414 = vmul.f32 %v2398, %v1134
      %v2415 = vmul.f32 %v2399, %v1135
      %v2416 = vmul.f32 %v2400, %v1136
      %v2417 = vmul.f32 %v2401, %v1137
      %v2418 = vmul.f32 %v2402, %v1138
      %v2419 = vmul.f32 %v2403, %v1139
      %v2420 = vmul.f32 %v2404, %v1140
      %v2421 = vmul.f32 %v2405, %v1141
      %v2422 = vmul.f32 %v2406, %v1142
      %v2423 = vmul.f32 %v2407, %v1143
      %v2424 = vmul.f32 %v2408, %v1144
      %v2425 = vmul.f32 %v2409, %v1145
      %v2426 = vmul.f32 %v2410, %v1146
      %v2427 = vmul.f32 %v2411, %v1147
      %v2428 = vmul.f32 %v2412, %v1148
      %v2429 = vmul.f32 %v2413, %v1149
      %2446 = vrot.lane.b32.xlu0 %v2414, 120
      %v2447 = vpop.permute.xlu0 %2446
      %2448 = vrot.lane.b32.xlu0 %v2415, 120
      %v2449 = vpop.permute.xlu0 %2448
      %2450 = vrot.lane.b32.xlu0 %v2416, 120
      %v2451 = vpop.permute.xlu0 %2450
      %2452 = vrot.lane.b32.xlu0 %v2417, 120
      %v2453 = vpop.permute.xlu0 %2452
      %2454 = vrot.lane.b32.xlu0 %v2418, 120
      %v2455 = vpop.permute.xlu0 %2454
      %2456 = vrot.lane.b32.xlu0 %v2419, 120
      %v2457 = vpop.permute.xlu0 %2456
      %2458 = vrot.lane.b32.xlu0 %v2420, 120
      %v2459 = vpop.permute.xlu0 %2458
      %2460 = vrot.lane.b32.xlu0 %v2421, 120
      %v2461 = vpop.permute.xlu0 %2460
      %2462 = vrot.lane.b32.xlu0 %v2422, 120
      %v2463 = vpop.permute.xlu0 %2462
      %2464 = vrot.lane.b32.xlu0 %v2423, 120
      %v2465 = vpop.permute.xlu0 %2464
      %2466 = vrot.lane.b32.xlu0 %v2424, 120
      %v2467 = vpop.permute.xlu0 %2466
      %2468 = vrot.lane.b32.xlu0 %v2425, 120
      %v2469 = vpop.permute.xlu0 %2468
      %2470 = vrot.lane.b32.xlu0 %v2426, 120
      %v2471 = vpop.permute.xlu0 %2470
      %2472 = vrot.lane.b32.xlu0 %v2427, 120
      %v2473 = vpop.permute.xlu0 %2472
      %2474 = vrot.lane.b32.xlu0 %v2428, 120
      %v2475 = vpop.permute.xlu0 %2474
      %2476 = vrot.lane.b32.xlu0 %v2429, 120
      %v2477 = vpop.permute.xlu0 %2476
      %v2494 = vadd.f32 %v2382, %v2447
      %v2495 = vadd.f32 %v2383, %v2449
      %v2496 = vadd.f32 %v2384, %v2451
      %v2497 = vadd.f32 %v2385, %v2453
      %v2498 = vadd.f32 %v2386, %v2455
      %v2499 = vadd.f32 %v2387, %v2457
      %v2500 = vadd.f32 %v2388, %v2459
      %v2501 = vadd.f32 %v2389, %v2461
      %v2502 = vadd.f32 %v2390, %v2463
      %v2503 = vadd.f32 %v2391, %v2465
      %v2504 = vadd.f32 %v2392, %v2467
      %v2505 = vadd.f32 %v2393, %v2469
      %v2506 = vadd.f32 %v2394, %v2471
      %v2507 = vadd.f32 %v2395, %v2473
      %v2508 = vadd.f32 %v2396, %v2475
      %v2509 = vadd.f32 %v2397, %v2477
      %v2510 = vadd.f32 %v2494, %v403
      %v2511 = vadd.f32 %v2495, %v404
      %v2512 = vadd.f32 %v2496, %v405
      %v2513 = vadd.f32 %v2497, %v406
      %v2514 = vadd.f32 %v2498, %v407
      %v2515 = vadd.f32 %v2499, %v408
      %v2516 = vadd.f32 %v2500, %v409
      %v2517 = vadd.f32 %v2501, %v410
      %v2518 = vadd.f32 %v2502, %v411
      %v2519 = vadd.f32 %v2503, %v412
      %v2520 = vadd.f32 %v2504, %v413
      %v2521 = vadd.f32 %v2505, %v414
      %v2522 = vadd.f32 %v2506, %v415
      %v2523 = vadd.f32 %v2507, %v416
      %v2524 = vadd.f32 %v2508, %v417
      %v2525 = vadd.f32 %v2509, %v418
      %2542 = vrot.lane.b32.xlu0 %v1134, 120
      %v2543 = vpop.permute.xlu0 %2542
      %2544 = vrot.lane.b32.xlu0 %v1135, 120
      %v2545 = vpop.permute.xlu0 %2544
      %2546 = vrot.lane.b32.xlu0 %v1136, 120
      %v2547 = vpop.permute.xlu0 %2546
      %2548 = vrot.lane.b32.xlu0 %v1137, 120
      %v2549 = vpop.permute.xlu0 %2548
      %2550 = vrot.lane.b32.xlu0 %v1138, 120
      %v2551 = vpop.permute.xlu0 %2550
      %2552 = vrot.lane.b32.xlu0 %v1139, 120
      %v2553 = vpop.permute.xlu0 %2552
      %2554 = vrot.lane.b32.xlu0 %v1140, 120
      %v2555 = vpop.permute.xlu0 %2554
      %2556 = vrot.lane.b32.xlu0 %v1141, 120
      %v2557 = vpop.permute.xlu0 %2556
      %2558 = vrot.lane.b32.xlu0 %v1142, 120
      %v2559 = vpop.permute.xlu0 %2558
      %2560 = vrot.lane.b32.xlu0 %v1143, 120
      %v2561 = vpop.permute.xlu0 %2560
      %2562 = vrot.lane.b32.xlu0 %v1144, 120
      %v2563 = vpop.permute.xlu0 %2562
      %2564 = vrot.lane.b32.xlu0 %v1145, 120
      %v2565 = vpop.permute.xlu0 %2564
      %2566 = vrot.lane.b32.xlu0 %v1146, 120
      %v2567 = vpop.permute.xlu0 %2566
      %2568 = vrot.lane.b32.xlu0 %v1147, 120
      %v2569 = vpop.permute.xlu0 %2568
      %2570 = vrot.lane.b32.xlu0 %v1148, 120
      %v2571 = vpop.permute.xlu0 %2570
      %2572 = vrot.lane.b32.xlu0 %v1149, 120
      %v2573 = vpop.permute.xlu0 %2572
      %v2590 = vadd.f32 %v2510, %v2543
      %v2591 = vadd.f32 %v2511, %v2545
      %v2592 = vadd.f32 %v2512, %v2547
      %v2593 = vadd.f32 %v2513, %v2549
      %v2594 = vadd.f32 %v2514, %v2551
      %v2595 = vadd.f32 %v2515, %v2553
      %v2596 = vadd.f32 %v2516, %v2555
      %v2597 = vadd.f32 %v2517, %v2557
      %v2598 = vadd.f32 %v2518, %v2559
      %v2599 = vadd.f32 %v2519, %v2561
      %v2600 = vadd.f32 %v2520, %v2563
      %v2601 = vadd.f32 %v2521, %v2565
      %v2602 = vadd.f32 %v2522, %v2567
      %v2603 = vadd.f32 %v2523, %v2569
      %v2604 = vadd.f32 %v2524, %v2571
      %v2605 = vadd.f32 %v2525, %v2573
      %v2606 = vld [vmem:[%s6] sm:$0xf]
      %v2607 = vld [vmem:[%s7] sm:$0x1]
      %v2609 = vperm.slane %v2607, 0
      %v2612 = vsel %vm424, %v2590, 0
      %v2615 = vsel %vm424, %v2591, 0
      %v2618 = vsel %vm424, %v2592, 0
      %v2621 = vsel %vm424, %v2593, 0
      %v2624 = vsel %vm424, %v2594, 0
      %v2627 = vsel %vm424, %v2595, 0
      %v2630 = vsel %vm424, %v2596, 0
      %v2633 = vsel %vm424, %v2597, 0
      %v2636 = vsel %vm424, %v2598, 0
      %v2639 = vsel %vm424, %v2599, 0
      %v2642 = vsel %vm424, %v2600, 0
      %v2645 = vsel %vm424, %v2601, 0
      %v2648 = vsel %vm424, %v2602, 0
      %v2651 = vsel %vm424, %v2603, 0
      %v2654 = vsel %vm424, %v2604, 0
      %v2657 = vsel %vm424, %v2605, 0
      %v2660 = vsel %vm473, %v2606, 0
      %2662 = vmatpush.msra.mxu0 0.0
      %2663 = vmatpush.msra.mxu0 0.0
      %2664 = vmatpush.msra.mxu0 0.0
      %2665 = vmatpush.msra.mxu0 0.0
      %2666 = vmatpush.msra.mxu0 0.0
      %2667 = vmatpush.msra.mxu0 0.0
      %2668 = vmatpush.msra.mxu0 0.0
      %2669 = vmatpush.msra.mxu0 0.0
      %2670 = vmatpush.msra.mxu0 0.0
      %2671 = vmatpush.msra.mxu0 0.0
      %2672 = vmatpush.msra.mxu0 0.0
      %2673 = vmatpush.msra.mxu0 0.0
      %2674 = vmatpush.msra.mxu0 0.0
      %2675 = vmatpush.msra.mxu0 0.0
      %2676 = vmatpush.msra.mxu0 0.0
      %2677 = vmatpush.msra.mxu0 %v2660
      %2678 = vmatmul.f32.gmra.mxu0 %v2612
      %v2679 = vpop.f32.mrf.mxu0
      %v2680 = vadd.f32 %v2609, %v2679
      %2681 = vmatmul.f32.gmra.mxu0 %v2615
      %v2682 = vpop.f32.mrf.mxu0
      %v2683 = vadd.f32 %v2609, %v2682
      %2684 = vmatmul.f32.gmra.mxu0 %v2618
      %v2685 = vpop.f32.mrf.mxu0
      %v2686 = vadd.f32 %v2609, %v2685
      %2687 = vmatmul.f32.gmra.mxu0 %v2621
      %v2688 = vpop.f32.mrf.mxu0
      %v2689 = vadd.f32 %v2609, %v2688
      %2690 = vmatmul.f32.gmra.mxu0 %v2624
      %v2691 = vpop.f32.mrf.mxu0
      %v2692 = vadd.f32 %v2609, %v2691
      %2693 = vmatmul.f32.gmra.mxu0 %v2627
      %v2694 = vpop.f32.mrf.mxu0
      %v2695 = vadd.f32 %v2609, %v2694
      %2696 = vmatmul.f32.gmra.mxu0 %v2630
      %v2697 = vpop.f32.mrf.mxu0
      %v2698 = vadd.f32 %v2609, %v2697
      %2699 = vmatmul.f32.gmra.mxu0 %v2633
      %v2700 = vpop.f32.mrf.mxu0
      %v2701 = vadd.f32 %v2609, %v2700
      %2702 = vmatmul.f32.gmra.mxu0 %v2636
      %v2703 = vpop.f32.mrf.mxu0
      %v2704 = vadd.f32 %v2609, %v2703
      %2705 = vmatmul.f32.gmra.mxu0 %v2639
      %v2706 = vpop.f32.mrf.mxu0
      %v2707 = vadd.f32 %v2609, %v2706
      %2708 = vmatmul.f32.gmra.mxu0 %v2642
      %v2709 = vpop.f32.mrf.mxu0
      %v2710 = vadd.f32 %v2609, %v2709
      %2711 = vmatmul.f32.gmra.mxu0 %v2645
      %v2712 = vpop.f32.mrf.mxu0
      %v2713 = vadd.f32 %v2609, %v2712
      %2714 = vmatmul.f32.gmra.mxu0 %v2648
      %v2715 = vpop.f32.mrf.mxu0
      %v2716 = vadd.f32 %v2609, %v2715
      %2717 = vmatmul.f32.gmra.mxu0 %v2651
      %v2718 = vpop.f32.mrf.mxu0
      %v2719 = vadd.f32 %v2609, %v2718
      %2720 = vmatmul.f32.gmra.mxu0 %v2654
      %v2721 = vpop.f32.mrf.mxu0
      %v2722 = vadd.f32 %v2609, %v2721
      %2723 = vmatmul.f32.gmra.mxu0 %v2657
      %v2724 = vpop.f32.mrf.mxu0
      %v2725 = vadd.f32 %v2609, %v2724
      %2726 = vdwg.mxu0
      %vm2727 = vcmask 64512
      %2728 = vst.msk [vmem:[%s329] sm:$0xff] %vm2727, %v2680
      %2729 = vst.msk [vmem:[%s329 + $0x8] sm:$0xff] %vm2727, %v2683
      %2730 = vst.msk [vmem:[%s329 + $0x10] sm:$0xff] %vm2727, %v2686
      %2731 = vst.msk [vmem:[%s329 + $0x18] sm:$0xff] %vm2727, %v2689
      %2732 = vst.msk [vmem:[%s329 + $0x20] sm:$0xff] %vm2727, %v2692
      %2733 = vst.msk [vmem:[%s329 + $0x28] sm:$0xff] %vm2727, %v2695
      %2734 = vst.msk [vmem:[%s329 + $0x30] sm:$0xff] %vm2727, %v2698
      %2735 = vst.msk [vmem:[%s329 + $0x38] sm:$0xff] %vm2727, %v2701
      %2736 = vst.msk [vmem:[%s329 + $0x40] sm:$0xff] %vm2727, %v2704
      %2737 = vst.msk [vmem:[%s329 + $0x48] sm:$0xff] %vm2727, %v2707
      %2738 = vst.msk [vmem:[%s329 + $0x50] sm:$0xff] %vm2727, %v2710
      %2739 = vst.msk [vmem:[%s329 + $0x58] sm:$0xff] %vm2727, %v2713
      %2740 = vst.msk [vmem:[%s329 + $0x60] sm:$0xff] %vm2727, %v2716
      %2741 = vst.msk [vmem:[%s329 + $0x68] sm:$0xff] %vm2727, %v2719
      %2742 = vst.msk [vmem:[%s329 + $0x70] sm:$0xff] %vm2727, %v2722
      %2743 = vst.msk [vmem:[%s329 + $0x78] sm:$0xff] %vm2727, %v2725
      %s2744 = smul.u32 16, %s19
      %p2745 = scmp.lt.s32.totalorder %s2744, 63
      %s2746 = scalar_select %p2745, %s2744, 63
      %s2747 = smul.addr %s2746, 8
      %s2748 = scalar_lea.vmem %s8, %s2747
      // Predicated region
      $region53: #{coronary_identification_forward.5} parent=51 // pred_check
        %p2749 = pneg %p215
      $region54: #{coronary_identification_forward.5} parent=51 // pred_check_branch
        %2751 = sbr.rel (%p2749) target = $region56
      $region55: #{coronary_identification_forward.5} parent=51 // pred_region
        %s2752 = smul.u32 16, %s19
      $region56: #{coronary_identification_forward.5} parent=51 // pred_fallthru
        _
    $region52: #{coronary_identification_forward.5} parent=5 // pred_fallthru
      _
    %p2753 = scmp.le.s32.totalorder 2, %s14
    // Predicated region
    $region57: #{coronary_identification_forward.5} parent=5 // pred_check
      %p2754 = pneg %p2753
    $region58: #{coronary_identification_forward.5} parent=5 // pred_check_branch
      %2756 = sbr.rel (%p2754) target = $region60
    $region59: #{coronary_identification_forward.5} parent=5 // pred_region
      %s2757 = ssub.s32 %s14, 2
      // Predicated region
      $region61: #{coronary_identification_forward.5} parent=59 // pred_check
        %p2758 = pneg %p221
      $region62: #{coronary_identification_forward.5} parent=59 // pred_check_branch
        %2760 = sbr.rel (%p2758) target = $region64
      $region63: #{coronary_identification_forward.5} parent=59 // pred_region
        %s2761 = smul.u32 16, %s20
        %p2762 = scmp.lt.s32.totalorder %s2761, 63
        %s2763 = scalar_select %p2762, %s2761, 63
        %s2764 = smul.addr %s2763, 8
        %s2765 = scalar_lea.vmem %s8, %s2764
      $region64: #{coronary_identification_forward.5} parent=59 // pred_fallthru
        _
    $region60: #{coronary_identification_forward.5} parent=5 // pred_fallthru
      _
  $region6: #{coronary_identification_forward.5} parent=0 // loop_footer
    %s18 = sadd.s32 1, %s14
  $region7: #{coronary_identification_forward.5} parent=0 // loop_footer_branch
    %13 = sbr.rel target = $region3
  $region8: #{coronary_identification_forward.5} parent=0 // loop_exit
    _

</llo_original>
